<compile_context>
chip_gen: v7x
topology: tpu7x:2x2x1
jax: 0.10.0
libtpu: 0.0.40
codegen_flags: <defaults>
</compile_context>

<pallas_src>
import functools

import jax
import jax.numpy as jnp
from jax import lax
from jax.experimental import pallas as pl
from jax.experimental.pallas import tpu as pltpu


def _quantize_act(x, k):
    # activation_quantize_fn(k) is not defined in the source file; this assumes
    # the standard DoReFa activation quantizer: clamp to [0,1] then uniform
    # k-bit quantization (pure clamp when k == 32).
    # TODO(synk): replace with the project's actual activation_quantize_fn if it differs.
    x = jnp.clip(x, 0.0, 1.0)
    if k < 32:
        n = float(2 ** k - 1)
        x = jnp.floor(x * n + 0.5) * (1.0 / n)
    return x


def _toeplitz_conv_weight(w_oihw, W):
    """Fold the 3 dx taps and the width zero-padding of a 3x3 conv into a banded
    weight of shape (3*W*Cin, W*Cout) such that, with the activation laid out as
    rows of W*Cin lanes,
        out[h, :] = concat([row[h-1], row[h], row[h+1]], lanes) @ T
    (rows outside the image are zero)."""
    Cout, Cin, KH, KW = w_oihw.shape
    w_hwio = jnp.transpose(w_oihw, (2, 3, 1, 0)).astype(jnp.float32)   # (3,3,Cin,Cout)
    wi = jnp.arange(W)[None, :, None]
    wo = jnp.arange(W)[None, None, :]
    dx = jnp.arange(KW)[:, None, None]
    band = (wi == wo + dx - 1).astype(jnp.float32)                     # (KW, W, W)
    # T[dy, wi, ci, wo, co] = sum_dx band[dx, wi, wo] * w[dy, dx, ci, co]
    t = jnp.einsum('xio,yxcf->yicof', band, w_hwio)                    # (KH, W, Cin, W, Cout)
    return t.reshape(KH * W * Cin, W * Cout)                           # K-stacked: dy-major


def _basic_block_kernel(x_ref, t1_ref, s1_ref, sh1_ref, t2_ref, b2_ref, o_ref, *, ka_1):
    """Bt images per grid step, lane-dense (rows, W*C) layout throughout.
    Each 3x3 conv = one (M, 384) x (384, 128) MXU matmul."""
    bt, H, lanes = x_ref.shape
    M = bt * H

    # Layout-free collapse (H is a multiple of 8): one (M, 128) activation slab.
    xr = x_ref[...].reshape(M, lanes)

    # Per-image H-border masks (the width borders are folded into the banded weight).
    row_in_img = lax.broadcasted_iota(jnp.int32, (M, lanes), 0) % H
    not_first = row_in_img != 0
    not_last = row_in_img != (H - 1)
    zero = jnp.zeros((M, lanes), jnp.float32)

    def conv_taps(a):
        # dy = 0 tap: row h-1  (roll down by 1, zero the first row of each image)
        up = jnp.where(not_first, pltpu.roll(a, shift=1, axis=0), zero)
        # dy = 2 tap: row h+1  (roll up by 1 == roll by M-1, zero the last row)
        dn = jnp.where(not_last, pltpu.roll(a, shift=M - 1, axis=0), zero)
        # Stack the 3 dy taps along lanes -> K = 3 * lanes, single MXU contraction.
        return jnp.concatenate([up, a, dn], axis=-1)                   # (M, 3*lanes)

    # ---- conv1: 3x3, stride 1, pad 1, bias=False ----
    acc1 = jnp.dot(conv_taps(xr), t1_ref[...], preferred_element_type=jnp.float32)

    # ---- bn1 (folded scale/shift, tiled to the 128-lane layout) + quant ----
    h = _quantize_act(acc1 * s1_ref[...] + sh1_ref[...], ka_1)

    # ---- conv2: 3x3, stride 1, pad 1, bias=True ----
    acc2 = jnp.dot(conv_taps(h), t2_ref[...], preferred_element_type=jnp.float32)
    acc2 = acc2 + b2_ref[...]

    # ---- residual add (downsample=None, stride=1, Cin == Cout) + quant ----
    out = _quantize_act(acc2 + xr, ka_1)
    o_ref[...] = out.reshape(bt, H, lanes).astype(o_ref.dtype)


def _pick_bt(N, H, target_rows):
    """Largest Bt <= N with Bt*H near target_rows and Bt | N."""
    bt = max(1, min(N, target_rows // H))
    while N % bt != 0:
        bt -= 1
    return bt


def basic_block_forward(x_nchw, w1, gamma1, beta1, mean1, var1, w2, b2, *,
                        ka_1, block_rows=512):
    """x_nchw: (N, C, H, W) float32; conv weights in PyTorch OIHW layout."""
    N, C, H, W = x_nchw.shape
    Cout = w1.shape[0]
    # Identity shortcut: this fused block assumes inplanes == planes, stride=1.
    assert C == Cout and w2.shape[0] == Cout and w2.shape[1] == Cout
    lanes = W * C
    assert lanes == 128, "lane-dense layout requires W*C == 128"
    assert H % 8 == 0, "H must be a multiple of 8 for the layout-free batch collapse"
    eps = 1e-5

    # ---- host-side layout & parameter prep ----
    x_rows = jnp.transpose(x_nchw, (0, 2, 3, 1)).astype(jnp.float32).reshape(N, H, lanes)

    t1 = _toeplitz_conv_weight(w1, W)                                  # (384, 128)
    t2 = _toeplitz_conv_weight(w2, W)                                  # (384, 128)

    scale = gamma1 / jnp.sqrt(var1 + eps)
    shift = beta1 - mean1 * scale
    s1 = jnp.tile(scale, W).reshape(1, lanes)                          # lane w*C+c -> scale[c]
    sh1 = jnp.tile(shift, W).reshape(1, lanes)
    b2t = jnp.tile(b2, W).reshape(1, lanes)

    bt = _pick_bt(N, H, block_rows)                                    # ~512 matmul rows/step
    grid = (N // bt,)

    kernel = functools.partial(_basic_block_kernel, ka_1=ka_1)
    out_rows = pl.pallas_call(
        kernel,
        out_shape=jax.ShapeDtypeStruct((N, H, lanes), jnp.float32),
        grid_spec=pltpu.PrefetchScalarGridSpec(
            num_scalar_prefetch=0,
            grid=grid,
            in_specs=[
                pl.BlockSpec((bt, H, lanes), lambda n: (n, 0, 0)),
                # Grid-invariant weights / BN params (tiny at C=8; for real ResNet
                # channel counts the banded weight needs K-tiling instead).
                pl.BlockSpec((3 * lanes, lanes), lambda n: (0, 0)),
                pl.BlockSpec((1, lanes), lambda n: (0, 0)),
                pl.BlockSpec((1, lanes), lambda n: (0, 0)),
                pl.BlockSpec((3 * lanes, lanes), lambda n: (0, 0)),
                pl.BlockSpec((1, lanes), lambda n: (0, 0)),
            ],
            out_specs=pl.BlockSpec((bt, H, lanes), lambda n: (n, 0, 0)),
        ),
        compiler_params=pltpu.CompilerParams(
            dimension_semantics=("parallel",)),
    )(x_rows, t1, s1, sh1, t2, b2t)

    return jnp.transpose(out_rows.reshape(N, H, W, Cout), (0, 3, 1, 2))   # back to NCHW


def ref_forward(x, w1, gamma1, beta1, mean1, var1, w2, b2, *, ka_1):
    """Plain-JAX reference (NCHW), mirrors the PyTorch forward (f32 precision)."""
    dn = ('NCHW', 'OIHW', 'NCHW')
    eps = 1e-5
    out = lax.conv_general_dilated(x, w1, (1, 1), [(1, 1), (1, 1)],
                                   dimension_numbers=dn,
                                   precision=lax.Precision.HIGHEST)
    scale = (gamma1 / jnp.sqrt(var1 + eps)).reshape(1, -1, 1, 1)
    shift = (beta1 - mean1 * gamma1 / jnp.sqrt(var1 + eps)).reshape(1, -1, 1, 1)
    out = out * scale + shift
    out = _quantize_act(out, ka_1)
    out = lax.conv_general_dilated(out, w2, (1, 1), [(1, 1), (1, 1)],
                                   dimension_numbers=dn,
                                   precision=lax.Precision.HIGHEST) + b2.reshape(1, -1, 1, 1)
    out = out + x
    out = _quantize_act(out, ka_1)
    return out


if __name__ == "__main__":
    key = jax.random.PRNGKey(0)
    # inplanes = planes = 8, stride = 1, W*C = 128 lanes.  N chosen so the batch is
    # blocked (Bt = 32 -> 512 matmul rows per step, grid of 2 steps).
    N, C, H, W = 64, 8, 16, 16
    ka_1, ka_2 = 4, 2                  # ka_2 / bn2 / relu2 unused in forward (as in PyTorch)

    ks = jax.random.split(key, 8)
    x = 0.5 * jax.random.normal(ks[0], (N, C, H, W), jnp.float32)
    w1 = 0.2 * jax.random.normal(ks[1], (C, C, 3, 3), jnp.float32)       # conv1 (bias=False)
    gamma1 = 1.0 + 0.1 * jax.random.normal(ks[2], (C,), jnp.float32)     # bn1
    beta1 = 0.1 * jax.random.normal(ks[3], (C,), jnp.float32)
    mean1 = 0.05 * jax.random.normal(ks[4], (C,), jnp.float32)
    var1 = 1.0 + 0.1 * jax.random.uniform(ks[5], (C,), jnp.float32)
    w2 = 0.2 * jax.random.normal(ks[6], (C, C, 3, 3), jnp.float32)       # conv2 (bias=True)
    b2 = 0.1 * jax.random.normal(ks[7], (C,), jnp.float32)

    out = basic_block_forward(x, w1, gamma1, beta1, mean1, var1, w2, b2, ka_1=ka_1)
    out = jax.block_until_ready(out)

    ref = ref_forward(x, w1, gamma1, beta1, mean1, var1, w2, b2, ka_1=ka_1)
    max_diff = float(jnp.max(jnp.abs(out - ref)))
    # tolerance: one quantization step (accumulation-order jitter near a rounding
    # boundary can flip a single quant level); real bugs produce O(1) errors.
    assert out.shape == x.shape, out.shape
    assert max_diff <= 1.0 / (2 ** ka_1 - 1) + 1e-3, f"max diff {max_diff}"
    print("KERNEL_OK")
</pallas_src>

<mosaic_0001>
module attributes {stable_mosaic.version = 11 : i64} {
  func.func @_basic_block_kernel(%arg0: i32, %arg1: memref<32x16x128xf32, #tpu.memory_space<vmem>>, %arg2: memref<384x128xf32, #tpu.memory_space<vmem>>, %arg3: memref<1x128xf32, #tpu.memory_space<vmem>>, %arg4: memref<1x128xf32, #tpu.memory_space<vmem>>, %arg5: memref<384x128xf32, #tpu.memory_space<vmem>>, %arg6: memref<1x128xf32, #tpu.memory_space<vmem>>, %arg7: memref<32x16x128xf32, #tpu.memory_space<vmem>>) attributes {dimension_semantics = [#tpu.dimension_semantics<parallel>], iteration_bounds = array<i64: 2>, scalar_prefetch = 0 : i64, scratch_operands = 0 : i64, tpu.core_type = #tpu.core_type<tc>, window_params = [{transform_indices = @transform_0, window_bounds = array<i64: 32, 16, 128>}, {pipeline_mode = #tpu.pipeline_mode<synchronous>, transform_indices = @transform_1, window_bounds = array<i64: 384, 128>}, {pipeline_mode = #tpu.pipeline_mode<synchronous>, transform_indices = @transform_2, window_bounds = array<i64: 1, 128>}, {pipeline_mode = #tpu.pipeline_mode<synchronous>, transform_indices = @transform_3, window_bounds = array<i64: 1, 128>}, {pipeline_mode = #tpu.pipeline_mode<synchronous>, transform_indices = @transform_4, window_bounds = array<i64: 384, 128>}, {pipeline_mode = #tpu.pipeline_mode<synchronous>, transform_indices = @transform_5, window_bounds = array<i64: 1, 128>}, {transform_indices = @transform_6, window_bounds = array<i64: 32, 16, 128>}]} {
    %c0 = arith.constant 0 : index
    %c0_0 = arith.constant 0 : index
    %c0_1 = arith.constant 0 : index
    %0 = vector.load %arg1[%c0, %c0_0, %c0_1] : memref<32x16x128xf32, #tpu.memory_space<vmem>>, vector<32x16x128xf32>
    %1 = vector.shape_cast %0 : vector<32x16x128xf32> to vector<512x128xf32>
    %2 = tpu.iota {dimensions = array<i32: 0>} : vector<512x128xi32>
    %c16_i32 = arith.constant 16 : i32
    %c0_i32 = arith.constant 0 : i32
    %3 = arith.cmpi eq, %c16_i32, %c0_i32 : i32
    %c1_i32 = arith.constant 1 : i32
    %4 = arith.select %3, %c1_i32, %c16_i32 : i32
    %5 = vector.broadcast %4 : i32 to vector<512x128xi32>
    %6 = arith.remsi %2, %5 : vector<512x128xi32>
    %c0_i32_2 = arith.constant 0 : i32
    %7 = vector.broadcast %c0_i32_2 : i32 to vector<512x128xi32>
    %8 = arith.cmpi ne, %6, %7 : vector<512x128xi32>
    %c0_i32_3 = arith.constant 0 : i32
    %9 = vector.broadcast %c0_i32_3 : i32 to vector<512x128xi32>
    %10 = arith.cmpi slt, %6, %9 : vector<512x128xi32>
    %c0_i32_4 = arith.constant 0 : i32
    %11 = arith.cmpi slt, %4, %c0_i32_4 : i32
    %12 = vector.broadcast %11 : i1 to vector<512x128xi1>
    %13 = vector.broadcast %12 : vector<512x128xi1> to vector<512x128xi1>
    %14 = arith.xori %10, %13 : vector<512x128xi1>
    %15 = arith.andi %14, %8 : vector<512x128xi1>
    %16 = vector.broadcast %4 : i32 to vector<512x128xi32>
    %17 = arith.addi %6, %16 : vector<512x128xi32>
    %18 = arith.select %15, %17, %6 : vector<512x128xi1>, vector<512x128xi32>
    %c0_i32_5 = arith.constant 0 : i32
    %19 = vector.broadcast %c0_i32_5 : i32 to vector<512x128xi32>
    %20 = arith.cmpi ne, %18, %19 : vector<512x128xi32>
    %c15_i32 = arith.constant 15 : i32
    %21 = vector.broadcast %c15_i32 : i32 to vector<512x128xi32>
    %22 = arith.cmpi ne, %18, %21 : vector<512x128xi32>
    %cst = arith.constant 0.000000e+00 : f32
    %23 = vector.broadcast %cst : f32 to vector<512x128xf32>
    %c1_i32_6 = arith.constant 1 : i32
    %24 = tpu.dynamic_rotate %1 by %c1_i32_6 dim 0 : vector<512x128xf32>, i32 -> vector<512x128xf32>
    %25 = arith.select %20, %24, %23 : vector<512x128xi1>, vector<512x128xf32>
    %c511_i32 = arith.constant 511 : i32
    %26 = tpu.dynamic_rotate %1 by %c511_i32 dim 0 : vector<512x128xf32>, i32 -> vector<512x128xf32>
    %27 = arith.select %22, %26, %23 : vector<512x128xi1>, vector<512x128xf32>
    %28 = tpu.concatenate %25, %1, %27 in 1 : vector<512x128xf32>, vector<512x128xf32>, vector<512x128xf32> -> vector<512x384xf32>
    %c0_7 = arith.constant 0 : index
    %c0_8 = arith.constant 0 : index
    %29 = vector.load %arg2[%c0_7, %c0_8] : memref<384x128xf32, #tpu.memory_space<vmem>>, vector<384x128xf32>
    %cst_9 = arith.constant dense<0.000000e+00> : vector<512x128xf32>
    %30 = tpu.matmul %28, %29, %cst_9 {dimension_numbers = #tpu.dot_dimension_numbers<[1], [0], [0], [1], [0, 0, 1, 1], [], []>} : vector<512x384xf32>, vector<384x128xf32>, vector<512x128xf32> -> vector<512x128xf32>
    %c0_10 = arith.constant 0 : index
    %c0_11 = arith.constant 0 : index
    %31 = vector.load %arg3[%c0_10, %c0_11] : memref<1x128xf32, #tpu.memory_space<vmem>>, vector<1x128xf32>
    %32 = vector.broadcast %31 : vector<1x128xf32> to vector<512x128xf32>
    %33 = arith.mulf %30, %32 : vector<512x128xf32>
    %c0_12 = arith.constant 0 : index
    %c0_13 = arith.constant 0 : index
    %34 = vector.load %arg4[%c0_12, %c0_13] : memref<1x128xf32, #tpu.memory_space<vmem>>, vector<1x128xf32>
    %35 = vector.broadcast %34 : vector<1x128xf32> to vector<512x128xf32>
    %36 = arith.addf %33, %35 : vector<512x128xf32>
    %cst_14 = arith.constant 0.000000e+00 : f32
    %cst_15 = arith.constant 1.000000e+00 : f32
    %37 = vector.broadcast %cst_14 : f32 to vector<512x128xf32>
    %38 = arith.maximumf %37, %36 : vector<512x128xf32>
    %39 = vector.broadcast %cst_15 : f32 to vector<512x128xf32>
    %40 = arith.minimumf %39, %38 : vector<512x128xf32>
    %cst_16 = arith.constant 1.500000e+01 : f32
    %41 = vector.broadcast %cst_16 : f32 to vector<512x128xf32>
    %42 = arith.mulf %40, %41 : vector<512x128xf32>
    %cst_17 = arith.constant 5.000000e-01 : f32
    %43 = vector.broadcast %cst_17 : f32 to vector<512x128xf32>
    %44 = arith.addf %42, %43 : vector<512x128xf32>
    %45 = math.floor %44 : vector<512x128xf32>
    %cst_18 = arith.constant 0.0666666701 : f32
    %46 = vector.broadcast %cst_18 : f32 to vector<512x128xf32>
    %47 = arith.mulf %45, %46 : vector<512x128xf32>
    %c1_i32_19 = arith.constant 1 : i32
    %48 = tpu.dynamic_rotate %47 by %c1_i32_19 dim 0 : vector<512x128xf32>, i32 -> vector<512x128xf32>
    %49 = arith.select %20, %48, %23 : vector<512x128xi1>, vector<512x128xf32>
    %c511_i32_20 = arith.constant 511 : i32
    %50 = tpu.dynamic_rotate %47 by %c511_i32_20 dim 0 : vector<512x128xf32>, i32 -> vector<512x128xf32>
    %51 = arith.select %22, %50, %23 : vector<512x128xi1>, vector<512x128xf32>
    %52 = tpu.concatenate %49, %47, %51 in 1 : vector<512x128xf32>, vector<512x128xf32>, vector<512x128xf32> -> vector<512x384xf32>
    %c0_21 = arith.constant 0 : index
    %c0_22 = arith.constant 0 : index
    %53 = vector.load %arg5[%c0_21, %c0_22] : memref<384x128xf32, #tpu.memory_space<vmem>>, vector<384x128xf32>
    %cst_23 = arith.constant dense<0.000000e+00> : vector<512x128xf32>
    %54 = tpu.matmul %52, %53, %cst_23 {dimension_numbers = #tpu.dot_dimension_numbers<[1], [0], [0], [1], [0, 0, 1, 1], [], []>} : vector<512x384xf32>, vector<384x128xf32>, vector<512x128xf32> -> vector<512x128xf32>
    %c0_24 = arith.constant 0 : index
    %c0_25 = arith.constant 0 : index
    %55 = vector.load %arg6[%c0_24, %c0_25] : memref<1x128xf32, #tpu.memory_space<vmem>>, vector<1x128xf32>
    %56 = vector.broadcast %55 : vector<1x128xf32> to vector<512x128xf32>
    %57 = arith.addf %54, %56 : vector<512x128xf32>
    %58 = arith.addf %57, %1 : vector<512x128xf32>
    %cst_26 = arith.constant 0.000000e+00 : f32
    %cst_27 = arith.constant 1.000000e+00 : f32
    %59 = vector.broadcast %cst_26 : f32 to vector<512x128xf32>
    %60 = arith.maximumf %59, %58 : vector<512x128xf32>
    %61 = vector.broadcast %cst_27 : f32 to vector<512x128xf32>
    %62 = arith.minimumf %61, %60 : vector<512x128xf32>
    %cst_28 = arith.constant 1.500000e+01 : f32
    %63 = vector.broadcast %cst_28 : f32 to vector<512x128xf32>
    %64 = arith.mulf %62, %63 : vector<512x128xf32>
    %cst_29 = arith.constant 5.000000e-01 : f32
    %65 = vector.broadcast %cst_29 : f32 to vector<512x128xf32>
    %66 = arith.addf %64, %65 : vector<512x128xf32>
    %67 = math.floor %66 : vector<512x128xf32>
    %cst_30 = arith.constant 0.0666666701 : f32
    %68 = vector.broadcast %cst_30 : f32 to vector<512x128xf32>
    %69 = arith.mulf %67, %68 : vector<512x128xf32>
    %70 = vector.shape_cast %69 : vector<512x128xf32> to vector<32x16x128xf32>
    %c0_31 = arith.constant 0 : index
    %c0_32 = arith.constant 0 : index
    %c0_33 = arith.constant 0 : index
    %71 = vector.load %arg7[%c0_31, %c0_32, %c0_33] : memref<32x16x128xf32, #tpu.memory_space<vmem>>, vector<32x16x128xf32>
    tpu.vector_store %arg7[%c0_31, %c0_32, %c0_33], %70 {strides = array<i32>} : memref<32x16x128xf32, #tpu.memory_space<vmem>>, vector<32x16x128xf32>,
    return
  }
  func.func @transform_0(%arg0: i32) -> (i32, i32, i32) {
    %c0_i32 = arith.constant 0 : i32
    %c0_i32_0 = arith.constant 0 : i32
    %c0_i32_1 = arith.constant 0 : i32
    return %arg0, %c0_i32, %c0_i32_0 : i32, i32, i32
  }
  func.func @transform_1(%arg0: i32) -> (i32, i32) {
    %c0_i32 = arith.constant 0 : i32
    %c0_i32_0 = arith.constant 0 : i32
    %c0_i32_1 = arith.constant 0 : i32
    return %c0_i32, %c0_i32_0 : i32, i32
  }
  func.func @transform_2(%arg0: i32) -> (i32, i32) {
    %c0_i32 = arith.constant 0 : i32
    %c0_i32_0 = arith.constant 0 : i32
    %c0_i32_1 = arith.constant 0 : i32
    return %c0_i32, %c0_i32_0 : i32, i32
  }
  func.func @transform_3(%arg0: i32) -> (i32, i32) {
    %c0_i32 = arith.constant 0 : i32
    %c0_i32_0 = arith.constant 0 : i32
    %c0_i32_1 = arith.constant 0 : i32
    return %c0_i32, %c0_i32_0 : i32, i32
  }
  func.func @transform_4(%arg0: i32) -> (i32, i32) {
    %c0_i32 = arith.constant 0 : i32
    %c0_i32_0 = arith.constant 0 : i32
    %c0_i32_1 = arith.constant 0 : i32
    return %c0_i32, %c0_i32_0 : i32, i32
  }
  func.func @transform_5(%arg0: i32) -> (i32, i32) {
    %c0_i32 = arith.constant 0 : i32
    %c0_i32_0 = arith.constant 0 : i32
    %c0_i32_1 = arith.constant 0 : i32
    return %c0_i32, %c0_i32_0 : i32, i32
  }
  func.func @transform_6(%arg0: i32) -> (i32, i32, i32) {
    %c0_i32 = arith.constant 0 : i32
    %c0_i32_0 = arith.constant 0 : i32
    %c0_i32_1 = arith.constant 0 : i32
    return %arg0, %c0_i32, %c0_i32_0 : i32, i32, i32
  }
}

</mosaic_0001>

<llo_original>
// kernel: tpu_custom_call.1
$region0: #{tpu_custom_call.1}
  #allocation0 [shape = 'u32[]', space=smem, size = 0x4, offset = 0x4, fixed_abs, tag = 'smem constant byte address 0x4 - core index']
  #allocation1 [shape = 'u32[144,128]{1,0:T(1,128)}', space=vmem, size = 0x12000, scoped, tag = 'internal scratch']
  %s0 = inlined_call_operand.hbm [shape: f32[64,16,128], index: 0, kind: input, shape index: {}]
  %s1 = inlined_call_operand.hbm [shape: f32[384,128], index: 1, kind: input, shape index: {}]
  %s2 = inlined_call_operand.vmem [shape: f32[1,128], index: 2, kind: input, shape index: {}]
  %s3 = inlined_call_operand.vmem [shape: f32[1,128], index: 3, kind: input, shape index: {}]
  %s4 = inlined_call_operand.hbm [shape: f32[384,128], index: 4, kind: input, shape index: {}]
  %s5 = inlined_call_operand.vmem [shape: f32[1,128], index: 5, kind: input, shape index: {}]
  %s6 = inlined_call_operand.hbm [shape: f32[64,16,128], index: 6, kind: output, shape index: {}]
  %s7 = sld [smem:[#allocation0]]
  $region69: #{tpu_custom_call.1} parent=0
    _
  %s9 = ssub.s32 1, %s7
  %s10 = scalar_select 0, %s9, %s7
  $region1: #{tpu_custom_call.1} parent=0
    #allocation2 [shape = 'u8[524288]{0}', space=vmem, size = 0x80000, scoped, tag = 'input window, operand 0']
    #allocation3 [shape = 's32[2]{0}', space=sflag, size = 0x8, scoped, tag = 'scoped memory for tpu_custom_call.1']
    #allocation4 [shape = 's32[2]{0}', space=sflag, size = 0x8, scoped, tag = 'scoped memory for tpu_custom_call.1']
    #allocation5 [shape = 'u8[196608]{0}', space=vmem, size = 0x30000, scoped, tag = 'input window, operand 1, single buffered']
    #allocation6 [shape = 's32[1]{0}', space=sflag, size = 0x4, scoped, tag = 'scoped memory for tpu_custom_call.1']
    #allocation7 [shape = 'u8[196608]{0}', space=vmem, size = 0x30000, scoped, tag = 'input window, operand 4, single buffered']
    #allocation8 [shape = 'u8[524288]{0}', space=vmem, size = 0x80000, scoped, tag = 'output window, operand 0']
    %11 = vsyncpa [#allocation3], 0
    %s12 = scalar_lea.sflag [#allocation3], 1
    %13 = vsyncpa %s12, 0
    %14 = vsyncpa [#allocation6], 0
    %15 = vsyncpa [#allocation4], 0
    %s16 = scalar_lea.sflag [#allocation4], 1
    %17 = vsyncpa %s16, 0
    loop: start=0, step=1, limit=4
    $region2: #{tpu_custom_call.1} parent=1 // loop_pre_header
      _
    $region3: #{tpu_custom_call.1} parent=1 // loop_header
      %s19 = sphi 0, %s23
      %p20 = scmp.ge.s32.totalorder %s19, 4
      %s29 = sphi 0, %s31
      %s32 = sphi 0, %s29
      %s33 = sphi 0, %s32
      %s49 = sphi 0, %s33
      %s53 = sphi 0, %s53
      %s55 = sphi 0, %s53
      %s56 = sphi 0, %s55
      %s70 = sphi 0, %s56
      %s74 = sphi 0, %s74
      %s76 = sphi 0, %s74
      %s77 = sphi 0, %s76
      %s91 = sphi 0, %s77
      %s95 = sphi 0, %s95
      %s97 = sphi 0, %s95
      %s98 = sphi 0, %s97
      %s112 = sphi 0, %s98
      %s116 = sphi 0, %s116
      %s118 = sphi 0, %s116
      %s119 = sphi 0, %s118
      %s133 = sphi 0, %s119
      %s137 = sphi 0, %s137
      %s139 = sphi 0, %s137
      %s140 = sphi 0, %s139
      %s154 = sphi 0, %s140
      %s160 = sphi 0, %s162
      %s163 = sphi 0, %s160
      %s164 = sphi 0, %s163
      %s180 = sphi 0, %s164
    $region4: #{tpu_custom_call.1} parent=1 // loop_header_branch
      %22 = sbr.rel (%p20) target = $region8
    $region5: #{tpu_custom_call.1} parent=1 // loop_body
      %s24 = ssub.s32 %s19, 1
      %s25 = ssub.s32 %s19, 2
      %s26 = sadd.s32 %s19, 1
      %s27 = ssub.s32 %s19, %s26
      %p28 = scmp.eq.s32.totalorder %s27, 0
      %s30 = sadd.s32 %s29, 1
      %s31 = scalar_select %p28, %s29, %s30
      %p34 = pneg %p28
      %p35 = scmp.eq.s32.totalorder %s19, 1
      %p36 = por %p34, %p35
      %p37 = scmp.ne.s32.totalorder %s29, %s32
      %p38 = scmp.eq.s32.totalorder %s19, 0
      %p39 = por %p37, %p38
      %p40 = scmp.ne.s32.totalorder %s29, %s32
      %p41 = scmp.eq.s32.totalorder %s24, 1
      %p42 = por %p40, %p41
      %p43 = scmp.ne.s32.totalorder %s32, %s33
      %p44 = scmp.eq.s32.totalorder %s24, 0
      %p45 = por %p43, %p44
      %p46 = scmp.ne.s32.totalorder %s32, %s33
      %p47 = scmp.eq.s32.totalorder %s25, 1
      %p48 = por %p46, %p47
      %p50 = scmp.ne.s32.totalorder %s33, %s49
      %p51 = scmp.eq.s32.totalorder %s25, 0
      %p52 = por %p50, %p51
      %s54 = sadd.s32 %s53, 1
      %p57 = scmp.eq.s32.totalorder %s19, 1
      %p58 = scmp.ne.s32.totalorder %s53, %s55
      %p59 = scmp.eq.s32.totalorder %s19, 0
      %p60 = por %p58, %p59
      %p61 = scmp.ne.s32.totalorder %s53, %s55
      %p62 = scmp.eq.s32.totalorder %s24, 1
      %p63 = por %p61, %p62
      %p64 = scmp.ne.s32.totalorder %s55, %s56
      %p65 = scmp.eq.s32.totalorder %s24, 0
      %p66 = por %p64, %p65
      %p67 = scmp.ne.s32.totalorder %s55, %s56
      %p68 = scmp.eq.s32.totalorder %s25, 1
      %p69 = por %p67, %p68
      %p71 = scmp.ne.s32.totalorder %s56, %s70
      %p72 = scmp.eq.s32.totalorder %s25, 0
      %p73 = por %p71, %p72
      %s75 = sadd.s32 %s74, 1
      %p78 = scmp.eq.s32.totalorder %s19, 1
      %p79 = scmp.ne.s32.totalorder %s74, %s76
      %p80 = scmp.eq.s32.totalorder %s19, 0
      %p81 = por %p79, %p80
      %p82 = scmp.ne.s32.totalorder %s74, %s76
      %p83 = scmp.eq.s32.totalorder %s24, 1
      %p84 = por %p82, %p83
      %p85 = scmp.ne.s32.totalorder %s76, %s77
      %p86 = scmp.eq.s32.totalorder %s24, 0
      %p87 = por %p85, %p86
      %p88 = scmp.ne.s32.totalorder %s76, %s77
      %p89 = scmp.eq.s32.totalorder %s25, 1
      %p90 = por %p88, %p89
      %p92 = scmp.ne.s32.totalorder %s77, %s91
      %p93 = scmp.eq.s32.totalorder %s25, 0
      %p94 = por %p92, %p93
      %s96 = sadd.s32 %s95, 1
      %p99 = scmp.eq.s32.totalorder %s19, 1
      %p100 = scmp.ne.s32.totalorder %s95, %s97
      %p101 = scmp.eq.s32.totalorder %s19, 0
      %p102 = por %p100, %p101
      %p103 = scmp.ne.s32.totalorder %s95, %s97
      %p104 = scmp.eq.s32.totalorder %s24, 1
      %p105 = por %p103, %p104
      %p106 = scmp.ne.s32.totalorder %s97, %s98
      %p107 = scmp.eq.s32.totalorder %s24, 0
      %p108 = por %p106, %p107
      %p109 = scmp.ne.s32.totalorder %s97, %s98
      %p110 = scmp.eq.s32.totalorder %s25, 1
      %p111 = por %p109, %p110
      %p113 = scmp.ne.s32.totalorder %s98, %s112
      %p114 = scmp.eq.s32.totalorder %s25, 0
      %p115 = por %p113, %p114
      %s117 = sadd.s32 %s116, 1
      %p120 = scmp.eq.s32.totalorder %s19, 1
      %p121 = scmp.ne.s32.totalorder %s116, %s118
      %p122 = scmp.eq.s32.totalorder %s19, 0
      %p123 = por %p121, %p122
      %p124 = scmp.ne.s32.totalorder %s116, %s118
      %p125 = scmp.eq.s32.totalorder %s24, 1
      %p126 = por %p124, %p125
      %p127 = scmp.ne.s32.totalorder %s118, %s119
      %p128 = scmp.eq.s32.totalorder %s24, 0
      %p129 = por %p127, %p128
      %p130 = scmp.ne.s32.totalorder %s118, %s119
      %p131 = scmp.eq.s32.totalorder %s25, 1
      %p132 = por %p130, %p131
      %p134 = scmp.ne.s32.totalorder %s119, %s133
      %p135 = scmp.eq.s32.totalorder %s25, 0
      %p136 = por %p134, %p135
      %s138 = sadd.s32 %s137, 1
      %p141 = scmp.eq.s32.totalorder %s19, 1
      %p142 = scmp.ne.s32.totalorder %s137, %s139
      %p143 = scmp.eq.s32.totalorder %s19, 0
      %p144 = por %p142, %p143
      %p145 = scmp.ne.s32.totalorder %s137, %s139
      %p146 = scmp.eq.s32.totalorder %s24, 1
      %p147 = por %p145, %p146
      %p148 = scmp.ne.s32.totalorder %s139, %s140
      %p149 = scmp.eq.s32.totalorder %s24, 0
      %p150 = por %p148, %p149
      %p151 = scmp.ne.s32.totalorder %s139, %s140
      %p152 = scmp.eq.s32.totalorder %s25, 1
      %p153 = por %p151, %p152
      %p155 = scmp.ne.s32.totalorder %s140, %s154
      %p156 = scmp.eq.s32.totalorder %s25, 0
      %p157 = por %p155, %p156
      %s158 = ssub.s32 %s19, %s26
      %p159 = scmp.eq.s32.totalorder %s158, 0
      %s161 = sadd.s32 %s160, 1
      %s162 = scalar_select %p159, %s160, %s161
      %p165 = pneg %p159
      %p166 = scmp.eq.s32.totalorder %s19, 1
      %p167 = por %p165, %p166
      %p168 = scmp.ne.s32.totalorder %s160, %s163
      %p169 = scmp.eq.s32.totalorder %s19, 0
      %p170 = por %p168, %p169
      %p171 = scmp.ne.s32.totalorder %s160, %s163
      %p172 = scmp.eq.s32.totalorder %s24, 1
      %p173 = por %p171, %p172
      %p174 = scmp.ne.s32.totalorder %s163, %s164
      %p175 = scmp.eq.s32.totalorder %s24, 0
      %p176 = por %p174, %p175
      %p177 = scmp.ne.s32.totalorder %s163, %s164
      %p178 = scmp.eq.s32.totalorder %s25, 1
      %p179 = por %p177, %p178
      %p181 = scmp.ne.s32.totalorder %s164, %s180
      %p182 = scmp.eq.s32.totalorder %s25, 0
      %p183 = por %p181, %p182
      %p184 = scmp.le.s32.totalorder 1, %s19
      %p185 = scmp.lt.s32.totalorder %s19, 3
      %p186 = pnand %p184, %p185
      %p187 = pneg %p186
      // Predicated region
      $region9: #{tpu_custom_call.1} parent=5 // pred_check
        _
      $region10: #{tpu_custom_call.1} parent=5 // pred_check_branch
        %189 = sbr.rel (%p186) target = $region12
      $region11: #{tpu_custom_call.1} parent=5 // pred_region
        %s190 = ssub.s32 %s19, 1
        // Predicated region
        $region13: #{tpu_custom_call.1} parent=11 // pred_check
          %p191 = pneg %p66
        $region14: #{tpu_custom_call.1} parent=11 // pred_check_branch
          %193 = sbr.rel (%p191) target = $region16
        $region15: #{tpu_custom_call.1} parent=11 // pred_region
          %s195 = ssub.s32 6144, 6144
          %196 = vsyncadd [#allocation6], %s195
          %s197 = sshll.u32 [#allocation5], 4
          %s198 = int_to_ptr.vmem [resolvable:$true] %s197
          %203 = dma.hbm_to_vmem [thread:$0]  %s1, 6144, %s198, [#allocation6], 128, 128, 8
        $region16: #{tpu_custom_call.1} parent=11 // pred_fallthru
          _
        // Predicated region
        $region17: #{tpu_custom_call.1} parent=11 // pred_check
          %p204 = pneg %p87
        $region18: #{tpu_custom_call.1} parent=11 // pred_check_branch
          %206 = sbr.rel (%p204) target = $region20
        $region19: #{tpu_custom_call.1} parent=11 // pred_region
          _
        $region20: #{tpu_custom_call.1} parent=11 // pred_fallthru
          _
        // Predicated region
        $region21: #{tpu_custom_call.1} parent=11 // pred_check
          %p207 = pneg %p108
        $region22: #{tpu_custom_call.1} parent=11 // pred_check_branch
          %209 = sbr.rel (%p207) target = $region24
        $region23: #{tpu_custom_call.1} parent=11 // pred_region
          _
        $region24: #{tpu_custom_call.1} parent=11 // pred_fallthru
          _
        // Predicated region
        $region25: #{tpu_custom_call.1} parent=11 // pred_check
          %p210 = pneg %p129
        $region26: #{tpu_custom_call.1} parent=11 // pred_check_branch
          %212 = sbr.rel (%p210) target = $region28
        $region27: #{tpu_custom_call.1} parent=11 // pred_region
          %s214 = ssub.s32 6144, 6144
          %215 = vsyncadd [#allocation6], %s214
          %s216 = sshll.u32 [#allocation7], 4
          %s217 = int_to_ptr.vmem [resolvable:$true] %s216
          %222 = dma.hbm_to_vmem [thread:$0]  %s4, 6144, %s217, [#allocation6], 128, 128, 8
        $region28: #{tpu_custom_call.1} parent=11 // pred_fallthru
          _
        // Predicated region
        $region29: #{tpu_custom_call.1} parent=11 // pred_check
          %p223 = pneg %p150
        $region30: #{tpu_custom_call.1} parent=11 // pred_check_branch
          %225 = sbr.rel (%p223) target = $region32
        $region31: #{tpu_custom_call.1} parent=11 // pred_region
          _
        $region32: #{tpu_custom_call.1} parent=11 // pred_fallthru
          _
      $region12: #{tpu_custom_call.1} parent=5 // pred_fallthru
        _
      %p226 = scmp.lt.s32.totalorder %s19, 2
      // Predicated region
      $region33: #{tpu_custom_call.1} parent=5 // pred_check
        %p227 = pneg %p226
      $region34: #{tpu_custom_call.1} parent=5 // pred_check_branch
        %229 = sbr.rel (%p227) target = $region36
      $region35: #{tpu_custom_call.1} parent=5 // pred_region
        // Predicated region
        $region37: #{tpu_custom_call.1} parent=35 // pred_check
          %p230 = pneg %p39
        $region38: #{tpu_custom_call.1} parent=35 // pred_check_branch
          %232 = sbr.rel (%p230) target = $region40
        $region39: #{tpu_custom_call.1} parent=35 // pred_region
          %s233 = sand.u32 %s29, 1
          %s234 = scalar_lea.sflag [#allocation3], %s233
          %s235 = sand.u32 %s29, 1
          %s236 = smul.addr %s235, 512
          %s237 = scalar_lea.vmem [#allocation2], %s236
          %s238 = smul.u32 32, %s19
          %s240 = ssub.s32 8192, 8192
          %241 = vsyncadd %s234, %s240
          %s242 = smul.addr %s238, 2
          %s243 = smul.addr %s242, 128
          %s244 = scalar_lea.hbm %s0, %s243
          %s245 = sshll.u32 %s237, 4
          %s246 = int_to_ptr.vmem [resolvable:$true] %s245
          %251 = dma.hbm_to_vmem [thread:$0]  %s244, 8192, %s246, %s234, 128, 128, 8
        $region40: #{tpu_custom_call.1} parent=35 // pred_fallthru
          _
      $region36: #{tpu_custom_call.1} parent=5 // pred_fallthru
        _
      %p252 = scmp.le.s32.totalorder 1, %s19
      %p253 = scmp.lt.s32.totalorder %s19, 3
      %p254 = pnand %p252, %p253
      %p255 = pneg %p254
      // Predicated region
      $region41: #{tpu_custom_call.1} parent=5 // pred_check
        _
      $region42: #{tpu_custom_call.1} parent=5 // pred_check_branch
        %257 = sbr.rel (%p254) target = $region44
      $region43: #{tpu_custom_call.1} parent=5 // pred_region
        %s258 = ssub.s32 %s19, 1
        %s259 = sand.u32 %s32, 1
        %s260 = scalar_lea.sflag [#allocation3], %s259
        %s261 = sand.u32 %s32, 1
        %s262 = smul.addr %s261, 512
        %s263 = scalar_lea.vmem [#allocation2], %s262
        // Predicated region
        $region45: #{tpu_custom_call.1} parent=43 // pred_check
          %p264 = pneg %p45
        $region46: #{tpu_custom_call.1} parent=43 // pred_check_branch
          %266 = sbr.rel (%p264) target = $region48
        $region47: #{tpu_custom_call.1} parent=43 // pred_region
          %267 = dma.done %s260, 8192
        $region48: #{tpu_custom_call.1} parent=43 // pred_fallthru
          _
        // Predicated region
        $region49: #{tpu_custom_call.1} parent=43 // pred_check
          %p268 = pneg %p66
        $region50: #{tpu_custom_call.1} parent=43 // pred_check_branch
          %270 = sbr.rel (%p268) target = $region52
        $region51: #{tpu_custom_call.1} parent=43 // pred_region
          %271 = dma.done [#allocation6], 6144
        $region52: #{tpu_custom_call.1} parent=43 // pred_fallthru
          _
        // Predicated region
        $region53: #{tpu_custom_call.1} parent=43 // pred_check
          %p272 = pneg %p129
        $region54: #{tpu_custom_call.1} parent=43 // pred_check_branch
          %274 = sbr.rel (%p272) target = $region56
        $region55: #{tpu_custom_call.1} parent=43 // pred_region
          %275 = dma.done [#allocation6], 6144
        $region56: #{tpu_custom_call.1} parent=43 // pred_fallthru
          _
        %s276 = sand.u32 %s32, 1
        %s277 = scalar_lea.sflag [#allocation3], %s276
        %s278 = sand.u32 %s32, 1
        %s279 = smul.addr %s278, 512
        %s280 = scalar_lea.vmem [#allocation2], %s279
        %p281 = pneg %p45
        %p282 = pneg %p42
        %p283 = pneg %p66
        %p284 = pneg %p63
        %p285 = pneg %p87
        %p286 = pneg %p84
        %p287 = pneg %p108
        %p288 = pneg %p105
        %p289 = pneg %p129
        %p290 = pneg %p126
        %p291 = pneg %p150
        %p292 = pneg %p147
        %p293 = pneg %p176
        %p294 = pneg %p173
        %s295 = sand.u32 %s163, 1
        %s296 = scalar_lea.sflag [#allocation4], %s295
        %s297 = sand.u32 %s163, 1
        %s298 = smul.addr %s297, 512
        %s299 = scalar_lea.vmem [#allocation8], %s298
        %s300 = smul.u32 32, %s24
        %s301 = smul.u32 32, %s24
        %v302 = vld [vmem:[%s263] sm:$0xff]
        %v303 = vld [vmem:[%s263 + $0x8] sm:$0xff]
        %v304 = vld [vmem:[%s263 + $0x10] sm:$0xff]
        %v305 = vld [vmem:[%s263 + $0x18] sm:$0xff]
        %v306 = vld [vmem:[%s263 + $0x20] sm:$0xff]
        %v307 = vld [vmem:[%s263 + $0x28] sm:$0xff]
        %v308 = vld [vmem:[%s263 + $0x30] sm:$0xff]
        %v309 = vld [vmem:[%s263 + $0x38] sm:$0xff]
        %v310 = vld [vmem:[%s263 + $0x40] sm:$0xff]
        %v311 = vld [vmem:[%s263 + $0x48] sm:$0xff]
        %v312 = vld [vmem:[%s263 + $0x50] sm:$0xff]
        %v313 = vld [vmem:[%s263 + $0x58] sm:$0xff]
        %v314 = vld [vmem:[%s263 + $0x60] sm:$0xff]
        %v315 = vld [vmem:[%s263 + $0x68] sm:$0xff]
        %v316 = vld [vmem:[%s263 + $0x70] sm:$0xff]
        %v317 = vld [vmem:[%s263 + $0x78] sm:$0xff]
        %v318 = vld [vmem:[%s263 + $0x80] sm:$0xff]
        %v319 = vld [vmem:[%s263 + $0x88] sm:$0xff]
        %v320 = vld [vmem:[%s263 + $0x90] sm:$0xff]
        %v321 = vld [vmem:[%s263 + $0x98] sm:$0xff]
        %v322 = vld [vmem:[%s263 + $0xa0] sm:$0xff]
        %v323 = vld [vmem:[%s263 + $0xa8] sm:$0xff]
        %v324 = vld [vmem:[%s263 + $0xb0] sm:$0xff]
        %v325 = vld [vmem:[%s263 + $0xb8] sm:$0xff]
        %v326 = vld [vmem:[%s263 + $0xc0] sm:$0xff]
        %v327 = vld [vmem:[%s263 + $0xc8] sm:$0xff]
        %v328 = vld [vmem:[%s263 + $0xd0] sm:$0xff]
        %v329 = vld [vmem:[%s263 + $0xd8] sm:$0xff]
        %v330 = vld [vmem:[%s263 + $0xe0] sm:$0xff]
        %v331 = vld [vmem:[%s263 + $0xe8] sm:$0xff]
        %v332 = vld [vmem:[%s263 + $0xf0] sm:$0xff]
        %v333 = vld [vmem:[%s263 + $0xf8] sm:$0xff]
        %v334 = vld [vmem:[%s263 + $0x100] sm:$0xff]
        %v335 = vld [vmem:[%s263 + $0x108] sm:$0xff]
        %v336 = vld [vmem:[%s263 + $0x110] sm:$0xff]
        %v337 = vld [vmem:[%s263 + $0x118] sm:$0xff]
        %v338 = vld [vmem:[%s263 + $0x120] sm:$0xff]
        %v339 = vld [vmem:[%s263 + $0x128] sm:$0xff]
        %v340 = vld [vmem:[%s263 + $0x130] sm:$0xff]
        %v341 = vld [vmem:[%s263 + $0x138] sm:$0xff]
        %v342 = vld [vmem:[%s263 + $0x140] sm:$0xff]
        %v343 = vld [vmem:[%s263 + $0x148] sm:$0xff]
        %v344 = vld [vmem:[%s263 + $0x150] sm:$0xff]
        %v345 = vld [vmem:[%s263 + $0x158] sm:$0xff]
        %v346 = vld [vmem:[%s263 + $0x160] sm:$0xff]
        %v347 = vld [vmem:[%s263 + $0x168] sm:$0xff]
        %v348 = vld [vmem:[%s263 + $0x170] sm:$0xff]
        %v349 = vld [vmem:[%s263 + $0x178] sm:$0xff]
        %v350 = vld [vmem:[%s263 + $0x180] sm:$0xff]
        %v351 = vld [vmem:[%s263 + $0x188] sm:$0xff]
        %v352 = vld [vmem:[%s263 + $0x190] sm:$0xff]
        %v353 = vld [vmem:[%s263 + $0x198] sm:$0xff]
        %v354 = vld [vmem:[%s263 + $0x1a0] sm:$0xff]
        %v355 = vld [vmem:[%s263 + $0x1a8] sm:$0xff]
        %v356 = vld [vmem:[%s263 + $0x1b0] sm:$0xff]
        %v357 = vld [vmem:[%s263 + $0x1b8] sm:$0xff]
        %v358 = vld [vmem:[%s263 + $0x1c0] sm:$0xff]
        %v359 = vld [vmem:[%s263 + $0x1c8] sm:$0xff]
        %v360 = vld [vmem:[%s263 + $0x1d0] sm:$0xff]
        %v361 = vld [vmem:[%s263 + $0x1d8] sm:$0xff]
        %v362 = vld [vmem:[%s263 + $0x1e0] sm:$0xff]
        %v363 = vld [vmem:[%s263 + $0x1e8] sm:$0xff]
        %v364 = vld [vmem:[%s263 + $0x1f0] sm:$0xff]
        %v365 = vld [vmem:[%s263 + $0x1f8] sm:$0xff]
        %v366 = vlaneseq
        %v367 = vshrl.u32 %v366, 7
        %v368 = vadd.s32 %v367, 8
        %v369 = vadd.s32 %v367, 16
        %v370 = vadd.s32 %v367, 24
        %v371 = vadd.s32 %v367, 32
        %v372 = vadd.s32 %v367, 40
        %v373 = vadd.s32 %v367, 48
        %v374 = vadd.s32 %v367, 56
        %v375 = vadd.s32 %v367, 64
        %v376 = vadd.s32 %v367, 72
        %v377 = vadd.s32 %v367, 80
        %v378 = vadd.s32 %v367, 88
        %v379 = vadd.s32 %v367, 96
        %v380 = vadd.s32 %v367, 104
        %v381 = vadd.s32 %v367, 112
        %v382 = vadd.s32 %v367, 120
        %v383 = vadd.s32 %v367, 128
        %v384 = vadd.s32 %v367, 136
        %v385 = vadd.s32 %v367, 144
        %v386 = vadd.s32 %v367, 152
        %v387 = vadd.s32 %v367, 160
        %v388 = vadd.s32 %v367, 168
        %v389 = vadd.s32 %v367, 176
        %v390 = vadd.s32 %v367, 184
        %v391 = vadd.s32 %v367, 192
        %v392 = vadd.s32 %v367, 200
        %v393 = vadd.s32 %v367, 208
        %v394 = vadd.s32 %v367, 216
        %v395 = vadd.s32 %v367, 224
        %v396 = vadd.s32 %v367, 232
        %v397 = vadd.s32 %v367, 240
        %v398 = vadd.s32 %v367, 248
        %v399 = vadd.s32 %v367, 256
        %v400 = vadd.s32 %v367, 264
        %v401 = vadd.s32 %v367, 272
        %v402 = vadd.s32 %v367, 280
        %v403 = vadd.s32 %v367, 288
        %v404 = vadd.s32 %v367, 296
        %v405 = vadd.s32 %v367, 304
        %v406 = vadd.s32 %v367, 312
        %v407 = vadd.s32 %v367, 320
        %v408 = vadd.s32 %v367, 328
        %v409 = vadd.s32 %v367, 336
        %v410 = vadd.s32 %v367, 344
        %v411 = vadd.s32 %v367, 352
        %v412 = vadd.s32 %v367, 360
        %v413 = vadd.s32 %v367, 368
        %v414 = vadd.s32 %v367, 376
        %v415 = vadd.s32 %v367, 384
        %v416 = vadd.s32 %v367, 392
        %v417 = vadd.s32 %v367, 400
        %v418 = vadd.s32 %v367, 408
        %v419 = vadd.s32 %v367, 416
        %v420 = vadd.s32 %v367, 424
        %v421 = vadd.s32 %v367, 432
        %v422 = vadd.s32 %v367, 440
        %v423 = vadd.s32 %v367, 448
        %v424 = vadd.s32 %v367, 456
        %v425 = vadd.s32 %v367, 464
        %v426 = vadd.s32 %v367, 472
        %v427 = vadd.s32 %v367, 480
        %v428 = vadd.s32 %v367, 488
        %v429 = vadd.s32 %v367, 496
        %v430 = vadd.s32 %v367, 504
        %vm431 = vcmp.lt.s32.totalorder %v367, 0
        %v432 = vsub.s32 0, %v367
        %v433 = vsel %vm431, %v432, %v367
        %v434 = vshrl.u32 %v433, 4
        %v435 = vand.u32 %v433, 15
        %v436 = vsub.s32 0, %v435
        %v437 = vsel %vm431, %v436, %v435
        %vm438 = vcmp.lt.s32.totalorder %v368, 0
        %v439 = vsub.s32 0, %v368
        %v440 = vsel %vm438, %v439, %v368
        %v441 = vshrl.u32 %v440, 4
        %v442 = vand.u32 %v440, 15
        %v443 = vsub.s32 0, %v442
        %v444 = vsel %vm438, %v443, %v442
        %vm445 = vcmp.lt.s32.totalorder %v369, 0
        %v446 = vsub.s32 0, %v369
        %v447 = vsel %vm445, %v446, %v369
        %v448 = vshrl.u32 %v447, 4
        %v449 = vand.u32 %v447, 15
        %v450 = vsub.s32 0, %v449
        %v451 = vsel %vm445, %v450, %v449
        %vm452 = vcmp.lt.s32.totalorder %v370, 0
        %v453 = vsub.s32 0, %v370
        %v454 = vsel %vm452, %v453, %v370
        %v455 = vshrl.u32 %v454, 4
        %v456 = vand.u32 %v454, 15
        %v457 = vsub.s32 0, %v456
        %v458 = vsel %vm452, %v457, %v456
        %vm459 = vcmp.lt.s32.totalorder %v371, 0
        %v460 = vsub.s32 0, %v371
        %v461 = vsel %vm459, %v460, %v371
        %v462 = vshrl.u32 %v461, 4
        %v463 = vand.u32 %v461, 15
        %v464 = vsub.s32 0, %v463
        %v465 = vsel %vm459, %v464, %v463
        %vm466 = vcmp.lt.s32.totalorder %v372, 0
        %v467 = vsub.s32 0, %v372
        %v468 = vsel %vm466, %v467, %v372
        %v469 = vshrl.u32 %v468, 4
        %v470 = vand.u32 %v468, 15
        %v471 = vsub.s32 0, %v470
        %v472 = vsel %vm466, %v471, %v470
        %vm473 = vcmp.lt.s32.totalorder %v373, 0
        %v474 = vsub.s32 0, %v373
        %v475 = vsel %vm473, %v474, %v373
        %v476 = vshrl.u32 %v475, 4
        %v477 = vand.u32 %v475, 15
        %v478 = vsub.s32 0, %v477
        %v479 = vsel %vm473, %v478, %v477
        %vm480 = vcmp.lt.s32.totalorder %v374, 0
        %v481 = vsub.s32 0, %v374
        %v482 = vsel %vm480, %v481, %v374
        %v483 = vshrl.u32 %v482, 4
        %v484 = vand.u32 %v482, 15
        %v485 = vsub.s32 0, %v484
        %v486 = vsel %vm480, %v485, %v484
        %vm487 = vcmp.lt.s32.totalorder %v375, 0
        %v488 = vsub.s32 0, %v375
        %v489 = vsel %vm487, %v488, %v375
        %v490 = vshrl.u32 %v489, 4
        %v491 = vand.u32 %v489, 15
        %v492 = vsub.s32 0, %v491
        %v493 = vsel %vm487, %v492, %v491
        %vm494 = vcmp.lt.s32.totalorder %v376, 0
        %v495 = vsub.s32 0, %v376
        %v496 = vsel %vm494, %v495, %v376
        %v497 = vshrl.u32 %v496, 4
        %v498 = vand.u32 %v496, 15
        %v499 = vsub.s32 0, %v498
        %v500 = vsel %vm494, %v499, %v498
        %vm501 = vcmp.lt.s32.totalorder %v377, 0
        %v502 = vsub.s32 0, %v377
        %v503 = vsel %vm501, %v502, %v377
        %v504 = vshrl.u32 %v503, 4
        %v505 = vand.u32 %v503, 15
        %v506 = vsub.s32 0, %v505
        %v507 = vsel %vm501, %v506, %v505
        %vm508 = vcmp.lt.s32.totalorder %v378, 0
        %v509 = vsub.s32 0, %v378
        %v510 = vsel %vm508, %v509, %v378
        %v511 = vshrl.u32 %v510, 4
        %v512 = vand.u32 %v510, 15
        %v513 = vsub.s32 0, %v512
        %v514 = vsel %vm508, %v513, %v512
        %vm515 = vcmp.lt.s32.totalorder %v379, 0
        %v516 = vsub.s32 0, %v379
        %v517 = vsel %vm515, %v516, %v379
        %v518 = vshrl.u32 %v517, 4
        %v519 = vand.u32 %v517, 15
        %v520 = vsub.s32 0, %v519
        %v521 = vsel %vm515, %v520, %v519
        %vm522 = vcmp.lt.s32.totalorder %v380, 0
        %v523 = vsub.s32 0, %v380
        %v524 = vsel %vm522, %v523, %v380
        %v525 = vshrl.u32 %v524, 4
        %v526 = vand.u32 %v524, 15
        %v527 = vsub.s32 0, %v526
        %v528 = vsel %vm522, %v527, %v526
        %vm529 = vcmp.lt.s32.totalorder %v381, 0
        %v530 = vsub.s32 0, %v381
        %v531 = vsel %vm529, %v530, %v381
        %v532 = vshrl.u32 %v531, 4
        %v533 = vand.u32 %v531, 15
        %v534 = vsub.s32 0, %v533
        %v535 = vsel %vm529, %v534, %v533
        %vm536 = vcmp.lt.s32.totalorder %v382, 0
        %v537 = vsub.s32 0, %v382
        %v538 = vsel %vm536, %v537, %v382
        %v539 = vshrl.u32 %v538, 4
        %v540 = vand.u32 %v538, 15
        %v541 = vsub.s32 0, %v540
        %v542 = vsel %vm536, %v541, %v540
        %vm543 = vcmp.lt.s32.totalorder %v383, 0
        %v544 = vsub.s32 0, %v383
        %v545 = vsel %vm543, %v544, %v383
        %v546 = vshrl.u32 %v545, 4
        %v547 = vand.u32 %v545, 15
        %v548 = vsub.s32 0, %v547
        %v549 = vsel %vm543, %v548, %v547
        %vm550 = vcmp.lt.s32.totalorder %v384, 0
        %v551 = vsub.s32 0, %v384
        %v552 = vsel %vm550, %v551, %v384
        %v553 = vshrl.u32 %v552, 4
        %v554 = vand.u32 %v552, 15
        %v555 = vsub.s32 0, %v554
        %v556 = vsel %vm550, %v555, %v554
        %vm557 = vcmp.lt.s32.totalorder %v385, 0
        %v558 = vsub.s32 0, %v385
        %v559 = vsel %vm557, %v558, %v385
        %v560 = vshrl.u32 %v559, 4
        %v561 = vand.u32 %v559, 15
        %v562 = vsub.s32 0, %v561
        %v563 = vsel %vm557, %v562, %v561
        %vm564 = vcmp.lt.s32.totalorder %v386, 0
        %v565 = vsub.s32 0, %v386
        %v566 = vsel %vm564, %v565, %v386
        %v567 = vshrl.u32 %v566, 4
        %v568 = vand.u32 %v566, 15
        %v569 = vsub.s32 0, %v568
        %v570 = vsel %vm564, %v569, %v568
        %vm571 = vcmp.lt.s32.totalorder %v387, 0
        %v572 = vsub.s32 0, %v387
        %v573 = vsel %vm571, %v572, %v387
        %v574 = vshrl.u32 %v573, 4
        %v575 = vand.u32 %v573, 15
        %v576 = vsub.s32 0, %v575
        %v577 = vsel %vm571, %v576, %v575
        %vm578 = vcmp.lt.s32.totalorder %v388, 0
        %v579 = vsub.s32 0, %v388
        %v580 = vsel %vm578, %v579, %v388
        %v581 = vshrl.u32 %v580, 4
        %v582 = vand.u32 %v580, 15
        %v583 = vsub.s32 0, %v582
        %v584 = vsel %vm578, %v583, %v582
        %vm585 = vcmp.lt.s32.totalorder %v389, 0
        %v586 = vsub.s32 0, %v389
        %v587 = vsel %vm585, %v586, %v389
        %v588 = vshrl.u32 %v587, 4
        %v589 = vand.u32 %v587, 15
        %v590 = vsub.s32 0, %v589
        %v591 = vsel %vm585, %v590, %v589
        %vm592 = vcmp.lt.s32.totalorder %v390, 0
        %v593 = vsub.s32 0, %v390
        %v594 = vsel %vm592, %v593, %v390
        %v595 = vshrl.u32 %v594, 4
        %v596 = vand.u32 %v594, 15
        %v597 = vsub.s32 0, %v596
        %v598 = vsel %vm592, %v597, %v596
        %vm599 = vcmp.lt.s32.totalorder %v391, 0
        %v600 = vsub.s32 0, %v391
        %v601 = vsel %vm599, %v600, %v391
        %v602 = vshrl.u32 %v601, 4
        %v603 = vand.u32 %v601, 15
        %v604 = vsub.s32 0, %v603
        %v605 = vsel %vm599, %v604, %v603
        %vm606 = vcmp.lt.s32.totalorder %v392, 0
        %v607 = vsub.s32 0, %v392
        %v608 = vsel %vm606, %v607, %v392
        %v609 = vshrl.u32 %v608, 4
        %v610 = vand.u32 %v608, 15
        %v611 = vsub.s32 0, %v610
        %v612 = vsel %vm606, %v611, %v610
        %vm613 = vcmp.lt.s32.totalorder %v393, 0
        %v614 = vsub.s32 0, %v393
        %v615 = vsel %vm613, %v614, %v393
        %v616 = vshrl.u32 %v615, 4
        %v617 = vand.u32 %v615, 15
        %v618 = vsub.s32 0, %v617
        %v619 = vsel %vm613, %v618, %v617
        %vm620 = vcmp.lt.s32.totalorder %v394, 0
        %v621 = vsub.s32 0, %v394
        %v622 = vsel %vm620, %v621, %v394
        %v623 = vshrl.u32 %v622, 4
        %v624 = vand.u32 %v622, 15
        %v625 = vsub.s32 0, %v624
        %v626 = vsel %vm620, %v625, %v624
        %vm627 = vcmp.lt.s32.totalorder %v395, 0
        %v628 = vsub.s32 0, %v395
        %v629 = vsel %vm627, %v628, %v395
        %v630 = vshrl.u32 %v629, 4
        %v631 = vand.u32 %v629, 15
        %v632 = vsub.s32 0, %v631
        %v633 = vsel %vm627, %v632, %v631
        %vm634 = vcmp.lt.s32.totalorder %v396, 0
        %v635 = vsub.s32 0, %v396
        %v636 = vsel %vm634, %v635, %v396
        %v637 = vshrl.u32 %v636, 4
        %v638 = vand.u32 %v636, 15
        %v639 = vsub.s32 0, %v638
        %v640 = vsel %vm634, %v639, %v638
        %vm641 = vcmp.lt.s32.totalorder %v397, 0
        %v642 = vsub.s32 0, %v397
        %v643 = vsel %vm641, %v642, %v397
        %v644 = vshrl.u32 %v643, 4
        %v645 = vand.u32 %v643, 15
        %v646 = vsub.s32 0, %v645
        %v647 = vsel %vm641, %v646, %v645
        %vm648 = vcmp.lt.s32.totalorder %v398, 0
        %v649 = vsub.s32 0, %v398
        %v650 = vsel %vm648, %v649, %v398
        %v651 = vshrl.u32 %v650, 4
        %v652 = vand.u32 %v650, 15
        %v653 = vsub.s32 0, %v652
        %v654 = vsel %vm648, %v653, %v652
        %vm655 = vcmp.lt.s32.totalorder %v399, 0
        %v656 = vsub.s32 0, %v399
        %v657 = vsel %vm655, %v656, %v399
        %v658 = vshrl.u32 %v657, 4
        %v659 = vand.u32 %v657, 15
        %v660 = vsub.s32 0, %v659
        %v661 = vsel %vm655, %v660, %v659
        %vm662 = vcmp.lt.s32.totalorder %v400, 0
        %v663 = vsub.s32 0, %v400
        %v664 = vsel %vm662, %v663, %v400
        %v665 = vshrl.u32 %v664, 4
        %v666 = vand.u32 %v664, 15
        %v667 = vsub.s32 0, %v666
        %v668 = vsel %vm662, %v667, %v666
        %vm669 = vcmp.lt.s32.totalorder %v401, 0
        %v670 = vsub.s32 0, %v401
        %v671 = vsel %vm669, %v670, %v401
        %v672 = vshrl.u32 %v671, 4
        %v673 = vand.u32 %v671, 15
        %v674 = vsub.s32 0, %v673
        %v675 = vsel %vm669, %v674, %v673
        %vm676 = vcmp.lt.s32.totalorder %v402, 0
        %v677 = vsub.s32 0, %v402
        %v678 = vsel %vm676, %v677, %v402
        %v679 = vshrl.u32 %v678, 4
        %v680 = vand.u32 %v678, 15
        %v681 = vsub.s32 0, %v680
        %v682 = vsel %vm676, %v681, %v680
        %vm683 = vcmp.lt.s32.totalorder %v403, 0
        %v684 = vsub.s32 0, %v403
        %v685 = vsel %vm683, %v684, %v403
        %v686 = vshrl.u32 %v685, 4
        %v687 = vand.u32 %v685, 15
        %v688 = vsub.s32 0, %v687
        %v689 = vsel %vm683, %v688, %v687
        %vm690 = vcmp.lt.s32.totalorder %v404, 0
        %v691 = vsub.s32 0, %v404
        %v692 = vsel %vm690, %v691, %v404
        %v693 = vshrl.u32 %v692, 4
        %v694 = vand.u32 %v692, 15
        %v695 = vsub.s32 0, %v694
        %v696 = vsel %vm690, %v695, %v694
        %vm697 = vcmp.lt.s32.totalorder %v405, 0
        %v698 = vsub.s32 0, %v405
        %v699 = vsel %vm697, %v698, %v405
        %v700 = vshrl.u32 %v699, 4
        %v701 = vand.u32 %v699, 15
        %v702 = vsub.s32 0, %v701
        %v703 = vsel %vm697, %v702, %v701
        %vm704 = vcmp.lt.s32.totalorder %v406, 0
        %v705 = vsub.s32 0, %v406
        %v706 = vsel %vm704, %v705, %v406
        %v707 = vshrl.u32 %v706, 4
        %v708 = vand.u32 %v706, 15
        %v709 = vsub.s32 0, %v708
        %v710 = vsel %vm704, %v709, %v708
        %vm711 = vcmp.lt.s32.totalorder %v407, 0
        %v712 = vsub.s32 0, %v407
        %v713 = vsel %vm711, %v712, %v407
        %v714 = vshrl.u32 %v713, 4
        %v715 = vand.u32 %v713, 15
        %v716 = vsub.s32 0, %v715
        %v717 = vsel %vm711, %v716, %v715
        %vm718 = vcmp.lt.s32.totalorder %v408, 0
        %v719 = vsub.s32 0, %v408
        %v720 = vsel %vm718, %v719, %v408
        %v721 = vshrl.u32 %v720, 4
        %v722 = vand.u32 %v720, 15
        %v723 = vsub.s32 0, %v722
        %v724 = vsel %vm718, %v723, %v722
        %vm725 = vcmp.lt.s32.totalorder %v409, 0
        %v726 = vsub.s32 0, %v409
        %v727 = vsel %vm725, %v726, %v409
        %v728 = vshrl.u32 %v727, 4
        %v729 = vand.u32 %v727, 15
        %v730 = vsub.s32 0, %v729
        %v731 = vsel %vm725, %v730, %v729
        %vm732 = vcmp.lt.s32.totalorder %v410, 0
        %v733 = vsub.s32 0, %v410
        %v734 = vsel %vm732, %v733, %v410
        %v735 = vshrl.u32 %v734, 4
        %v736 = vand.u32 %v734, 15
        %v737 = vsub.s32 0, %v736
        %v738 = vsel %vm732, %v737, %v736
        %vm739 = vcmp.lt.s32.totalorder %v411, 0
        %v740 = vsub.s32 0, %v411
        %v741 = vsel %vm739, %v740, %v411
        %v742 = vshrl.u32 %v741, 4
        %v743 = vand.u32 %v741, 15
        %v744 = vsub.s32 0, %v743
        %v745 = vsel %vm739, %v744, %v743
        %vm746 = vcmp.lt.s32.totalorder %v412, 0
        %v747 = vsub.s32 0, %v412
        %v748 = vsel %vm746, %v747, %v412
        %v749 = vshrl.u32 %v748, 4
        %v750 = vand.u32 %v748, 15
        %v751 = vsub.s32 0, %v750
        %v752 = vsel %vm746, %v751, %v750
        %vm753 = vcmp.lt.s32.totalorder %v413, 0
        %v754 = vsub.s32 0, %v413
        %v755 = vsel %vm753, %v754, %v413
        %v756 = vshrl.u32 %v755, 4
        %v757 = vand.u32 %v755, 15
        %v758 = vsub.s32 0, %v757
        %v759 = vsel %vm753, %v758, %v757
        %vm760 = vcmp.lt.s32.totalorder %v414, 0
        %v761 = vsub.s32 0, %v414
        %v762 = vsel %vm760, %v761, %v414
        %v763 = vshrl.u32 %v762, 4
        %v764 = vand.u32 %v762, 15
        %v765 = vsub.s32 0, %v764
        %v766 = vsel %vm760, %v765, %v764
        %vm767 = vcmp.lt.s32.totalorder %v415, 0
        %v768 = vsub.s32 0, %v415
        %v769 = vsel %vm767, %v768, %v415
        %v770 = vshrl.u32 %v769, 4
        %v771 = vand.u32 %v769, 15
        %v772 = vsub.s32 0, %v771
        %v773 = vsel %vm767, %v772, %v771
        %vm774 = vcmp.lt.s32.totalorder %v416, 0
        %v775 = vsub.s32 0, %v416
        %v776 = vsel %vm774, %v775, %v416
        %v777 = vshrl.u32 %v776, 4
        %v778 = vand.u32 %v776, 15
        %v779 = vsub.s32 0, %v778
        %v780 = vsel %vm774, %v779, %v778
        %vm781 = vcmp.lt.s32.totalorder %v417, 0
        %v782 = vsub.s32 0, %v417
        %v783 = vsel %vm781, %v782, %v417
        %v784 = vshrl.u32 %v783, 4
        %v785 = vand.u32 %v783, 15
        %v786 = vsub.s32 0, %v785
        %v787 = vsel %vm781, %v786, %v785
        %vm788 = vcmp.lt.s32.totalorder %v418, 0
        %v789 = vsub.s32 0, %v418
        %v790 = vsel %vm788, %v789, %v418
        %v791 = vshrl.u32 %v790, 4
        %v792 = vand.u32 %v790, 15
        %v793 = vsub.s32 0, %v792
        %v794 = vsel %vm788, %v793, %v792
        %vm795 = vcmp.lt.s32.totalorder %v419, 0
        %v796 = vsub.s32 0, %v419
        %v797 = vsel %vm795, %v796, %v419
        %v798 = vshrl.u32 %v797, 4
        %v799 = vand.u32 %v797, 15
        %v800 = vsub.s32 0, %v799
        %v801 = vsel %vm795, %v800, %v799
        %vm802 = vcmp.lt.s32.totalorder %v420, 0
        %v803 = vsub.s32 0, %v420
        %v804 = vsel %vm802, %v803, %v420
        %v805 = vshrl.u32 %v804, 4
        %v806 = vand.u32 %v804, 15
        %v807 = vsub.s32 0, %v806
        %v808 = vsel %vm802, %v807, %v806
        %vm809 = vcmp.lt.s32.totalorder %v421, 0
        %v810 = vsub.s32 0, %v421
        %v811 = vsel %vm809, %v810, %v421
        %v812 = vshrl.u32 %v811, 4
        %v813 = vand.u32 %v811, 15
        %v814 = vsub.s32 0, %v813
        %v815 = vsel %vm809, %v814, %v813
        %vm816 = vcmp.lt.s32.totalorder %v422, 0
        %v817 = vsub.s32 0, %v422
        %v818 = vsel %vm816, %v817, %v422
        %v819 = vshrl.u32 %v818, 4
        %v820 = vand.u32 %v818, 15
        %v821 = vsub.s32 0, %v820
        %v822 = vsel %vm816, %v821, %v820
        %vm823 = vcmp.lt.s32.totalorder %v423, 0
        %v824 = vsub.s32 0, %v423
        %v825 = vsel %vm823, %v824, %v423
        %v826 = vshrl.u32 %v825, 4
        %v827 = vand.u32 %v825, 15
        %v828 = vsub.s32 0, %v827
        %v829 = vsel %vm823, %v828, %v827
        %vm830 = vcmp.lt.s32.totalorder %v424, 0
        %v831 = vsub.s32 0, %v424
        %v832 = vsel %vm830, %v831, %v424
        %v833 = vshrl.u32 %v832, 4
        %v834 = vand.u32 %v832, 15
        %v835 = vsub.s32 0, %v834
        %v836 = vsel %vm830, %v835, %v834
        %vm837 = vcmp.lt.s32.totalorder %v425, 0
        %v838 = vsub.s32 0, %v425
        %v839 = vsel %vm837, %v838, %v425
        %v840 = vshrl.u32 %v839, 4
        %v841 = vand.u32 %v839, 15
        %v842 = vsub.s32 0, %v841
        %v843 = vsel %vm837, %v842, %v841
        %vm844 = vcmp.lt.s32.totalorder %v426, 0
        %v845 = vsub.s32 0, %v426
        %v846 = vsel %vm844, %v845, %v426
        %v847 = vshrl.u32 %v846, 4
        %v848 = vand.u32 %v846, 15
        %v849 = vsub.s32 0, %v848
        %v850 = vsel %vm844, %v849, %v848
        %vm851 = vcmp.lt.s32.totalorder %v427, 0
        %v852 = vsub.s32 0, %v427
        %v853 = vsel %vm851, %v852, %v427
        %v854 = vshrl.u32 %v853, 4
        %v855 = vand.u32 %v853, 15
        %v856 = vsub.s32 0, %v855
        %v857 = vsel %vm851, %v856, %v855
        %vm858 = vcmp.lt.s32.totalorder %v428, 0
        %v859 = vsub.s32 0, %v428
        %v860 = vsel %vm858, %v859, %v428
        %v861 = vshrl.u32 %v860, 4
        %v862 = vand.u32 %v860, 15
        %v863 = vsub.s32 0, %v862
        %v864 = vsel %vm858, %v863, %v862
        %vm865 = vcmp.lt.s32.totalorder %v429, 0
        %v866 = vsub.s32 0, %v429
        %v867 = vsel %vm865, %v866, %v429
        %v868 = vshrl.u32 %v867, 4
        %v869 = vand.u32 %v867, 15
        %v870 = vsub.s32 0, %v869
        %v871 = vsel %vm865, %v870, %v869
        %vm872 = vcmp.lt.s32.totalorder %v430, 0
        %v873 = vsub.s32 0, %v430
        %v874 = vsel %vm872, %v873, %v430
        %v875 = vshrl.u32 %v874, 4
        %v876 = vand.u32 %v874, 15
        %v877 = vsub.s32 0, %v876
        %v878 = vsel %vm872, %v877, %v876
        %vm879 = vcmp.ne.s32.totalorder %v437, 0
        %vm880 = vcmp.ne.s32.totalorder %v444, 0
        %vm881 = vcmp.ne.s32.totalorder %v451, 0
        %vm882 = vcmp.ne.s32.totalorder %v458, 0
        %vm883 = vcmp.ne.s32.totalorder %v465, 0
        %vm884 = vcmp.ne.s32.totalorder %v472, 0
        %vm885 = vcmp.ne.s32.totalorder %v479, 0
        %vm886 = vcmp.ne.s32.totalorder %v486, 0
        %vm887 = vcmp.ne.s32.totalorder %v493, 0
        %vm888 = vcmp.ne.s32.totalorder %v500, 0
        %vm889 = vcmp.ne.s32.totalorder %v507, 0
        %vm890 = vcmp.ne.s32.totalorder %v514, 0
        %vm891 = vcmp.ne.s32.totalorder %v521, 0
        %vm892 = vcmp.ne.s32.totalorder %v528, 0
        %vm893 = vcmp.ne.s32.totalorder %v535, 0
        %vm894 = vcmp.ne.s32.totalorder %v542, 0
        %vm895 = vcmp.ne.s32.totalorder %v549, 0
        %vm896 = vcmp.ne.s32.totalorder %v556, 0
        %vm897 = vcmp.ne.s32.totalorder %v563, 0
        %vm898 = vcmp.ne.s32.totalorder %v570, 0
        %vm899 = vcmp.ne.s32.totalorder %v577, 0
        %vm900 = vcmp.ne.s32.totalorder %v584, 0
        %vm901 = vcmp.ne.s32.totalorder %v591, 0
        %vm902 = vcmp.ne.s32.totalorder %v598, 0
        %vm903 = vcmp.ne.s32.totalorder %v605, 0
        %vm904 = vcmp.ne.s32.totalorder %v612, 0
        %vm905 = vcmp.ne.s32.totalorder %v619, 0
        %vm906 = vcmp.ne.s32.totalorder %v626, 0
        %vm907 = vcmp.ne.s32.totalorder %v633, 0
        %vm908 = vcmp.ne.s32.totalorder %v640, 0
        %vm909 = vcmp.ne.s32.totalorder %v647, 0
        %vm910 = vcmp.ne.s32.totalorder %v654, 0
        %vm911 = vcmp.ne.s32.totalorder %v661, 0
        %vm912 = vcmp.ne.s32.totalorder %v668, 0
        %vm913 = vcmp.ne.s32.totalorder %v675, 0
        %vm914 = vcmp.ne.s32.totalorder %v682, 0
        %vm915 = vcmp.ne.s32.totalorder %v689, 0
        %vm916 = vcmp.ne.s32.totalorder %v696, 0
        %vm917 = vcmp.ne.s32.totalorder %v703, 0
        %vm918 = vcmp.ne.s32.totalorder %v710, 0
        %vm919 = vcmp.ne.s32.totalorder %v717, 0
        %vm920 = vcmp.ne.s32.totalorder %v724, 0
        %vm921 = vcmp.ne.s32.totalorder %v731, 0
        %vm922 = vcmp.ne.s32.totalorder %v738, 0
        %vm923 = vcmp.ne.s32.totalorder %v745, 0
        %vm924 = vcmp.ne.s32.totalorder %v752, 0
        %vm925 = vcmp.ne.s32.totalorder %v759, 0
        %vm926 = vcmp.ne.s32.totalorder %v766, 0
        %vm927 = vcmp.ne.s32.totalorder %v773, 0
        %vm928 = vcmp.ne.s32.totalorder %v780, 0
        %vm929 = vcmp.ne.s32.totalorder %v787, 0
        %vm930 = vcmp.ne.s32.totalorder %v794, 0
        %vm931 = vcmp.ne.s32.totalorder %v801, 0
        %vm932 = vcmp.ne.s32.totalorder %v808, 0
        %vm933 = vcmp.ne.s32.totalorder %v815, 0
        %vm934 = vcmp.ne.s32.totalorder %v822, 0
        %vm935 = vcmp.ne.s32.totalorder %v829, 0
        %vm936 = vcmp.ne.s32.totalorder %v836, 0
        %vm937 = vcmp.ne.s32.totalorder %v843, 0
        %vm938 = vcmp.ne.s32.totalorder %v850, 0
        %vm939 = vcmp.ne.s32.totalorder %v857, 0
        %vm940 = vcmp.ne.s32.totalorder %v864, 0
        %vm941 = vcmp.ne.s32.totalorder %v871, 0
        %vm942 = vcmp.ne.s32.totalorder %v878, 0
        %vm943 = vcmp.lt.s32.totalorder %v437, 0
        %vm944 = vcmp.lt.s32.totalorder %v444, 0
        %vm945 = vcmp.lt.s32.totalorder %v451, 0
        %vm946 = vcmp.lt.s32.totalorder %v458, 0
        %vm947 = vcmp.lt.s32.totalorder %v465, 0
        %vm948 = vcmp.lt.s32.totalorder %v472, 0
        %vm949 = vcmp.lt.s32.totalorder %v479, 0
        %vm950 = vcmp.lt.s32.totalorder %v486, 0
        %vm951 = vcmp.lt.s32.totalorder %v493, 0
        %vm952 = vcmp.lt.s32.totalorder %v500, 0
        %vm953 = vcmp.lt.s32.totalorder %v507, 0
        %vm954 = vcmp.lt.s32.totalorder %v514, 0
        %vm955 = vcmp.lt.s32.totalorder %v521, 0
        %vm956 = vcmp.lt.s32.totalorder %v528, 0
        %vm957 = vcmp.lt.s32.totalorder %v535, 0
        %vm958 = vcmp.lt.s32.totalorder %v542, 0
        %vm959 = vcmp.lt.s32.totalorder %v549, 0
        %vm960 = vcmp.lt.s32.totalorder %v556, 0
        %vm961 = vcmp.lt.s32.totalorder %v563, 0
        %vm962 = vcmp.lt.s32.totalorder %v570, 0
        %vm963 = vcmp.lt.s32.totalorder %v577, 0
        %vm964 = vcmp.lt.s32.totalorder %v584, 0
        %vm965 = vcmp.lt.s32.totalorder %v591, 0
        %vm966 = vcmp.lt.s32.totalorder %v598, 0
        %vm967 = vcmp.lt.s32.totalorder %v605, 0
        %vm968 = vcmp.lt.s32.totalorder %v612, 0
        %vm969 = vcmp.lt.s32.totalorder %v619, 0
        %vm970 = vcmp.lt.s32.totalorder %v626, 0
        %vm971 = vcmp.lt.s32.totalorder %v633, 0
        %vm972 = vcmp.lt.s32.totalorder %v640, 0
        %vm973 = vcmp.lt.s32.totalorder %v647, 0
        %vm974 = vcmp.lt.s32.totalorder %v654, 0
        %vm975 = vcmp.lt.s32.totalorder %v661, 0
        %vm976 = vcmp.lt.s32.totalorder %v668, 0
        %vm977 = vcmp.lt.s32.totalorder %v675, 0
        %vm978 = vcmp.lt.s32.totalorder %v682, 0
        %vm979 = vcmp.lt.s32.totalorder %v689, 0
        %vm980 = vcmp.lt.s32.totalorder %v696, 0
        %vm981 = vcmp.lt.s32.totalorder %v703, 0
        %vm982 = vcmp.lt.s32.totalorder %v710, 0
        %vm983 = vcmp.lt.s32.totalorder %v717, 0
        %vm984 = vcmp.lt.s32.totalorder %v724, 0
        %vm985 = vcmp.lt.s32.totalorder %v731, 0
        %vm986 = vcmp.lt.s32.totalorder %v738, 0
        %vm987 = vcmp.lt.s32.totalorder %v745, 0
        %vm988 = vcmp.lt.s32.totalorder %v752, 0
        %vm989 = vcmp.lt.s32.totalorder %v759, 0
        %vm990 = vcmp.lt.s32.totalorder %v766, 0
        %vm991 = vcmp.lt.s32.totalorder %v773, 0
        %vm992 = vcmp.lt.s32.totalorder %v780, 0
        %vm993 = vcmp.lt.s32.totalorder %v787, 0
        %vm994 = vcmp.lt.s32.totalorder %v794, 0
        %vm995 = vcmp.lt.s32.totalorder %v801, 0
        %vm996 = vcmp.lt.s32.totalorder %v808, 0
        %vm997 = vcmp.lt.s32.totalorder %v815, 0
        %vm998 = vcmp.lt.s32.totalorder %v822, 0
        %vm999 = vcmp.lt.s32.totalorder %v829, 0
        %vm1000 = vcmp.lt.s32.totalorder %v836, 0
        %vm1001 = vcmp.lt.s32.totalorder %v843, 0
        %vm1002 = vcmp.lt.s32.totalorder %v850, 0
        %vm1003 = vcmp.lt.s32.totalorder %v857, 0
        %vm1004 = vcmp.lt.s32.totalorder %v864, 0
        %vm1005 = vcmp.lt.s32.totalorder %v871, 0
        %vm1006 = vcmp.lt.s32.totalorder %v878, 0
        %vm1007 = vmand %vm943, %vm879
        %vm1008 = vmand %vm944, %vm880
        %vm1009 = vmand %vm945, %vm881
        %vm1010 = vmand %vm946, %vm882
        %vm1011 = vmand %vm947, %vm883
        %vm1012 = vmand %vm948, %vm884
        %vm1013 = vmand %vm949, %vm885
        %vm1014 = vmand %vm950, %vm886
        %vm1015 = vmand %vm951, %vm887
        %vm1016 = vmand %vm952, %vm888
        %vm1017 = vmand %vm953, %vm889
        %vm1018 = vmand %vm954, %vm890
        %vm1019 = vmand %vm955, %vm891
        %vm1020 = vmand %vm956, %vm892
        %vm1021 = vmand %vm957, %vm893
        %vm1022 = vmand %vm958, %vm894
        %vm1023 = vmand %vm959, %vm895
        %vm1024 = vmand %vm960, %vm896
        %vm1025 = vmand %vm961, %vm897
        %vm1026 = vmand %vm962, %vm898
        %vm1027 = vmand %vm963, %vm899
        %vm1028 = vmand %vm964, %vm900
        %vm1029 = vmand %vm965, %vm901
        %vm1030 = vmand %vm966, %vm902
        %vm1031 = vmand %vm967, %vm903
        %vm1032 = vmand %vm968, %vm904
        %vm1033 = vmand %vm969, %vm905
        %vm1034 = vmand %vm970, %vm906
        %vm1035 = vmand %vm971, %vm907
        %vm1036 = vmand %vm972, %vm908
        %vm1037 = vmand %vm973, %vm909
        %vm1038 = vmand %vm974, %vm910
        %vm1039 = vmand %vm975, %vm911
        %vm1040 = vmand %vm976, %vm912
        %vm1041 = vmand %vm977, %vm913
        %vm1042 = vmand %vm978, %vm914
        %vm1043 = vmand %vm979, %vm915
        %vm1044 = vmand %vm980, %vm916
        %vm1045 = vmand %vm981, %vm917
        %vm1046 = vmand %vm982, %vm918
        %vm1047 = vmand %vm983, %vm919
        %vm1048 = vmand %vm984, %vm920
        %vm1049 = vmand %vm985, %vm921
        %vm1050 = vmand %vm986, %vm922
        %vm1051 = vmand %vm987, %vm923
        %vm1052 = vmand %vm988, %vm924
        %vm1053 = vmand %vm989, %vm925
        %vm1054 = vmand %vm990, %vm926
        %vm1055 = vmand %vm991, %vm927
        %vm1056 = vmand %vm992, %vm928
        %vm1057 = vmand %vm993, %vm929
        %vm1058 = vmand %vm994, %vm930
        %vm1059 = vmand %vm995, %vm931
        %vm1060 = vmand %vm996, %vm932
        %vm1061 = vmand %vm997, %vm933
        %vm1062 = vmand %vm998, %vm934
        %vm1063 = vmand %vm999, %vm935
        %vm1064 = vmand %vm1000, %vm936
        %vm1065 = vmand %vm1001, %vm937
        %vm1066 = vmand %vm1002, %vm938
        %vm1067 = vmand %vm1003, %vm939
        %vm1068 = vmand %vm1004, %vm940
        %vm1069 = vmand %vm1005, %vm941
        %vm1070 = vmand %vm1006, %vm942
        %v1071 = vadd.s32 %v437, 16
        %v1072 = vadd.s32 %v444, 16
        %v1073 = vadd.s32 %v451, 16
        %v1074 = vadd.s32 %v458, 16
        %v1075 = vadd.s32 %v465, 16
        %v1076 = vadd.s32 %v472, 16
        %v1077 = vadd.s32 %v479, 16
        %v1078 = vadd.s32 %v486, 16
        %v1079 = vadd.s32 %v493, 16
        %v1080 = vadd.s32 %v500, 16
        %v1081 = vadd.s32 %v507, 16
        %v1082 = vadd.s32 %v514, 16
        %v1083 = vadd.s32 %v521, 16
        %v1084 = vadd.s32 %v528, 16
        %v1085 = vadd.s32 %v535, 16
        %v1086 = vadd.s32 %v542, 16
        %v1087 = vadd.s32 %v549, 16
        %v1088 = vadd.s32 %v556, 16
        %v1089 = vadd.s32 %v563, 16
        %v1090 = vadd.s32 %v570, 16
        %v1091 = vadd.s32 %v577, 16
        %v1092 = vadd.s32 %v584, 16
        %v1093 = vadd.s32 %v591, 16
        %v1094 = vadd.s32 %v598, 16
        %v1095 = vadd.s32 %v605, 16
        %v1096 = vadd.s32 %v612, 16
        %v1097 = vadd.s32 %v619, 16
        %v1098 = vadd.s32 %v626, 16
        %v1099 = vadd.s32 %v633, 16
        %v1100 = vadd.s32 %v640, 16
        %v1101 = vadd.s32 %v647, 16
        %v1102 = vadd.s32 %v654, 16
        %v1103 = vadd.s32 %v661, 16
        %v1104 = vadd.s32 %v668, 16
        %v1105 = vadd.s32 %v675, 16
        %v1106 = vadd.s32 %v682, 16
        %v1107 = vadd.s32 %v689, 16
        %v1108 = vadd.s32 %v696, 16
        %v1109 = vadd.s32 %v703, 16
        %v1110 = vadd.s32 %v710, 16
        %v1111 = vadd.s32 %v717, 16
        %v1112 = vadd.s32 %v724, 16
        %v1113 = vadd.s32 %v731, 16
        %v1114 = vadd.s32 %v738, 16
        %v1115 = vadd.s32 %v745, 16
        %v1116 = vadd.s32 %v752, 16
        %v1117 = vadd.s32 %v759, 16
        %v1118 = vadd.s32 %v766, 16
        %v1119 = vadd.s32 %v773, 16
        %v1120 = vadd.s32 %v780, 16
        %v1121 = vadd.s32 %v787, 16
        %v1122 = vadd.s32 %v794, 16
        %v1123 = vadd.s32 %v801, 16
        %v1124 = vadd.s32 %v808, 16
        %v1125 = vadd.s32 %v815, 16
        %v1126 = vadd.s32 %v822, 16
        %v1127 = vadd.s32 %v829, 16
        %v1128 = vadd.s32 %v836, 16
        %v1129 = vadd.s32 %v843, 16
        %v1130 = vadd.s32 %v850, 16
        %v1131 = vadd.s32 %v857, 16
        %v1132 = vadd.s32 %v864, 16
        %v1133 = vadd.s32 %v871, 16
        %v1134 = vadd.s32 %v878, 16
        %v1135 = vsel %vm1007, %v1071, %v437
        %v1136 = vsel %vm1008, %v1072, %v444
        %v1137 = vsel %vm1009, %v1073, %v451
        %v1138 = vsel %vm1010, %v1074, %v458
        %v1139 = vsel %vm1011, %v1075, %v465
        %v1140 = vsel %vm1012, %v1076, %v472
        %v1141 = vsel %vm1013, %v1077, %v479
        %v1142 = vsel %vm1014, %v1078, %v486
        %v1143 = vsel %vm1015, %v1079, %v493
        %v1144 = vsel %vm1016, %v1080, %v500
        %v1145 = vsel %vm1017, %v1081, %v507
        %v1146 = vsel %vm1018, %v1082, %v514
        %v1147 = vsel %vm1019, %v1083, %v521
        %v1148 = vsel %vm1020, %v1084, %v528
        %v1149 = vsel %vm1021, %v1085, %v535
        %v1150 = vsel %vm1022, %v1086, %v542
        %v1151 = vsel %vm1023, %v1087, %v549
        %v1152 = vsel %vm1024, %v1088, %v556
        %v1153 = vsel %vm1025, %v1089, %v563
        %v1154 = vsel %vm1026, %v1090, %v570
        %v1155 = vsel %vm1027, %v1091, %v577
        %v1156 = vsel %vm1028, %v1092, %v584
        %v1157 = vsel %vm1029, %v1093, %v591
        %v1158 = vsel %vm1030, %v1094, %v598
        %v1159 = vsel %vm1031, %v1095, %v605
        %v1160 = vsel %vm1032, %v1096, %v612
        %v1161 = vsel %vm1033, %v1097, %v619
        %v1162 = vsel %vm1034, %v1098, %v626
        %v1163 = vsel %vm1035, %v1099, %v633
        %v1164 = vsel %vm1036, %v1100, %v640
        %v1165 = vsel %vm1037, %v1101, %v647
        %v1166 = vsel %vm1038, %v1102, %v654
        %v1167 = vsel %vm1039, %v1103, %v661
        %v1168 = vsel %vm1040, %v1104, %v668
        %v1169 = vsel %vm1041, %v1105, %v675
        %v1170 = vsel %vm1042, %v1106, %v682
        %v1171 = vsel %vm1043, %v1107, %v689
        %v1172 = vsel %vm1044, %v1108, %v696
        %v1173 = vsel %vm1045, %v1109, %v703
        %v1174 = vsel %vm1046, %v1110, %v710
        %v1175 = vsel %vm1047, %v1111, %v717
        %v1176 = vsel %vm1048, %v1112, %v724
        %v1177 = vsel %vm1049, %v1113, %v731
        %v1178 = vsel %vm1050, %v1114, %v738
        %v1179 = vsel %vm1051, %v1115, %v745
        %v1180 = vsel %vm1052, %v1116, %v752
        %v1181 = vsel %vm1053, %v1117, %v759
        %v1182 = vsel %vm1054, %v1118, %v766
        %v1183 = vsel %vm1055, %v1119, %v773
        %v1184 = vsel %vm1056, %v1120, %v780
        %v1185 = vsel %vm1057, %v1121, %v787
        %v1186 = vsel %vm1058, %v1122, %v794
        %v1187 = vsel %vm1059, %v1123, %v801
        %v1188 = vsel %vm1060, %v1124, %v808
        %v1189 = vsel %vm1061, %v1125, %v815
        %v1190 = vsel %vm1062, %v1126, %v822
        %v1191 = vsel %vm1063, %v1127, %v829
        %v1192 = vsel %vm1064, %v1128, %v836
        %v1193 = vsel %vm1065, %v1129, %v843
        %v1194 = vsel %vm1066, %v1130, %v850
        %v1195 = vsel %vm1067, %v1131, %v857
        %v1196 = vsel %vm1068, %v1132, %v864
        %v1197 = vsel %vm1069, %v1133, %v871
        %v1198 = vsel %vm1070, %v1134, %v878
        %vm1199 = vcmp.ne.s32.totalorder %v1135, 0
        %vm1200 = vcmp.ne.s32.totalorder %v1136, 0
        %vm1201 = vcmp.ne.s32.totalorder %v1137, 0
        %vm1202 = vcmp.ne.s32.totalorder %v1138, 0
        %vm1203 = vcmp.ne.s32.totalorder %v1139, 0
        %vm1204 = vcmp.ne.s32.totalorder %v1140, 0
        %vm1205 = vcmp.ne.s32.totalorder %v1141, 0
        %vm1206 = vcmp.ne.s32.totalorder %v1142, 0
        %vm1207 = vcmp.ne.s32.totalorder %v1143, 0
        %vm1208 = vcmp.ne.s32.totalorder %v1144, 0
        %vm1209 = vcmp.ne.s32.totalorder %v1145, 0
        %vm1210 = vcmp.ne.s32.totalorder %v1146, 0
        %vm1211 = vcmp.ne.s32.totalorder %v1147, 0
        %vm1212 = vcmp.ne.s32.totalorder %v1148, 0
        %vm1213 = vcmp.ne.s32.totalorder %v1149, 0
        %vm1214 = vcmp.ne.s32.totalorder %v1150, 0
        %vm1215 = vcmp.ne.s32.totalorder %v1151, 0
        %vm1216 = vcmp.ne.s32.totalorder %v1152, 0
        %vm1217 = vcmp.ne.s32.totalorder %v1153, 0
        %vm1218 = vcmp.ne.s32.totalorder %v1154, 0
        %vm1219 = vcmp.ne.s32.totalorder %v1155, 0
        %vm1220 = vcmp.ne.s32.totalorder %v1156, 0
        %vm1221 = vcmp.ne.s32.totalorder %v1157, 0
        %vm1222 = vcmp.ne.s32.totalorder %v1158, 0
        %vm1223 = vcmp.ne.s32.totalorder %v1159, 0
        %vm1224 = vcmp.ne.s32.totalorder %v1160, 0
        %vm1225 = vcmp.ne.s32.totalorder %v1161, 0
        %vm1226 = vcmp.ne.s32.totalorder %v1162, 0
        %vm1227 = vcmp.ne.s32.totalorder %v1163, 0
        %vm1228 = vcmp.ne.s32.totalorder %v1164, 0
        %vm1229 = vcmp.ne.s32.totalorder %v1165, 0
        %vm1230 = vcmp.ne.s32.totalorder %v1166, 0
        %vm1231 = vcmp.ne.s32.totalorder %v1167, 0
        %vm1232 = vcmp.ne.s32.totalorder %v1168, 0
        %vm1233 = vcmp.ne.s32.totalorder %v1169, 0
        %vm1234 = vcmp.ne.s32.totalorder %v1170, 0
        %vm1235 = vcmp.ne.s32.totalorder %v1171, 0
        %vm1236 = vcmp.ne.s32.totalorder %v1172, 0
        %vm1237 = vcmp.ne.s32.totalorder %v1173, 0
        %vm1238 = vcmp.ne.s32.totalorder %v1174, 0
        %vm1239 = vcmp.ne.s32.totalorder %v1175, 0
        %vm1240 = vcmp.ne.s32.totalorder %v1176, 0
        %vm1241 = vcmp.ne.s32.totalorder %v1177, 0
        %vm1242 = vcmp.ne.s32.totalorder %v1178, 0
        %vm1243 = vcmp.ne.s32.totalorder %v1179, 0
        %vm1244 = vcmp.ne.s32.totalorder %v1180, 0
        %vm1245 = vcmp.ne.s32.totalorder %v1181, 0
        %vm1246 = vcmp.ne.s32.totalorder %v1182, 0
        %vm1247 = vcmp.ne.s32.totalorder %v1183, 0
        %vm1248 = vcmp.ne.s32.totalorder %v1184, 0
        %vm1249 = vcmp.ne.s32.totalorder %v1185, 0
        %vm1250 = vcmp.ne.s32.totalorder %v1186, 0
        %vm1251 = vcmp.ne.s32.totalorder %v1187, 0
        %vm1252 = vcmp.ne.s32.totalorder %v1188, 0
        %vm1253 = vcmp.ne.s32.totalorder %v1189, 0
        %vm1254 = vcmp.ne.s32.totalorder %v1190, 0
        %vm1255 = vcmp.ne.s32.totalorder %v1191, 0
        %vm1256 = vcmp.ne.s32.totalorder %v1192, 0
        %vm1257 = vcmp.ne.s32.totalorder %v1193, 0
        %vm1258 = vcmp.ne.s32.totalorder %v1194, 0
        %vm1259 = vcmp.ne.s32.totalorder %v1195, 0
        %vm1260 = vcmp.ne.s32.totalorder %v1196, 0
        %vm1261 = vcmp.ne.s32.totalorder %v1197, 0
        %vm1262 = vcmp.ne.s32.totalorder %v1198, 0
        %vm1263 = vcmp.ne.s32.totalorder %v1135, 15
        %vm1264 = vcmp.ne.s32.totalorder %v1136, 15
        %vm1265 = vcmp.ne.s32.totalorder %v1137, 15
        %vm1266 = vcmp.ne.s32.totalorder %v1138, 15
        %vm1267 = vcmp.ne.s32.totalorder %v1139, 15
        %vm1268 = vcmp.ne.s32.totalorder %v1140, 15
        %vm1269 = vcmp.ne.s32.totalorder %v1141, 15
        %vm1270 = vcmp.ne.s32.totalorder %v1142, 15
        %vm1271 = vcmp.ne.s32.totalorder %v1143, 15
        %vm1272 = vcmp.ne.s32.totalorder %v1144, 15
        %vm1273 = vcmp.ne.s32.totalorder %v1145, 15
        %vm1274 = vcmp.ne.s32.totalorder %v1146, 15
        %vm1275 = vcmp.ne.s32.totalorder %v1147, 15
        %vm1276 = vcmp.ne.s32.totalorder %v1148, 15
        %vm1277 = vcmp.ne.s32.totalorder %v1149, 15
        %vm1278 = vcmp.ne.s32.totalorder %v1150, 15
        %vm1279 = vcmp.ne.s32.totalorder %v1151, 15
        %vm1280 = vcmp.ne.s32.totalorder %v1152, 15
        %vm1281 = vcmp.ne.s32.totalorder %v1153, 15
        %vm1282 = vcmp.ne.s32.totalorder %v1154, 15
        %vm1283 = vcmp.ne.s32.totalorder %v1155, 15
        %vm1284 = vcmp.ne.s32.totalorder %v1156, 15
        %vm1285 = vcmp.ne.s32.totalorder %v1157, 15
        %vm1286 = vcmp.ne.s32.totalorder %v1158, 15
        %vm1287 = vcmp.ne.s32.totalorder %v1159, 15
        %vm1288 = vcmp.ne.s32.totalorder %v1160, 15
        %vm1289 = vcmp.ne.s32.totalorder %v1161, 15
        %vm1290 = vcmp.ne.s32.totalorder %v1162, 15
        %vm1291 = vcmp.ne.s32.totalorder %v1163, 15
        %vm1292 = vcmp.ne.s32.totalorder %v1164, 15
        %vm1293 = vcmp.ne.s32.totalorder %v1165, 15
        %vm1294 = vcmp.ne.s32.totalorder %v1166, 15
        %vm1295 = vcmp.ne.s32.totalorder %v1167, 15
        %vm1296 = vcmp.ne.s32.totalorder %v1168, 15
        %vm1297 = vcmp.ne.s32.totalorder %v1169, 15
        %vm1298 = vcmp.ne.s32.totalorder %v1170, 15
        %vm1299 = vcmp.ne.s32.totalorder %v1171, 15
        %vm1300 = vcmp.ne.s32.totalorder %v1172, 15
        %vm1301 = vcmp.ne.s32.totalorder %v1173, 15
        %vm1302 = vcmp.ne.s32.totalorder %v1174, 15
        %vm1303 = vcmp.ne.s32.totalorder %v1175, 15
        %vm1304 = vcmp.ne.s32.totalorder %v1176, 15
        %vm1305 = vcmp.ne.s32.totalorder %v1177, 15
        %vm1306 = vcmp.ne.s32.totalorder %v1178, 15
        %vm1307 = vcmp.ne.s32.totalorder %v1179, 15
        %vm1308 = vcmp.ne.s32.totalorder %v1180, 15
        %vm1309 = vcmp.ne.s32.totalorder %v1181, 15
        %vm1310 = vcmp.ne.s32.totalorder %v1182, 15
        %vm1311 = vcmp.ne.s32.totalorder %v1183, 15
        %vm1312 = vcmp.ne.s32.totalorder %v1184, 15
        %vm1313 = vcmp.ne.s32.totalorder %v1185, 15
        %vm1314 = vcmp.ne.s32.totalorder %v1186, 15
        %vm1315 = vcmp.ne.s32.totalorder %v1187, 15
        %vm1316 = vcmp.ne.s32.totalorder %v1188, 15
        %vm1317 = vcmp.ne.s32.totalorder %v1189, 15
        %vm1318 = vcmp.ne.s32.totalorder %v1190, 15
        %vm1319 = vcmp.ne.s32.totalorder %v1191, 15
        %vm1320 = vcmp.ne.s32.totalorder %v1192, 15
        %vm1321 = vcmp.ne.s32.totalorder %v1193, 15
        %vm1322 = vcmp.ne.s32.totalorder %v1194, 15
        %vm1323 = vcmp.ne.s32.totalorder %v1195, 15
        %vm1324 = vcmp.ne.s32.totalorder %v1196, 15
        %vm1325 = vcmp.ne.s32.totalorder %v1197, 15
        %vm1326 = vcmp.ne.s32.totalorder %v1198, 15
        %v1327 = vrot.slane %v302, 7
        %v1328 = vrot.slane %v303, 7
        %v1329 = vrot.slane %v304, 7
        %v1330 = vrot.slane %v305, 7
        %v1331 = vrot.slane %v306, 7
        %v1332 = vrot.slane %v307, 7
        %v1333 = vrot.slane %v308, 7
        %v1334 = vrot.slane %v309, 7
        %v1335 = vrot.slane %v310, 7
        %v1336 = vrot.slane %v311, 7
        %v1337 = vrot.slane %v312, 7
        %v1338 = vrot.slane %v313, 7
        %v1339 = vrot.slane %v314, 7
        %v1340 = vrot.slane %v315, 7
        %v1341 = vrot.slane %v316, 7
        %v1342 = vrot.slane %v317, 7
        %v1343 = vrot.slane %v318, 7
        %v1344 = vrot.slane %v319, 7
        %v1345 = vrot.slane %v320, 7
        %v1346 = vrot.slane %v321, 7
        %v1347 = vrot.slane %v322, 7
        %v1348 = vrot.slane %v323, 7
        %v1349 = vrot.slane %v324, 7
        %v1350 = vrot.slane %v325, 7
        %v1351 = vrot.slane %v326, 7
        %v1352 = vrot.slane %v327, 7
        %v1353 = vrot.slane %v328, 7
        %v1354 = vrot.slane %v329, 7
        %v1355 = vrot.slane %v330, 7
        %v1356 = vrot.slane %v331, 7
        %v1357 = vrot.slane %v332, 7
        %v1358 = vrot.slane %v333, 7
        %v1359 = vrot.slane %v334, 7
        %v1360 = vrot.slane %v335, 7
        %v1361 = vrot.slane %v336, 7
        %v1362 = vrot.slane %v337, 7
        %v1363 = vrot.slane %v338, 7
        %v1364 = vrot.slane %v339, 7
        %v1365 = vrot.slane %v340, 7
        %v1366 = vrot.slane %v341, 7
        %v1367 = vrot.slane %v342, 7
        %v1368 = vrot.slane %v343, 7
        %v1369 = vrot.slane %v344, 7
        %v1370 = vrot.slane %v345, 7
        %v1371 = vrot.slane %v346, 7
        %v1372 = vrot.slane %v347, 7
        %v1373 = vrot.slane %v348, 7
        %v1374 = vrot.slane %v349, 7
        %v1375 = vrot.slane %v350, 7
        %v1376 = vrot.slane %v351, 7
        %v1377 = vrot.slane %v352, 7
        %v1378 = vrot.slane %v353, 7
        %v1379 = vrot.slane %v354, 7
        %v1380 = vrot.slane %v355, 7
        %v1381 = vrot.slane %v356, 7
        %v1382 = vrot.slane %v357, 7
        %v1383 = vrot.slane %v358, 7
        %v1384 = vrot.slane %v359, 7
        %v1385 = vrot.slane %v360, 7
        %v1386 = vrot.slane %v361, 7
        %v1387 = vrot.slane %v362, 7
        %v1388 = vrot.slane %v363, 7
        %v1389 = vrot.slane %v364, 7
        %v1390 = vrot.slane %v365, 7
        %vm1391 = vcmp.lt.s32.totalorder %v367, 1
        %v1392 = vsel %vm1391, %v1389, %v1390
        %v1393 = vsel %vm1391, %v1388, %v1389
        %v1394 = vsel %vm1391, %v1387, %v1388
        %v1395 = vsel %vm1391, %v1386, %v1387
        %v1396 = vsel %vm1391, %v1385, %v1386
        %v1397 = vsel %vm1391, %v1384, %v1385
        %v1398 = vsel %vm1391, %v1383, %v1384
        %v1399 = vsel %vm1391, %v1382, %v1383
        %v1400 = vsel %vm1391, %v1381, %v1382
        %v1401 = vsel %vm1391, %v1380, %v1381
        %v1402 = vsel %vm1391, %v1379, %v1380
        %v1403 = vsel %vm1391, %v1378, %v1379
        %v1404 = vsel %vm1391, %v1377, %v1378
        %v1405 = vsel %vm1391, %v1376, %v1377
        %v1406 = vsel %vm1391, %v1375, %v1376
        %v1407 = vsel %vm1391, %v1374, %v1375
        %v1408 = vsel %vm1391, %v1373, %v1374
        %v1409 = vsel %vm1391, %v1372, %v1373
        %v1410 = vsel %vm1391, %v1371, %v1372
        %v1411 = vsel %vm1391, %v1370, %v1371
        %v1412 = vsel %vm1391, %v1369, %v1370
        %v1413 = vsel %vm1391, %v1368, %v1369
        %v1414 = vsel %vm1391, %v1367, %v1368
        %v1415 = vsel %vm1391, %v1366, %v1367
        %v1416 = vsel %vm1391, %v1365, %v1366
        %v1417 = vsel %vm1391, %v1364, %v1365
        %v1418 = vsel %vm1391, %v1363, %v1364
        %v1419 = vsel %vm1391, %v1362, %v1363
        %v1420 = vsel %vm1391, %v1361, %v1362
        %v1421 = vsel %vm1391, %v1360, %v1361
        %v1422 = vsel %vm1391, %v1359, %v1360
        %v1423 = vsel %vm1391, %v1358, %v1359
        %v1424 = vsel %vm1391, %v1357, %v1358
        %v1425 = vsel %vm1391, %v1356, %v1357
        %v1426 = vsel %vm1391, %v1355, %v1356
        %v1427 = vsel %vm1391, %v1354, %v1355
        %v1428 = vsel %vm1391, %v1353, %v1354
        %v1429 = vsel %vm1391, %v1352, %v1353
        %v1430 = vsel %vm1391, %v1351, %v1352
        %v1431 = vsel %vm1391, %v1350, %v1351
        %v1432 = vsel %vm1391, %v1349, %v1350
        %v1433 = vsel %vm1391, %v1348, %v1349
        %v1434 = vsel %vm1391, %v1347, %v1348
        %v1435 = vsel %vm1391, %v1346, %v1347
        %v1436 = vsel %vm1391, %v1345, %v1346
        %v1437 = vsel %vm1391, %v1344, %v1345
        %v1438 = vsel %vm1391, %v1343, %v1344
        %v1439 = vsel %vm1391, %v1342, %v1343
        %v1440 = vsel %vm1391, %v1341, %v1342
        %v1441 = vsel %vm1391, %v1340, %v1341
        %v1442 = vsel %vm1391, %v1339, %v1340
        %v1443 = vsel %vm1391, %v1338, %v1339
        %v1444 = vsel %vm1391, %v1337, %v1338
        %v1445 = vsel %vm1391, %v1336, %v1337
        %v1446 = vsel %vm1391, %v1335, %v1336
        %v1447 = vsel %vm1391, %v1334, %v1335
        %v1448 = vsel %vm1391, %v1333, %v1334
        %v1449 = vsel %vm1391, %v1332, %v1333
        %v1450 = vsel %vm1391, %v1331, %v1332
        %v1451 = vsel %vm1391, %v1330, %v1331
        %v1452 = vsel %vm1391, %v1329, %v1330
        %v1453 = vsel %vm1391, %v1328, %v1329
        %v1454 = vsel %vm1391, %v1327, %v1328
        %v1455 = vsel %vm1391, %v1390, %v1327
        %v1456 = vsel %vm1199, %v1455, 0.0
        %v1457 = vsel %vm1200, %v1454, 0.0
        %v1458 = vsel %vm1201, %v1453, 0.0
        %v1459 = vsel %vm1202, %v1452, 0.0
        %v1460 = vsel %vm1203, %v1451, 0.0
        %v1461 = vsel %vm1204, %v1450, 0.0
        %v1462 = vsel %vm1205, %v1449, 0.0
        %v1463 = vsel %vm1206, %v1448, 0.0
        %v1464 = vsel %vm1207, %v1447, 0.0
        %v1465 = vsel %vm1208, %v1446, 0.0
        %v1466 = vsel %vm1209, %v1445, 0.0
        %v1467 = vsel %vm1210, %v1444, 0.0
        %v1468 = vsel %vm1211, %v1443, 0.0
        %v1469 = vsel %vm1212, %v1442, 0.0
        %v1470 = vsel %vm1213, %v1441, 0.0
        %v1471 = vsel %vm1214, %v1440, 0.0
        %v1472 = vsel %vm1215, %v1439, 0.0
        %v1473 = vsel %vm1216, %v1438, 0.0
        %v1474 = vsel %vm1217, %v1437, 0.0
        %v1475 = vsel %vm1218, %v1436, 0.0
        %v1476 = vsel %vm1219, %v1435, 0.0
        %v1477 = vsel %vm1220, %v1434, 0.0
        %v1478 = vsel %vm1221, %v1433, 0.0
        %v1479 = vsel %vm1222, %v1432, 0.0
        %v1480 = vsel %vm1223, %v1431, 0.0
        %v1481 = vsel %vm1224, %v1430, 0.0
        %v1482 = vsel %vm1225, %v1429, 0.0
        %v1483 = vsel %vm1226, %v1428, 0.0
        %v1484 = vsel %vm1227, %v1427, 0.0
        %v1485 = vsel %vm1228, %v1426, 0.0
        %v1486 = vsel %vm1229, %v1425, 0.0
        %v1487 = vsel %vm1230, %v1424, 0.0
        %v1488 = vsel %vm1231, %v1423, 0.0
        %v1489 = vsel %vm1232, %v1422, 0.0
        %v1490 = vsel %vm1233, %v1421, 0.0
        %v1491 = vsel %vm1234, %v1420, 0.0
        %v1492 = vsel %vm1235, %v1419, 0.0
        %v1493 = vsel %vm1236, %v1418, 0.0
        %v1494 = vsel %vm1237, %v1417, 0.0
        %v1495 = vsel %vm1238, %v1416, 0.0
        %v1496 = vsel %vm1239, %v1415, 0.0
        %v1497 = vsel %vm1240, %v1414, 0.0
        %v1498 = vsel %vm1241, %v1413, 0.0
        %v1499 = vsel %vm1242, %v1412, 0.0
        %v1500 = vsel %vm1243, %v1411, 0.0
        %v1501 = vsel %vm1244, %v1410, 0.0
        %v1502 = vsel %vm1245, %v1409, 0.0
        %v1503 = vsel %vm1246, %v1408, 0.0
        %v1504 = vsel %vm1247, %v1407, 0.0
        %v1505 = vsel %vm1248, %v1406, 0.0
        %v1506 = vsel %vm1249, %v1405, 0.0
        %v1507 = vsel %vm1250, %v1404, 0.0
        %v1508 = vsel %vm1251, %v1403, 0.0
        %v1509 = vsel %vm1252, %v1402, 0.0
        %v1510 = vsel %vm1253, %v1401, 0.0
        %v1511 = vsel %vm1254, %v1400, 0.0
        %v1512 = vsel %vm1255, %v1399, 0.0
        %v1513 = vsel %vm1256, %v1398, 0.0
        %v1514 = vsel %vm1257, %v1397, 0.0
        %v1515 = vsel %vm1258, %v1396, 0.0
        %v1516 = vsel %vm1259, %v1395, 0.0
        %v1517 = vsel %vm1260, %v1394, 0.0
        %v1518 = vsel %vm1261, %v1393, 0.0
        %v1519 = vsel %vm1262, %v1392, 0.0
        %v1520 = vrot.slane %v302, 1
        %v1521 = vrot.slane %v303, 1
        %v1522 = vrot.slane %v304, 1
        %v1523 = vrot.slane %v305, 1
        %v1524 = vrot.slane %v306, 1
        %v1525 = vrot.slane %v307, 1
        %v1526 = vrot.slane %v308, 1
        %v1527 = vrot.slane %v309, 1
        %v1528 = vrot.slane %v310, 1
        %v1529 = vrot.slane %v311, 1
        %v1530 = vrot.slane %v312, 1
        %v1531 = vrot.slane %v313, 1
        %v1532 = vrot.slane %v314, 1
        %v1533 = vrot.slane %v315, 1
        %v1534 = vrot.slane %v316, 1
        %v1535 = vrot.slane %v317, 1
        %v1536 = vrot.slane %v318, 1
        %v1537 = vrot.slane %v319, 1
        %v1538 = vrot.slane %v320, 1
        %v1539 = vrot.slane %v321, 1
        %v1540 = vrot.slane %v322, 1
        %v1541 = vrot.slane %v323, 1
        %v1542 = vrot.slane %v324, 1
        %v1543 = vrot.slane %v325, 1
        %v1544 = vrot.slane %v326, 1
        %v1545 = vrot.slane %v327, 1
        %v1546 = vrot.slane %v328, 1
        %v1547 = vrot.slane %v329, 1
        %v1548 = vrot.slane %v330, 1
        %v1549 = vrot.slane %v331, 1
        %v1550 = vrot.slane %v332, 1
        %v1551 = vrot.slane %v333, 1
        %v1552 = vrot.slane %v334, 1
        %v1553 = vrot.slane %v335, 1
        %v1554 = vrot.slane %v336, 1
        %v1555 = vrot.slane %v337, 1
        %v1556 = vrot.slane %v338, 1
        %v1557 = vrot.slane %v339, 1
        %v1558 = vrot.slane %v340, 1
        %v1559 = vrot.slane %v341, 1
        %v1560 = vrot.slane %v342, 1
        %v1561 = vrot.slane %v343, 1
        %v1562 = vrot.slane %v344, 1
        %v1563 = vrot.slane %v345, 1
        %v1564 = vrot.slane %v346, 1
        %v1565 = vrot.slane %v347, 1
        %v1566 = vrot.slane %v348, 1
        %v1567 = vrot.slane %v349, 1
        %v1568 = vrot.slane %v350, 1
        %v1569 = vrot.slane %v351, 1
        %v1570 = vrot.slane %v352, 1
        %v1571 = vrot.slane %v353, 1
        %v1572 = vrot.slane %v354, 1
        %v1573 = vrot.slane %v355, 1
        %v1574 = vrot.slane %v356, 1
        %v1575 = vrot.slane %v357, 1
        %v1576 = vrot.slane %v358, 1
        %v1577 = vrot.slane %v359, 1
        %v1578 = vrot.slane %v360, 1
        %v1579 = vrot.slane %v361, 1
        %v1580 = vrot.slane %v362, 1
        %v1581 = vrot.slane %v363, 1
        %v1582 = vrot.slane %v364, 1
        %v1583 = vrot.slane %v365, 1
        %vm1584 = vcmp.lt.s32.totalorder %v367, 7
        %v1585 = vsel %vm1584, %v1582, %v1583
        %v1586 = vsel %vm1584, %v1581, %v1582
        %v1587 = vsel %vm1584, %v1580, %v1581
        %v1588 = vsel %vm1584, %v1579, %v1580
        %v1589 = vsel %vm1584, %v1578, %v1579
        %v1590 = vsel %vm1584, %v1577, %v1578
        %v1591 = vsel %vm1584, %v1576, %v1577
        %v1592 = vsel %vm1584, %v1575, %v1576
        %v1593 = vsel %vm1584, %v1574, %v1575
        %v1594 = vsel %vm1584, %v1573, %v1574
        %v1595 = vsel %vm1584, %v1572, %v1573
        %v1596 = vsel %vm1584, %v1571, %v1572
        %v1597 = vsel %vm1584, %v1570, %v1571
        %v1598 = vsel %vm1584, %v1569, %v1570
        %v1599 = vsel %vm1584, %v1568, %v1569
        %v1600 = vsel %vm1584, %v1567, %v1568
        %v1601 = vsel %vm1584, %v1566, %v1567
        %v1602 = vsel %vm1584, %v1565, %v1566
        %v1603 = vsel %vm1584, %v1564, %v1565
        %v1604 = vsel %vm1584, %v1563, %v1564
        %v1605 = vsel %vm1584, %v1562, %v1563
        %v1606 = vsel %vm1584, %v1561, %v1562
        %v1607 = vsel %vm1584, %v1560, %v1561
        %v1608 = vsel %vm1584, %v1559, %v1560
        %v1609 = vsel %vm1584, %v1558, %v1559
        %v1610 = vsel %vm1584, %v1557, %v1558
        %v1611 = vsel %vm1584, %v1556, %v1557
        %v1612 = vsel %vm1584, %v1555, %v1556
        %v1613 = vsel %vm1584, %v1554, %v1555
        %v1614 = vsel %vm1584, %v1553, %v1554
        %v1615 = vsel %vm1584, %v1552, %v1553
        %v1616 = vsel %vm1584, %v1551, %v1552
        %v1617 = vsel %vm1584, %v1550, %v1551
        %v1618 = vsel %vm1584, %v1549, %v1550
        %v1619 = vsel %vm1584, %v1548, %v1549
        %v1620 = vsel %vm1584, %v1547, %v1548
        %v1621 = vsel %vm1584, %v1546, %v1547
        %v1622 = vsel %vm1584, %v1545, %v1546
        %v1623 = vsel %vm1584, %v1544, %v1545
        %v1624 = vsel %vm1584, %v1543, %v1544
        %v1625 = vsel %vm1584, %v1542, %v1543
        %v1626 = vsel %vm1584, %v1541, %v1542
        %v1627 = vsel %vm1584, %v1540, %v1541
        %v1628 = vsel %vm1584, %v1539, %v1540
        %v1629 = vsel %vm1584, %v1538, %v1539
        %v1630 = vsel %vm1584, %v1537, %v1538
        %v1631 = vsel %vm1584, %v1536, %v1537
        %v1632 = vsel %vm1584, %v1535, %v1536
        %v1633 = vsel %vm1584, %v1534, %v1535
        %v1634 = vsel %vm1584, %v1533, %v1534
        %v1635 = vsel %vm1584, %v1532, %v1533
        %v1636 = vsel %vm1584, %v1531, %v1532
        %v1637 = vsel %vm1584, %v1530, %v1531
        %v1638 = vsel %vm1584, %v1529, %v1530
        %v1639 = vsel %vm1584, %v1528, %v1529
        %v1640 = vsel %vm1584, %v1527, %v1528
        %v1641 = vsel %vm1584, %v1526, %v1527
        %v1642 = vsel %vm1584, %v1525, %v1526
        %v1643 = vsel %vm1584, %v1524, %v1525
        %v1644 = vsel %vm1584, %v1523, %v1524
        %v1645 = vsel %vm1584, %v1522, %v1523
        %v1646 = vsel %vm1584, %v1521, %v1522
        %v1647 = vsel %vm1584, %v1520, %v1521
        %v1648 = vsel %vm1584, %v1583, %v1520
        %v1649 = vsel %vm1263, %v1647, 0.0
        %v1650 = vsel %vm1264, %v1646, 0.0
        %v1651 = vsel %vm1265, %v1645, 0.0
        %v1652 = vsel %vm1266, %v1644, 0.0
        %v1653 = vsel %vm1267, %v1643, 0.0
        %v1654 = vsel %vm1268, %v1642, 0.0
        %v1655 = vsel %vm1269, %v1641, 0.0
        %v1656 = vsel %vm1270, %v1640, 0.0
        %v1657 = vsel %vm1271, %v1639, 0.0
        %v1658 = vsel %vm1272, %v1638, 0.0
        %v1659 = vsel %vm1273, %v1637, 0.0
        %v1660 = vsel %vm1274, %v1636, 0.0
        %v1661 = vsel %vm1275, %v1635, 0.0
        %v1662 = vsel %vm1276, %v1634, 0.0
        %v1663 = vsel %vm1277, %v1633, 0.0
        %v1664 = vsel %vm1278, %v1632, 0.0
        %v1665 = vsel %vm1279, %v1631, 0.0
        %v1666 = vsel %vm1280, %v1630, 0.0
        %v1667 = vsel %vm1281, %v1629, 0.0
        %v1668 = vsel %vm1282, %v1628, 0.0
        %v1669 = vsel %vm1283, %v1627, 0.0
        %v1670 = vsel %vm1284, %v1626, 0.0
        %v1671 = vsel %vm1285, %v1625, 0.0
        %v1672 = vsel %vm1286, %v1624, 0.0
        %v1673 = vsel %vm1287, %v1623, 0.0
        %v1674 = vsel %vm1288, %v1622, 0.0
        %v1675 = vsel %vm1289, %v1621, 0.0
        %v1676 = vsel %vm1290, %v1620, 0.0
        %v1677 = vsel %vm1291, %v1619, 0.0
        %v1678 = vsel %vm1292, %v1618, 0.0
        %v1679 = vsel %vm1293, %v1617, 0.0
        %v1680 = vsel %vm1294, %v1616, 0.0
        %v1681 = vsel %vm1295, %v1615, 0.0
        %v1682 = vsel %vm1296, %v1614, 0.0
        %v1683 = vsel %vm1297, %v1613, 0.0
        %v1684 = vsel %vm1298, %v1612, 0.0
        %v1685 = vsel %vm1299, %v1611, 0.0
        %v1686 = vsel %vm1300, %v1610, 0.0
        %v1687 = vsel %vm1301, %v1609, 0.0
        %v1688 = vsel %vm1302, %v1608, 0.0
        %v1689 = vsel %vm1303, %v1607, 0.0
        %v1690 = vsel %vm1304, %v1606, 0.0
        %v1691 = vsel %vm1305, %v1605, 0.0
        %v1692 = vsel %vm1306, %v1604, 0.0
        %v1693 = vsel %vm1307, %v1603, 0.0
        %v1694 = vsel %vm1308, %v1602, 0.0
        %v1695 = vsel %vm1309, %v1601, 0.0
        %v1696 = vsel %vm1310, %v1600, 0.0
        %v1697 = vsel %vm1311, %v1599, 0.0
        %v1698 = vsel %vm1312, %v1598, 0.0
        %v1699 = vsel %vm1313, %v1597, 0.0
        %v1700 = vsel %vm1314, %v1596, 0.0
        %v1701 = vsel %vm1315, %v1595, 0.0
        %v1702 = vsel %vm1316, %v1594, 0.0
        %v1703 = vsel %vm1317, %v1593, 0.0
        %v1704 = vsel %vm1318, %v1592, 0.0
        %v1705 = vsel %vm1319, %v1591, 0.0
        %v1706 = vsel %vm1320, %v1590, 0.0
        %v1707 = vsel %vm1321, %v1589, 0.0
        %v1708 = vsel %vm1322, %v1588, 0.0
        %v1709 = vsel %vm1323, %v1587, 0.0
        %v1710 = vsel %vm1324, %v1586, 0.0
        %v1711 = vsel %vm1325, %v1585, 0.0
        %v1712 = vsel %vm1326, %v1648, 0.0
        %v1713 = vld [vmem:[#allocation5] sm:$0xff]
        %v1714 = vld [vmem:[#allocation5 + $0x8] sm:$0xff]
        %v1715 = vld [vmem:[#allocation5 + $0x10] sm:$0xff]
        %v1716 = vld [vmem:[#allocation5 + $0x18] sm:$0xff]
        %v1717 = vld [vmem:[#allocation5 + $0x20] sm:$0xff]
        %v1718 = vld [vmem:[#allocation5 + $0x28] sm:$0xff]
        %v1719 = vld [vmem:[#allocation5 + $0x30] sm:$0xff]
        %v1720 = vld [vmem:[#allocation5 + $0x38] sm:$0xff]
        %v1721 = vld [vmem:[#allocation5 + $0x40] sm:$0xff]
        %v1722 = vld [vmem:[#allocation5 + $0x48] sm:$0xff]
        %v1723 = vld [vmem:[#allocation5 + $0x50] sm:$0xff]
        %v1724 = vld [vmem:[#allocation5 + $0x58] sm:$0xff]
        %v1725 = vld [vmem:[#allocation5 + $0x60] sm:$0xff]
        %v1726 = vld [vmem:[#allocation5 + $0x68] sm:$0xff]
        %v1727 = vld [vmem:[#allocation5 + $0x70] sm:$0xff]
        %v1728 = vld [vmem:[#allocation5 + $0x78] sm:$0xff]
        %v1729 = vld [vmem:[#allocation5 + $0x80] sm:$0xff]
        %v1730 = vld [vmem:[#allocation5 + $0x88] sm:$0xff]
        %v1731 = vld [vmem:[#allocation5 + $0x90] sm:$0xff]
        %v1732 = vld [vmem:[#allocation5 + $0x98] sm:$0xff]
        %v1733 = vld [vmem:[#allocation5 + $0xa0] sm:$0xff]
        %v1734 = vld [vmem:[#allocation5 + $0xa8] sm:$0xff]
        %v1735 = vld [vmem:[#allocation5 + $0xb0] sm:$0xff]
        %v1736 = vld [vmem:[#allocation5 + $0xb8] sm:$0xff]
        %v1737 = vld [vmem:[#allocation5 + $0xc0] sm:$0xff]
        %v1738 = vld [vmem:[#allocation5 + $0xc8] sm:$0xff]
        %v1739 = vld [vmem:[#allocation5 + $0xd0] sm:$0xff]
        %v1740 = vld [vmem:[#allocation5 + $0xd8] sm:$0xff]
        %v1741 = vld [vmem:[#allocation5 + $0xe0] sm:$0xff]
        %v1742 = vld [vmem:[#allocation5 + $0xe8] sm:$0xff]
        %v1743 = vld [vmem:[#allocation5 + $0xf0] sm:$0xff]
        %v1744 = vld [vmem:[#allocation5 + $0xf8] sm:$0xff]
        %v1745 = vld [vmem:[#allocation5 + $0x100] sm:$0xff]
        %v1746 = vld [vmem:[#allocation5 + $0x108] sm:$0xff]
        %v1747 = vld [vmem:[#allocation5 + $0x110] sm:$0xff]
        %v1748 = vld [vmem:[#allocation5 + $0x118] sm:$0xff]
        %v1749 = vld [vmem:[#allocation5 + $0x120] sm:$0xff]
        %v1750 = vld [vmem:[#allocation5 + $0x128] sm:$0xff]
        %v1751 = vld [vmem:[#allocation5 + $0x130] sm:$0xff]
        %v1752 = vld [vmem:[#allocation5 + $0x138] sm:$0xff]
        %v1753 = vld [vmem:[#allocation5 + $0x140] sm:$0xff]
        %v1754 = vld [vmem:[#allocation5 + $0x148] sm:$0xff]
        %v1755 = vld [vmem:[#allocation5 + $0x150] sm:$0xff]
        %v1756 = vld [vmem:[#allocation5 + $0x158] sm:$0xff]
        %v1757 = vld [vmem:[#allocation5 + $0x160] sm:$0xff]
        %v1758 = vld [vmem:[#allocation5 + $0x168] sm:$0xff]
        %v1759 = vld [vmem:[#allocation5 + $0x170] sm:$0xff]
        %v1760 = vld [vmem:[#allocation5 + $0x178] sm:$0xff]
        %1761 = vmatprep.subr.mxu0 0.0
        %1762 = vmatpush1.msra.mxu0 %v1713
        %1763 = vmatprep.subr.mxu0 0.0
        %1764 = vmatpush1.msra.mxu0 %v1714
        %1765 = vmatprep.subr.mxu0 0.0
        %1766 = vmatpush1.msra.mxu0 %v1715
        %1767 = vmatprep.subr.mxu0 0.0
        %1768 = vmatpush1.msra.mxu0 %v1716
        %1769 = vmatprep.subr.mxu0 0.0
        %1770 = vmatpush1.msra.mxu0 %v1717
        %1771 = vmatprep.subr.mxu0 0.0
        %1772 = vmatpush1.msra.mxu0 %v1718
        %1773 = vmatprep.subr.mxu0 0.0
        %1774 = vmatpush1.msra.mxu0 %v1719
        %1775 = vmatprep.subr.mxu0 0.0
        %1776 = vmatpush1.msra.mxu0 %v1720
        %1777 = vmatprep.subr.mxu0 0.0
        %1778 = vmatpush1.msra.mxu0 %v1721
        %1779 = vmatprep.subr.mxu0 0.0
        %1780 = vmatpush1.msra.mxu0 %v1722
        %1781 = vmatprep.subr.mxu0 0.0
        %1782 = vmatpush1.msra.mxu0 %v1723
        %1783 = vmatprep.subr.mxu0 0.0
        %1784 = vmatpush1.msra.mxu0 %v1724
        %1785 = vmatprep.subr.mxu0 0.0
        %1786 = vmatpush1.msra.mxu0 %v1725
        %1787 = vmatprep.subr.mxu0 0.0
        %1788 = vmatpush1.msra.mxu0 %v1726
        %1789 = vmatprep.subr.mxu0 0.0
        %1790 = vmatpush1.msra.mxu0 %v1727
        %1791 = vmatprep.subr.mxu0 0.0
        %1792 = vmatpush1.msra.mxu0 %v1728
        %1793 = vmatprep.subr.mxu0 0.0
        %1794 = vmatpush1.msra.mxu0 %v1729
        %1795 = vmatprep.subr.mxu0 0.0
        %1796 = vmatpush1.msra.mxu0 %v1730
        %1797 = vmatprep.subr.mxu0 0.0
        %1798 = vmatpush1.msra.mxu0 %v1731
        %1799 = vmatprep.subr.mxu0 0.0
        %1800 = vmatpush1.msra.mxu0 %v1732
        %1801 = vmatprep.subr.mxu0 0.0
        %1802 = vmatpush1.msra.mxu0 %v1733
        %1803 = vmatprep.subr.mxu0 0.0
        %1804 = vmatpush1.msra.mxu0 %v1734
        %1805 = vmatprep.subr.mxu0 0.0
        %1806 = vmatpush1.msra.mxu0 %v1735
        %1807 = vmatprep.subr.mxu0 0.0
        %1808 = vmatpush1.msra.mxu0 %v1736
        %1809 = vmatprep.subr.mxu0 0.0
        %1810 = vmatpush1.msra.mxu0 %v1737
        %1811 = vmatprep.subr.mxu0 0.0
        %1812 = vmatpush1.msra.mxu0 %v1738
        %1813 = vmatprep.subr.mxu0 0.0
        %1814 = vmatpush1.msra.mxu0 %v1739
        %1815 = vmatprep.subr.mxu0 0.0
        %1816 = vmatpush1.msra.mxu0 %v1740
        %1817 = vmatprep.subr.mxu0 0.0
        %1818 = vmatpush1.msra.mxu0 %v1741
        %1819 = vmatprep.subr.mxu0 0.0
        %1820 = vmatpush1.msra.mxu0 %v1742
        %1821 = vmatprep.subr.mxu0 0.0
        %1822 = vmatpush1.msra.mxu0 %v1743
        %1823 = vmatprep.subr.mxu0 0.0
        %1824 = vmatpush1.msra.mxu0 %v1744
        %1825 = vmatprep.mubr.f32.mxu0 %v302
        %1826 = vmatmul.mubr.f32.gmra.mrb[0].mxu0 %v1456
        %v1827 = vpop.f32.mrb[0].mxu0
        %v1828 = vadd.f32 0.0, %v1827
        %v1829 = vpop.f32.mrb[0].mxu0
        %1830 = vmatprep.mubr.f32.mxu0 %v303
        %1831 = vmatmul.mubr.f32.gmra.mrb[0].mxu0 %v1457
        %v1832 = vpop.f32.mrb[0].mxu0
        %v1833 = vadd.f32 0.0, %v1832
        %v1834 = vpop.f32.mrb[0].mxu0
        %1835 = vmatprep.mubr.f32.mxu0 %v304
        %1836 = vmatmul.mubr.f32.gmra.mrb[0].mxu0 %v1458
        %v1837 = vpop.f32.mrb[0].mxu0
        %v1838 = vadd.f32 0.0, %v1837
        %v1839 = vpop.f32.mrb[0].mxu0
        %1840 = vmatprep.mubr.f32.mxu0 %v305
        %1841 = vmatmul.mubr.f32.gmra.mrb[0].mxu0 %v1459
        %v1842 = vpop.f32.mrb[0].mxu0
        %v1843 = vadd.f32 0.0, %v1842
        %v1844 = vpop.f32.mrb[0].mxu0
        %1845 = vmatprep.mubr.f32.mxu0 %v306
        %1846 = vmatmul.mubr.f32.gmra.mrb[0].mxu0 %v1460
        %v1847 = vpop.f32.mrb[0].mxu0
        %v1848 = vadd.f32 0.0, %v1847
        %v1849 = vpop.f32.mrb[0].mxu0
        %1850 = vmatprep.mubr.f32.mxu0 %v307
        %1851 = vmatmul.mubr.f32.gmra.mrb[0].mxu0 %v1461
        %v1852 = vpop.f32.mrb[0].mxu0
        %v1853 = vadd.f32 0.0, %v1852
        %v1854 = vpop.f32.mrb[0].mxu0
        %1855 = vmatprep.mubr.f32.mxu0 %v308
        %1856 = vmatmul.mubr.f32.gmra.mrb[0].mxu0 %v1462
        %v1857 = vpop.f32.mrb[0].mxu0
        %v1858 = vadd.f32 0.0, %v1857
        %v1859 = vpop.f32.mrb[0].mxu0
        %1860 = vmatprep.mubr.f32.mxu0 %v309
        %1861 = vmatmul.mubr.f32.gmra.mrb[0].mxu0 %v1463
        %v1862 = vpop.f32.mrb[0].mxu0
        %v1863 = vadd.f32 0.0, %v1862
        %v1864 = vpop.f32.mrb[0].mxu0
        %1865 = vmatprep.mubr.f32.mxu0 %v310
        %1866 = vmatmul.mubr.f32.gmra.mrb[0].mxu0 %v1464
        %v1867 = vpop.f32.mrb[0].mxu0
        %v1868 = vadd.f32 0.0, %v1867
        %v1869 = vpop.f32.mrb[0].mxu0
        %1870 = vmatprep.mubr.f32.mxu0 %v311
        %1871 = vmatmul.mubr.f32.gmra.mrb[0].mxu0 %v1465
        %v1872 = vpop.f32.mrb[0].mxu0
        %v1873 = vadd.f32 0.0, %v1872
        %v1874 = vpop.f32.mrb[0].mxu0
        %1875 = vmatprep.mubr.f32.mxu0 %v312
        %1876 = vmatmul.mubr.f32.gmra.mrb[0].mxu0 %v1466
        %v1877 = vpop.f32.mrb[0].mxu0
        %v1878 = vadd.f32 0.0, %v1877
        %v1879 = vpop.f32.mrb[0].mxu0
        %1880 = vmatprep.mubr.f32.mxu0 %v313
        %1881 = vmatmul.mubr.f32.gmra.mrb[0].mxu0 %v1467
        %v1882 = vpop.f32.mrb[0].mxu0
        %v1883 = vadd.f32 0.0, %v1882
        %v1884 = vpop.f32.mrb[0].mxu0
        %1885 = vmatprep.mubr.f32.mxu0 %v314
        %1886 = vmatmul.mubr.f32.gmra.mrb[0].mxu0 %v1468
        %v1887 = vpop.f32.mrb[0].mxu0
        %v1888 = vadd.f32 0.0, %v1887
        %v1889 = vpop.f32.mrb[0].mxu0
        %1890 = vmatprep.mubr.f32.mxu0 %v315
        %1891 = vmatmul.mubr.f32.gmra.mrb[0].mxu0 %v1469
        %v1892 = vpop.f32.mrb[0].mxu0
        %v1893 = vadd.f32 0.0, %v1892
        %v1894 = vpop.f32.mrb[0].mxu0
        %1895 = vmatprep.mubr.f32.mxu0 %v316
        %1896 = vmatmul.mubr.f32.gmra.mrb[0].mxu0 %v1470
        %v1897 = vpop.f32.mrb[0].mxu0
        %v1898 = vadd.f32 0.0, %v1897
        %v1899 = vpop.f32.mrb[0].mxu0
        %1900 = vmatprep.mubr.f32.mxu0 %v317
        %1901 = vmatmul.mubr.f32.gmra.mrb[0].mxu0 %v1471
        %v1902 = vpop.f32.mrb[0].mxu0
        %v1903 = vadd.f32 0.0, %v1902
        %v1904 = vpop.f32.mrb[0].mxu0
        %1905 = vmatprep.mubr.f32.mxu0 %v318
        %1906 = vmatmul.mubr.f32.gmra.mrb[0].mxu0 %v1472
        %v1907 = vpop.f32.mrb[0].mxu0
        %v1908 = vadd.f32 0.0, %v1907
        %v1909 = vpop.f32.mrb[0].mxu0
        %1910 = vmatprep.mubr.f32.mxu0 %v319
        %1911 = vmatmul.mubr.f32.gmra.mrb[0].mxu0 %v1473
        %v1912 = vpop.f32.mrb[0].mxu0
        %v1913 = vadd.f32 0.0, %v1912
        %v1914 = vpop.f32.mrb[0].mxu0
        %1915 = vmatprep.mubr.f32.mxu0 %v320
        %1916 = vmatmul.mubr.f32.gmra.mrb[0].mxu0 %v1474
        %v1917 = vpop.f32.mrb[0].mxu0
        %v1918 = vadd.f32 0.0, %v1917
        %v1919 = vpop.f32.mrb[0].mxu0
        %1920 = vmatprep.mubr.f32.mxu0 %v321
        %1921 = vmatmul.mubr.f32.gmra.mrb[0].mxu0 %v1475
        %v1922 = vpop.f32.mrb[0].mxu0
        %v1923 = vadd.f32 0.0, %v1922
        %v1924 = vpop.f32.mrb[0].mxu0
        %1925 = vmatprep.mubr.f32.mxu0 %v322
        %1926 = vmatmul.mubr.f32.gmra.mrb[0].mxu0 %v1476
        %v1927 = vpop.f32.mrb[0].mxu0
        %v1928 = vadd.f32 0.0, %v1927
        %v1929 = vpop.f32.mrb[0].mxu0
        %1930 = vmatprep.mubr.f32.mxu0 %v323
        %1931 = vmatmul.mubr.f32.gmra.mrb[0].mxu0 %v1477
        %v1932 = vpop.f32.mrb[0].mxu0
        %v1933 = vadd.f32 0.0, %v1932
        %v1934 = vpop.f32.mrb[0].mxu0
        %1935 = vmatprep.mubr.f32.mxu0 %v324
        %1936 = vmatmul.mubr.f32.gmra.mrb[0].mxu0 %v1478
        %v1937 = vpop.f32.mrb[0].mxu0
        %v1938 = vadd.f32 0.0, %v1937
        %v1939 = vpop.f32.mrb[0].mxu0
        %1940 = vmatprep.mubr.f32.mxu0 %v325
        %1941 = vmatmul.mubr.f32.gmra.mrb[0].mxu0 %v1479
        %v1942 = vpop.f32.mrb[0].mxu0
        %v1943 = vadd.f32 0.0, %v1942
        %v1944 = vpop.f32.mrb[0].mxu0
        %1945 = vmatprep.mubr.f32.mxu0 %v326
        %1946 = vmatmul.mubr.f32.gmra.mrb[0].mxu0 %v1480
        %v1947 = vpop.f32.mrb[0].mxu0
        %v1948 = vadd.f32 0.0, %v1947
        %v1949 = vpop.f32.mrb[0].mxu0
        %1950 = vmatprep.mubr.f32.mxu0 %v327
        %1951 = vmatmul.mubr.f32.gmra.mrb[0].mxu0 %v1481
        %v1952 = vpop.f32.mrb[0].mxu0
        %v1953 = vadd.f32 0.0, %v1952
        %v1954 = vpop.f32.mrb[0].mxu0
        %1955 = vmatprep.mubr.f32.mxu0 %v328
        %1956 = vmatmul.mubr.f32.gmra.mrb[0].mxu0 %v1482
        %v1957 = vpop.f32.mrb[0].mxu0
        %v1958 = vadd.f32 0.0, %v1957
        %v1959 = vpop.f32.mrb[0].mxu0
        %1960 = vmatprep.mubr.f32.mxu0 %v329
        %1961 = vmatmul.mubr.f32.gmra.mrb[0].mxu0 %v1483
        %v1962 = vpop.f32.mrb[0].mxu0
        %v1963 = vadd.f32 0.0, %v1962
        %v1964 = vpop.f32.mrb[0].mxu0
        %1965 = vmatprep.mubr.f32.mxu0 %v330
        %1966 = vmatmul.mubr.f32.gmra.mrb[0].mxu0 %v1484
        %v1967 = vpop.f32.mrb[0].mxu0
        %v1968 = vadd.f32 0.0, %v1967
        %v1969 = vpop.f32.mrb[0].mxu0
        %1970 = vmatprep.mubr.f32.mxu0 %v331
        %1971 = vmatmul.mubr.f32.gmra.mrb[0].mxu0 %v1485
        %v1972 = vpop.f32.mrb[0].mxu0
        %v1973 = vadd.f32 0.0, %v1972
        %v1974 = vpop.f32.mrb[0].mxu0
        %1975 = vmatprep.mubr.f32.mxu0 %v332
        %1976 = vmatmul.mubr.f32.gmra.mrb[0].mxu0 %v1486
        %v1977 = vpop.f32.mrb[0].mxu0
        %v1978 = vadd.f32 0.0, %v1977
        %v1979 = vpop.f32.mrb[0].mxu0
        %1980 = vmatprep.mubr.f32.mxu0 %v333
        %1981 = vmatmul.mubr.f32.gmra.mrb[0].mxu0 %v1487
        %v1982 = vpop.f32.mrb[0].mxu0
        %v1983 = vadd.f32 0.0, %v1982
        %v1984 = vpop.f32.mrb[0].mxu0
        %1985 = vmatprep.mubr.f32.mxu0 %v334
        %1986 = vmatmul.mubr.f32.gmra.mrb[0].mxu0 %v1488
        %v1987 = vpop.f32.mrb[0].mxu0
        %v1988 = vadd.f32 0.0, %v1987
        %v1989 = vpop.f32.mrb[0].mxu0
        %1990 = vmatprep.mubr.f32.mxu0 %v335
        %1991 = vmatmul.mubr.f32.gmra.mrb[0].mxu0 %v1489
        %v1992 = vpop.f32.mrb[0].mxu0
        %v1993 = vadd.f32 0.0, %v1992
        %v1994 = vpop.f32.mrb[0].mxu0
        %1995 = vmatprep.mubr.f32.mxu0 %v336
        %1996 = vmatmul.mubr.f32.gmra.mrb[0].mxu0 %v1490
        %v1997 = vpop.f32.mrb[0].mxu0
        %v1998 = vadd.f32 0.0, %v1997
        %v1999 = vpop.f32.mrb[0].mxu0
        %2000 = vmatprep.mubr.f32.mxu0 %v337
        %2001 = vmatmul.mubr.f32.gmra.mrb[0].mxu0 %v1491
        %v2002 = vpop.f32.mrb[0].mxu0
        %v2003 = vadd.f32 0.0, %v2002
        %v2004 = vpop.f32.mrb[0].mxu0
        %2005 = vmatprep.mubr.f32.mxu0 %v338
        %2006 = vmatmul.mubr.f32.gmra.mrb[0].mxu0 %v1492
        %v2007 = vpop.f32.mrb[0].mxu0
        %v2008 = vadd.f32 0.0, %v2007
        %v2009 = vpop.f32.mrb[0].mxu0
        %2010 = vmatprep.mubr.f32.mxu0 %v339
        %2011 = vmatmul.mubr.f32.gmra.mrb[0].mxu0 %v1493
        %v2012 = vpop.f32.mrb[0].mxu0
        %v2013 = vadd.f32 0.0, %v2012
        %v2014 = vpop.f32.mrb[0].mxu0
        %2015 = vmatprep.mubr.f32.mxu0 %v340
        %2016 = vmatmul.mubr.f32.gmra.mrb[0].mxu0 %v1494
        %v2017 = vpop.f32.mrb[0].mxu0
        %v2018 = vadd.f32 0.0, %v2017
        %v2019 = vpop.f32.mrb[0].mxu0
        %2020 = vmatprep.mubr.f32.mxu0 %v341
        %2021 = vmatmul.mubr.f32.gmra.mrb[0].mxu0 %v1495
        %v2022 = vpop.f32.mrb[0].mxu0
        %v2023 = vadd.f32 0.0, %v2022
        %v2024 = vpop.f32.mrb[0].mxu0
        %2025 = vmatprep.mubr.f32.mxu0 %v342
        %2026 = vmatmul.mubr.f32.gmra.mrb[0].mxu0 %v1496
        %v2027 = vpop.f32.mrb[0].mxu0
        %v2028 = vadd.f32 0.0, %v2027
        %v2029 = vpop.f32.mrb[0].mxu0
        %2030 = vmatprep.mubr.f32.mxu0 %v343
        %2031 = vmatmul.mubr.f32.gmra.mrb[0].mxu0 %v1497
        %v2032 = vpop.f32.mrb[0].mxu0
        %v2033 = vadd.f32 0.0, %v2032
        %v2034 = vpop.f32.mrb[0].mxu0
        %2035 = vmatprep.mubr.f32.mxu0 %v344
        %2036 = vmatmul.mubr.f32.gmra.mrb[0].mxu0 %v1498
        %v2037 = vpop.f32.mrb[0].mxu0
        %v2038 = vadd.f32 0.0, %v2037
        %v2039 = vpop.f32.mrb[0].mxu0
        %2040 = vmatprep.mubr.f32.mxu0 %v345
        %2041 = vmatmul.mubr.f32.gmra.mrb[0].mxu0 %v1499
        %v2042 = vpop.f32.mrb[0].mxu0
        %v2043 = vadd.f32 0.0, %v2042
        %v2044 = vpop.f32.mrb[0].mxu0
        %2045 = vmatprep.mubr.f32.mxu0 %v346
        %2046 = vmatmul.mubr.f32.gmra.mrb[0].mxu0 %v1500
        %v2047 = vpop.f32.mrb[0].mxu0
        %v2048 = vadd.f32 0.0, %v2047
        %v2049 = vpop.f32.mrb[0].mxu0
        %2050 = vmatprep.mubr.f32.mxu0 %v347
        %2051 = vmatmul.mubr.f32.gmra.mrb[0].mxu0 %v1501
        %v2052 = vpop.f32.mrb[0].mxu0
        %v2053 = vadd.f32 0.0, %v2052
        %v2054 = vpop.f32.mrb[0].mxu0
        %2055 = vmatprep.mubr.f32.mxu0 %v348
        %2056 = vmatmul.mubr.f32.gmra.mrb[0].mxu0 %v1502
        %v2057 = vpop.f32.mrb[0].mxu0
        %v2058 = vadd.f32 0.0, %v2057
        %v2059 = vpop.f32.mrb[0].mxu0
        %2060 = vmatprep.mubr.f32.mxu0 %v349
        %2061 = vmatmul.mubr.f32.gmra.mrb[0].mxu0 %v1503
        %v2062 = vpop.f32.mrb[0].mxu0
        %v2063 = vadd.f32 0.0, %v2062
        %v2064 = vpop.f32.mrb[0].mxu0
        %2065 = vmatprep.mubr.f32.mxu0 %v350
        %2066 = vmatmul.mubr.f32.gmra.mrb[0].mxu0 %v1504
        %v2067 = vpop.f32.mrb[0].mxu0
        %v2068 = vadd.f32 0.0, %v2067
        %v2069 = vpop.f32.mrb[0].mxu0
        %2070 = vmatprep.mubr.f32.mxu0 %v351
        %2071 = vmatmul.mubr.f32.gmra.mrb[0].mxu0 %v1505
        %v2072 = vpop.f32.mrb[0].mxu0
        %v2073 = vadd.f32 0.0, %v2072
        %v2074 = vpop.f32.mrb[0].mxu0
        %2075 = vmatprep.mubr.f32.mxu0 %v352
        %2076 = vmatmul.mubr.f32.gmra.mrb[0].mxu0 %v1506
        %v2077 = vpop.f32.mrb[0].mxu0
        %v2078 = vadd.f32 0.0, %v2077
        %v2079 = vpop.f32.mrb[0].mxu0
        %2080 = vmatprep.mubr.f32.mxu0 %v353
        %2081 = vmatmul.mubr.f32.gmra.mrb[0].mxu0 %v1507
        %v2082 = vpop.f32.mrb[0].mxu0
        %v2083 = vadd.f32 0.0, %v2082
        %v2084 = vpop.f32.mrb[0].mxu0
        %2085 = vmatprep.mubr.f32.mxu0 %v354
        %2086 = vmatmul.mubr.f32.gmra.mrb[0].mxu0 %v1508
        %v2087 = vpop.f32.mrb[0].mxu0
        %v2088 = vadd.f32 0.0, %v2087
        %v2089 = vpop.f32.mrb[0].mxu0
        %2090 = vmatprep.mubr.f32.mxu0 %v355
        %2091 = vmatmul.mubr.f32.gmra.mrb[0].mxu0 %v1509
        %v2092 = vpop.f32.mrb[0].mxu0
        %v2093 = vadd.f32 0.0, %v2092
        %v2094 = vpop.f32.mrb[0].mxu0
        %2095 = vmatprep.mubr.f32.mxu0 %v356
        %2096 = vmatmul.mubr.f32.gmra.mrb[0].mxu0 %v1510
        %v2097 = vpop.f32.mrb[0].mxu0
        %v2098 = vadd.f32 0.0, %v2097
        %v2099 = vpop.f32.mrb[0].mxu0
        %2100 = vmatprep.mubr.f32.mxu0 %v357
        %2101 = vmatmul.mubr.f32.gmra.mrb[0].mxu0 %v1511
        %v2102 = vpop.f32.mrb[0].mxu0
        %v2103 = vadd.f32 0.0, %v2102
        %v2104 = vpop.f32.mrb[0].mxu0
        %2105 = vmatprep.mubr.f32.mxu0 %v358
        %2106 = vmatmul.mubr.f32.gmra.mrb[0].mxu0 %v1512
        %v2107 = vpop.f32.mrb[0].mxu0
        %v2108 = vadd.f32 0.0, %v2107
        %v2109 = vpop.f32.mrb[0].mxu0
        %2110 = vmatprep.mubr.f32.mxu0 %v359
        %2111 = vmatmul.mubr.f32.gmra.mrb[0].mxu0 %v1513
        %v2112 = vpop.f32.mrb[0].mxu0
        %v2113 = vadd.f32 0.0, %v2112
        %v2114 = vpop.f32.mrb[0].mxu0
        %2115 = vmatprep.mubr.f32.mxu0 %v360
        %2116 = vmatmul.mubr.f32.gmra.mrb[0].mxu0 %v1514
        %v2117 = vpop.f32.mrb[0].mxu0
        %v2118 = vadd.f32 0.0, %v2117
        %v2119 = vpop.f32.mrb[0].mxu0
        %2120 = vmatprep.mubr.f32.mxu0 %v361
        %2121 = vmatmul.mubr.f32.gmra.mrb[0].mxu0 %v1515
        %v2122 = vpop.f32.mrb[0].mxu0
        %v2123 = vadd.f32 0.0, %v2122
        %v2124 = vpop.f32.mrb[0].mxu0
        %2125 = vmatprep.mubr.f32.mxu0 %v362
        %2126 = vmatmul.mubr.f32.gmra.mrb[0].mxu0 %v1516
        %v2127 = vpop.f32.mrb[0].mxu0
        %v2128 = vadd.f32 0.0, %v2127
        %v2129 = vpop.f32.mrb[0].mxu0
        %2130 = vmatprep.mubr.f32.mxu0 %v363
        %2131 = vmatmul.mubr.f32.gmra.mrb[0].mxu0 %v1517
        %v2132 = vpop.f32.mrb[0].mxu0
        %v2133 = vadd.f32 0.0, %v2132
        %v2134 = vpop.f32.mrb[0].mxu0
        %2135 = vmatprep.mubr.f32.mxu0 %v364
        %2136 = vmatmul.mubr.f32.gmra.mrb[0].mxu0 %v1518
        %v2137 = vpop.f32.mrb[0].mxu0
        %v2138 = vadd.f32 0.0, %v2137
        %v2139 = vpop.f32.mrb[0].mxu0
        %2140 = vmatprep.mubr.f32.mxu0 %v365
        %2141 = vmatmul.mubr.f32.gmra.mrb[0].mxu0 %v1519
        %v2142 = vpop.f32.mrb[0].mxu0
        %v2143 = vadd.f32 0.0, %v2142
        %v2144 = vpop.f32.mrb[0].mxu0
        %2145 = vdwg.mxu0
        %2146 = vmatprep.subr.mxu0 0.0
        %2147 = vmatpush1.msra.mxu0 %v1745
        %2148 = vmatprep.subr.mxu0 0.0
        %2149 = vmatpush1.msra.mxu0 %v1746
        %2150 = vmatprep.subr.mxu0 0.0
        %2151 = vmatpush1.msra.mxu0 %v1747
        %2152 = vmatprep.subr.mxu0 0.0
        %2153 = vmatpush1.msra.mxu0 %v1748
        %2154 = vmatprep.subr.mxu0 0.0
        %2155 = vmatpush1.msra.mxu0 %v1749
        %2156 = vmatprep.subr.mxu0 0.0
        %2157 = vmatpush1.msra.mxu0 %v1750
        %2158 = vmatprep.subr.mxu0 0.0
        %2159 = vmatpush1.msra.mxu0 %v1751
        %2160 = vmatprep.subr.mxu0 0.0
        %2161 = vmatpush1.msra.mxu0 %v1752
        %2162 = vmatprep.subr.mxu0 0.0
        %2163 = vmatpush1.msra.mxu0 %v1753
        %2164 = vmatprep.subr.mxu0 0.0
        %2165 = vmatpush1.msra.mxu0 %v1754
        %2166 = vmatprep.subr.mxu0 0.0
        %2167 = vmatpush1.msra.mxu0 %v1755
        %2168 = vmatprep.subr.mxu0 0.0
        %2169 = vmatpush1.msra.mxu0 %v1756
        %2170 = vmatprep.subr.mxu0 0.0
        %2171 = vmatpush1.msra.mxu0 %v1757
        %2172 = vmatprep.subr.mxu0 0.0
        %2173 = vmatpush1.msra.mxu0 %v1758
        %2174 = vmatprep.subr.mxu0 0.0
        %2175 = vmatpush1.msra.mxu0 %v1759
        %2176 = vmatprep.subr.mxu0 0.0
        %2177 = vmatpush1.msra.mxu0 %v1760
        %2178 = vmatprep.subr.mxu0 0.0
        %2179 = vmatpush1.msra.mxu0 0.0
        %2180 = vmatprep.subr.mxu0 0.0
        %2181 = vmatpush1.msra.mxu0 0.0
        %2182 = vmatprep.subr.mxu0 0.0
        %2183 = vmatpush1.msra.mxu0 0.0
        %2184 = vmatprep.subr.mxu0 0.0
        %2185 = vmatpush1.msra.mxu0 0.0
        %2186 = vmatprep.subr.mxu0 0.0
        %2187 = vmatpush1.msra.mxu0 0.0
        %2188 = vmatprep.subr.mxu0 0.0
        %2189 = vmatpush1.msra.mxu0 0.0
        %2190 = vmatprep.subr.mxu0 0.0
        %2191 = vmatpush1.msra.mxu0 0.0
        %2192 = vmatprep.subr.mxu0 0.0
        %2193 = vmatpush1.msra.mxu0 0.0
        %2194 = vmatprep.subr.mxu0 0.0
        %2195 = vmatpush1.msra.mxu0 0.0
        %2196 = vmatprep.subr.mxu0 0.0
        %2197 = vmatpush1.msra.mxu0 0.0
        %2198 = vmatprep.subr.mxu0 0.0
        %2199 = vmatpush1.msra.mxu0 0.0
        %2200 = vmatprep.subr.mxu0 0.0
        %2201 = vmatpush1.msra.mxu0 0.0
        %2202 = vmatprep.subr.mxu0 0.0
        %2203 = vmatpush1.msra.mxu0 0.0
        %2204 = vmatprep.subr.mxu0 0.0
        %2205 = vmatpush1.msra.mxu0 0.0
        %2206 = vmatprep.subr.mxu0 0.0
        %2207 = vmatpush1.msra.mxu0 0.0
        %2208 = vmatprep.subr.mxu0 0.0
        %2209 = vmatpush1.msra.mxu0 0.0
        %2210 = vmatprep.mubr.f32.mxu0 0.0
        %2211 = vmatmul.mubr.f32.gmra.mrb[0].mxu0 %v1649
        %v2212 = vpop.f32.mrb[0].mxu0
        %v2213 = vadd.f32 %v1828, %v2212
        %v2214 = vpop.f32.mrb[0].mxu0
        %2215 = vmatprep.mubr.f32.mxu0 0.0
        %2216 = vmatmul.mubr.f32.gmra.mrb[0].mxu0 %v1650
        %v2217 = vpop.f32.mrb[0].mxu0
        %v2218 = vadd.f32 %v1833, %v2217
        %v2219 = vpop.f32.mrb[0].mxu0
        %2220 = vmatprep.mubr.f32.mxu0 0.0
        %2221 = vmatmul.mubr.f32.gmra.mrb[0].mxu0 %v1651
        %v2222 = vpop.f32.mrb[0].mxu0
        %v2223 = vadd.f32 %v1838, %v2222
        %v2224 = vpop.f32.mrb[0].mxu0
        %2225 = vmatprep.mubr.f32.mxu0 0.0
        %2226 = vmatmul.mubr.f32.gmra.mrb[0].mxu0 %v1652
        %v2227 = vpop.f32.mrb[0].mxu0
        %v2228 = vadd.f32 %v1843, %v2227
        %v2229 = vpop.f32.mrb[0].mxu0
        %2230 = vmatprep.mubr.f32.mxu0 0.0
        %2231 = vmatmul.mubr.f32.gmra.mrb[0].mxu0 %v1653
        %v2232 = vpop.f32.mrb[0].mxu0
        %v2233 = vadd.f32 %v1848, %v2232
        %v2234 = vpop.f32.mrb[0].mxu0
        %2235 = vmatprep.mubr.f32.mxu0 0.0
        %2236 = vmatmul.mubr.f32.gmra.mrb[0].mxu0 %v1654
        %v2237 = vpop.f32.mrb[0].mxu0
        %v2238 = vadd.f32 %v1853, %v2237
        %v2239 = vpop.f32.mrb[0].mxu0
        %2240 = vmatprep.mubr.f32.mxu0 0.0
        %2241 = vmatmul.mubr.f32.gmra.mrb[0].mxu0 %v1655
        %v2242 = vpop.f32.mrb[0].mxu0
        %v2243 = vadd.f32 %v1858, %v2242
        %v2244 = vpop.f32.mrb[0].mxu0
        %2245 = vmatprep.mubr.f32.mxu0 0.0
        %2246 = vmatmul.mubr.f32.gmra.mrb[0].mxu0 %v1656
        %v2247 = vpop.f32.mrb[0].mxu0
        %v2248 = vadd.f32 %v1863, %v2247
        %v2249 = vpop.f32.mrb[0].mxu0
        %2250 = vmatprep.mubr.f32.mxu0 0.0
        %2251 = vmatmul.mubr.f32.gmra.mrb[0].mxu0 %v1657
        %v2252 = vpop.f32.mrb[0].mxu0
        %v2253 = vadd.f32 %v1868, %v2252
        %v2254 = vpop.f32.mrb[0].mxu0
        %2255 = vmatprep.mubr.f32.mxu0 0.0
        %2256 = vmatmul.mubr.f32.gmra.mrb[0].mxu0 %v1658
        %v2257 = vpop.f32.mrb[0].mxu0
        %v2258 = vadd.f32 %v1873, %v2257
        %v2259 = vpop.f32.mrb[0].mxu0
        %2260 = vmatprep.mubr.f32.mxu0 0.0
        %2261 = vmatmul.mubr.f32.gmra.mrb[0].mxu0 %v1659
        %v2262 = vpop.f32.mrb[0].mxu0
        %v2263 = vadd.f32 %v1878, %v2262
        %v2264 = vpop.f32.mrb[0].mxu0
        %2265 = vmatprep.mubr.f32.mxu0 0.0
        %2266 = vmatmul.mubr.f32.gmra.mrb[0].mxu0 %v1660
        %v2267 = vpop.f32.mrb[0].mxu0
        %v2268 = vadd.f32 %v1883, %v2267
        %v2269 = vpop.f32.mrb[0].mxu0
        %2270 = vmatprep.mubr.f32.mxu0 0.0
        %2271 = vmatmul.mubr.f32.gmra.mrb[0].mxu0 %v1661
        %v2272 = vpop.f32.mrb[0].mxu0
        %v2273 = vadd.f32 %v1888, %v2272
        %v2274 = vpop.f32.mrb[0].mxu0
        %2275 = vmatprep.mubr.f32.mxu0 0.0
        %2276 = vmatmul.mubr.f32.gmra.mrb[0].mxu0 %v1662
        %v2277 = vpop.f32.mrb[0].mxu0
        %v2278 = vadd.f32 %v1893, %v2277
        %v2279 = vpop.f32.mrb[0].mxu0
        %2280 = vmatprep.mubr.f32.mxu0 0.0
        %2281 = vmatmul.mubr.f32.gmra.mrb[0].mxu0 %v1663
        %v2282 = vpop.f32.mrb[0].mxu0
        %v2283 = vadd.f32 %v1898, %v2282
        %v2284 = vpop.f32.mrb[0].mxu0
        %2285 = vmatprep.mubr.f32.mxu0 0.0
        %2286 = vmatmul.mubr.f32.gmra.mrb[0].mxu0 %v1664
        %v2287 = vpop.f32.mrb[0].mxu0
        %v2288 = vadd.f32 %v1903, %v2287
        %v2289 = vpop.f32.mrb[0].mxu0
        %2290 = vmatprep.mubr.f32.mxu0 0.0
        %2291 = vmatmul.mubr.f32.gmra.mrb[0].mxu0 %v1665
        %v2292 = vpop.f32.mrb[0].mxu0
        %v2293 = vadd.f32 %v1908, %v2292
        %v2294 = vpop.f32.mrb[0].mxu0
        %2295 = vmatprep.mubr.f32.mxu0 0.0
        %2296 = vmatmul.mubr.f32.gmra.mrb[0].mxu0 %v1666
        %v2297 = vpop.f32.mrb[0].mxu0
        %v2298 = vadd.f32 %v1913, %v2297
        %v2299 = vpop.f32.mrb[0].mxu0
        %2300 = vmatprep.mubr.f32.mxu0 0.0
        %2301 = vmatmul.mubr.f32.gmra.mrb[0].mxu0 %v1667
        %v2302 = vpop.f32.mrb[0].mxu0
        %v2303 = vadd.f32 %v1918, %v2302
        %v2304 = vpop.f32.mrb[0].mxu0
        %2305 = vmatprep.mubr.f32.mxu0 0.0
        %2306 = vmatmul.mubr.f32.gmra.mrb[0].mxu0 %v1668
        %v2307 = vpop.f32.mrb[0].mxu0
        %v2308 = vadd.f32 %v1923, %v2307
        %v2309 = vpop.f32.mrb[0].mxu0
        %2310 = vmatprep.mubr.f32.mxu0 0.0
        %2311 = vmatmul.mubr.f32.gmra.mrb[0].mxu0 %v1669
        %v2312 = vpop.f32.mrb[0].mxu0
        %v2313 = vadd.f32 %v1928, %v2312
        %v2314 = vpop.f32.mrb[0].mxu0
        %2315 = vmatprep.mubr.f32.mxu0 0.0
        %2316 = vmatmul.mubr.f32.gmra.mrb[0].mxu0 %v1670
        %v2317 = vpop.f32.mrb[0].mxu0
        %v2318 = vadd.f32 %v1933, %v2317
        %v2319 = vpop.f32.mrb[0].mxu0
        %2320 = vmatprep.mubr.f32.mxu0 0.0
        %2321 = vmatmul.mubr.f32.gmra.mrb[0].mxu0 %v1671
        %v2322 = vpop.f32.mrb[0].mxu0
        %v2323 = vadd.f32 %v1938, %v2322
        %v2324 = vpop.f32.mrb[0].mxu0
        %2325 = vmatprep.mubr.f32.mxu0 0.0
        %2326 = vmatmul.mubr.f32.gmra.mrb[0].mxu0 %v1672
        %v2327 = vpop.f32.mrb[0].mxu0
        %v2328 = vadd.f32 %v1943, %v2327
        %v2329 = vpop.f32.mrb[0].mxu0
        %2330 = vmatprep.mubr.f32.mxu0 0.0
        %2331 = vmatmul.mubr.f32.gmra.mrb[0].mxu0 %v1673
        %v2332 = vpop.f32.mrb[0].mxu0
        %v2333 = vadd.f32 %v1948, %v2332
        %v2334 = vpop.f32.mrb[0].mxu0
        %2335 = vmatprep.mubr.f32.mxu0 0.0
        %2336 = vmatmul.mubr.f32.gmra.mrb[0].mxu0 %v1674
        %v2337 = vpop.f32.mrb[0].mxu0
        %v2338 = vadd.f32 %v1953, %v2337
        %v2339 = vpop.f32.mrb[0].mxu0
        %2340 = vmatprep.mubr.f32.mxu0 0.0
        %2341 = vmatmul.mubr.f32.gmra.mrb[0].mxu0 %v1675
        %v2342 = vpop.f32.mrb[0].mxu0
        %v2343 = vadd.f32 %v1958, %v2342
        %v2344 = vpop.f32.mrb[0].mxu0
        %2345 = vmatprep.mubr.f32.mxu0 0.0
        %2346 = vmatmul.mubr.f32.gmra.mrb[0].mxu0 %v1676
        %v2347 = vpop.f32.mrb[0].mxu0
        %v2348 = vadd.f32 %v1963, %v2347
        %v2349 = vpop.f32.mrb[0].mxu0
        %2350 = vmatprep.mubr.f32.mxu0 0.0
        %2351 = vmatmul.mubr.f32.gmra.mrb[0].mxu0 %v1677
        %v2352 = vpop.f32.mrb[0].mxu0
        %v2353 = vadd.f32 %v1968, %v2352
        %v2354 = vpop.f32.mrb[0].mxu0
        %2355 = vmatprep.mubr.f32.mxu0 0.0
        %2356 = vmatmul.mubr.f32.gmra.mrb[0].mxu0 %v1678
        %v2357 = vpop.f32.mrb[0].mxu0
        %v2358 = vadd.f32 %v1973, %v2357
        %v2359 = vpop.f32.mrb[0].mxu0
        %2360 = vmatprep.mubr.f32.mxu0 0.0
        %2361 = vmatmul.mubr.f32.gmra.mrb[0].mxu0 %v1679
        %v2362 = vpop.f32.mrb[0].mxu0
        %v2363 = vadd.f32 %v1978, %v2362
        %v2364 = vpop.f32.mrb[0].mxu0
        %2365 = vmatprep.mubr.f32.mxu0 0.0
        %2366 = vmatmul.mubr.f32.gmra.mrb[0].mxu0 %v1680
        %v2367 = vpop.f32.mrb[0].mxu0
        %v2368 = vadd.f32 %v1983, %v2367
        %v2369 = vpop.f32.mrb[0].mxu0
        %2370 = vmatprep.mubr.f32.mxu0 0.0
        %2371 = vmatmul.mubr.f32.gmra.mrb[0].mxu0 %v1681
        %v2372 = vpop.f32.mrb[0].mxu0
        %v2373 = vadd.f32 %v1988, %v2372
        %v2374 = vpop.f32.mrb[0].mxu0
        %2375 = vmatprep.mubr.f32.mxu0 0.0
        %2376 = vmatmul.mubr.f32.gmra.mrb[0].mxu0 %v1682
        %v2377 = vpop.f32.mrb[0].mxu0
        %v2378 = vadd.f32 %v1993, %v2377
        %v2379 = vpop.f32.mrb[0].mxu0
        %2380 = vmatprep.mubr.f32.mxu0 0.0
        %2381 = vmatmul.mubr.f32.gmra.mrb[0].mxu0 %v1683
        %v2382 = vpop.f32.mrb[0].mxu0
        %v2383 = vadd.f32 %v1998, %v2382
        %v2384 = vpop.f32.mrb[0].mxu0
        %2385 = vmatprep.mubr.f32.mxu0 0.0
        %2386 = vmatmul.mubr.f32.gmra.mrb[0].mxu0 %v1684
        %v2387 = vpop.f32.mrb[0].mxu0
        %v2388 = vadd.f32 %v2003, %v2387
        %v2389 = vpop.f32.mrb[0].mxu0
        %2390 = vmatprep.mubr.f32.mxu0 0.0
        %2391 = vmatmul.mubr.f32.gmra.mrb[0].mxu0 %v1685
        %v2392 = vpop.f32.mrb[0].mxu0
        %v2393 = vadd.f32 %v2008, %v2392
        %v2394 = vpop.f32.mrb[0].mxu0
        %2395 = vmatprep.mubr.f32.mxu0 0.0
        %2396 = vmatmul.mubr.f32.gmra.mrb[0].mxu0 %v1686
        %v2397 = vpop.f32.mrb[0].mxu0
        %v2398 = vadd.f32 %v2013, %v2397
        %v2399 = vpop.f32.mrb[0].mxu0
        %2400 = vmatprep.mubr.f32.mxu0 0.0
        %2401 = vmatmul.mubr.f32.gmra.mrb[0].mxu0 %v1687
        %v2402 = vpop.f32.mrb[0].mxu0
        %v2403 = vadd.f32 %v2018, %v2402
        %v2404 = vpop.f32.mrb[0].mxu0
        %2405 = vmatprep.mubr.f32.mxu0 0.0
        %2406 = vmatmul.mubr.f32.gmra.mrb[0].mxu0 %v1688
        %v2407 = vpop.f32.mrb[0].mxu0
        %v2408 = vadd.f32 %v2023, %v2407
        %v2409 = vpop.f32.mrb[0].mxu0
        %2410 = vmatprep.mubr.f32.mxu0 0.0
        %2411 = vmatmul.mubr.f32.gmra.mrb[0].mxu0 %v1689
        %v2412 = vpop.f32.mrb[0].mxu0
        %v2413 = vadd.f32 %v2028, %v2412
        %v2414 = vpop.f32.mrb[0].mxu0
        %2415 = vmatprep.mubr.f32.mxu0 0.0
        %2416 = vmatmul.mubr.f32.gmra.mrb[0].mxu0 %v1690
        %v2417 = vpop.f32.mrb[0].mxu0
        %v2418 = vadd.f32 %v2033, %v2417
        %v2419 = vpop.f32.mrb[0].mxu0
        %2420 = vmatprep.mubr.f32.mxu0 0.0
        %2421 = vmatmul.mubr.f32.gmra.mrb[0].mxu0 %v1691
        %v2422 = vpop.f32.mrb[0].mxu0
        %v2423 = vadd.f32 %v2038, %v2422
        %v2424 = vpop.f32.mrb[0].mxu0
        %2425 = vmatprep.mubr.f32.mxu0 0.0
        %2426 = vmatmul.mubr.f32.gmra.mrb[0].mxu0 %v1692
        %v2427 = vpop.f32.mrb[0].mxu0
        %v2428 = vadd.f32 %v2043, %v2427
        %v2429 = vpop.f32.mrb[0].mxu0
        %2430 = vmatprep.mubr.f32.mxu0 0.0
        %2431 = vmatmul.mubr.f32.gmra.mrb[0].mxu0 %v1693
        %v2432 = vpop.f32.mrb[0].mxu0
        %v2433 = vadd.f32 %v2048, %v2432
        %v2434 = vpop.f32.mrb[0].mxu0
        %2435 = vmatprep.mubr.f32.mxu0 0.0
        %2436 = vmatmul.mubr.f32.gmra.mrb[0].mxu0 %v1694
        %v2437 = vpop.f32.mrb[0].mxu0
        %v2438 = vadd.f32 %v2053, %v2437
        %v2439 = vpop.f32.mrb[0].mxu0
        %2440 = vmatprep.mubr.f32.mxu0 0.0
        %2441 = vmatmul.mubr.f32.gmra.mrb[0].mxu0 %v1695
        %v2442 = vpop.f32.mrb[0].mxu0
        %v2443 = vadd.f32 %v2058, %v2442
        %v2444 = vpop.f32.mrb[0].mxu0
        %2445 = vmatprep.mubr.f32.mxu0 0.0
        %2446 = vmatmul.mubr.f32.gmra.mrb[0].mxu0 %v1696
        %v2447 = vpop.f32.mrb[0].mxu0
        %v2448 = vadd.f32 %v2063, %v2447
        %v2449 = vpop.f32.mrb[0].mxu0
        %2450 = vmatprep.mubr.f32.mxu0 0.0
        %2451 = vmatmul.mubr.f32.gmra.mrb[0].mxu0 %v1697
        %v2452 = vpop.f32.mrb[0].mxu0
        %v2453 = vadd.f32 %v2068, %v2452
        %v2454 = vpop.f32.mrb[0].mxu0
        %2455 = vmatprep.mubr.f32.mxu0 0.0
        %2456 = vmatmul.mubr.f32.gmra.mrb[0].mxu0 %v1698
        %v2457 = vpop.f32.mrb[0].mxu0
        %v2458 = vadd.f32 %v2073, %v2457
        %v2459 = vpop.f32.mrb[0].mxu0
        %2460 = vmatprep.mubr.f32.mxu0 0.0
        %2461 = vmatmul.mubr.f32.gmra.mrb[0].mxu0 %v1699
        %v2462 = vpop.f32.mrb[0].mxu0
        %v2463 = vadd.f32 %v2078, %v2462
        %v2464 = vpop.f32.mrb[0].mxu0
        %2465 = vmatprep.mubr.f32.mxu0 0.0
        %2466 = vmatmul.mubr.f32.gmra.mrb[0].mxu0 %v1700
        %v2467 = vpop.f32.mrb[0].mxu0
        %v2468 = vadd.f32 %v2083, %v2467
        %v2469 = vpop.f32.mrb[0].mxu0
        %2470 = vmatprep.mubr.f32.mxu0 0.0
        %2471 = vmatmul.mubr.f32.gmra.mrb[0].mxu0 %v1701
        %v2472 = vpop.f32.mrb[0].mxu0
        %v2473 = vadd.f32 %v2088, %v2472
        %v2474 = vpop.f32.mrb[0].mxu0
        %2475 = vmatprep.mubr.f32.mxu0 0.0
        %2476 = vmatmul.mubr.f32.gmra.mrb[0].mxu0 %v1702
        %v2477 = vpop.f32.mrb[0].mxu0
        %v2478 = vadd.f32 %v2093, %v2477
        %v2479 = vpop.f32.mrb[0].mxu0
        %2480 = vmatprep.mubr.f32.mxu0 0.0
        %2481 = vmatmul.mubr.f32.gmra.mrb[0].mxu0 %v1703
        %v2482 = vpop.f32.mrb[0].mxu0
        %v2483 = vadd.f32 %v2098, %v2482
        %v2484 = vpop.f32.mrb[0].mxu0
        %2485 = vmatprep.mubr.f32.mxu0 0.0
        %2486 = vmatmul.mubr.f32.gmra.mrb[0].mxu0 %v1704
        %v2487 = vpop.f32.mrb[0].mxu0
        %v2488 = vadd.f32 %v2103, %v2487
        %v2489 = vpop.f32.mrb[0].mxu0
        %2490 = vmatprep.mubr.f32.mxu0 0.0
        %2491 = vmatmul.mubr.f32.gmra.mrb[0].mxu0 %v1705
        %v2492 = vpop.f32.mrb[0].mxu0
        %v2493 = vadd.f32 %v2108, %v2492
        %v2494 = vpop.f32.mrb[0].mxu0
        %2495 = vmatprep.mubr.f32.mxu0 0.0
        %2496 = vmatmul.mubr.f32.gmra.mrb[0].mxu0 %v1706
        %v2497 = vpop.f32.mrb[0].mxu0
        %v2498 = vadd.f32 %v2113, %v2497
        %v2499 = vpop.f32.mrb[0].mxu0
        %2500 = vmatprep.mubr.f32.mxu0 0.0
        %2501 = vmatmul.mubr.f32.gmra.mrb[0].mxu0 %v1707
        %v2502 = vpop.f32.mrb[0].mxu0
        %v2503 = vadd.f32 %v2118, %v2502
        %v2504 = vpop.f32.mrb[0].mxu0
        %2505 = vmatprep.mubr.f32.mxu0 0.0
        %2506 = vmatmul.mubr.f32.gmra.mrb[0].mxu0 %v1708
        %v2507 = vpop.f32.mrb[0].mxu0
        %v2508 = vadd.f32 %v2123, %v2507
        %v2509 = vpop.f32.mrb[0].mxu0
        %2510 = vmatprep.mubr.f32.mxu0 0.0
        %2511 = vmatmul.mubr.f32.gmra.mrb[0].mxu0 %v1709
        %v2512 = vpop.f32.mrb[0].mxu0
        %v2513 = vadd.f32 %v2128, %v2512
        %v2514 = vpop.f32.mrb[0].mxu0
        %2515 = vmatprep.mubr.f32.mxu0 0.0
        %2516 = vmatmul.mubr.f32.gmra.mrb[0].mxu0 %v1710
        %v2517 = vpop.f32.mrb[0].mxu0
        %v2518 = vadd.f32 %v2133, %v2517
        %v2519 = vpop.f32.mrb[0].mxu0
        %2520 = vmatprep.mubr.f32.mxu0 0.0
        %2521 = vmatmul.mubr.f32.gmra.mrb[0].mxu0 %v1711
        %v2522 = vpop.f32.mrb[0].mxu0
        %v2523 = vadd.f32 %v2138, %v2522
        %v2524 = vpop.f32.mrb[0].mxu0
        %2525 = vmatprep.mubr.f32.mxu0 0.0
        %2526 = vmatmul.mubr.f32.gmra.mrb[0].mxu0 %v1712
        %v2527 = vpop.f32.mrb[0].mxu0
        %v2528 = vadd.f32 %v2143, %v2527
        %v2529 = vpop.f32.mrb[0].mxu0
        %2530 = vdwg.mxu0
        %v2531 = vld [vmem:[%s2] sm:$0x1]
        %v2533 = vlaneseq
        %v2534 = vshrl.u32 %v2533, 7
        %v2535 = vsub.s32 0, %v2534
        %v2536 = vrot.slane %v2531, %v2535
        %v2538 = vmul.f32 %v2213, %v2536
        %v2539 = vmul.f32 %v2218, %v2536
        %v2540 = vmul.f32 %v2223, %v2536
        %v2541 = vmul.f32 %v2228, %v2536
        %v2542 = vmul.f32 %v2233, %v2536
        %v2543 = vmul.f32 %v2238, %v2536
        %v2544 = vmul.f32 %v2243, %v2536
        %v2545 = vmul.f32 %v2248, %v2536
        %v2546 = vmul.f32 %v2253, %v2536
        %v2547 = vmul.f32 %v2258, %v2536
        %v2548 = vmul.f32 %v2263, %v2536
        %v2549 = vmul.f32 %v2268, %v2536
        %v2550 = vmul.f32 %v2273, %v2536
        %v2551 = vmul.f32 %v2278, %v2536
        %v2552 = vmul.f32 %v2283, %v2536
        %v2553 = vmul.f32 %v2288, %v2536
        %v2554 = vmul.f32 %v2293, %v2536
        %v2555 = vmul.f32 %v2298, %v2536
        %v2556 = vmul.f32 %v2303, %v2536
        %v2557 = vmul.f32 %v2308, %v2536
        %v2558 = vmul.f32 %v2313, %v2536
        %v2559 = vmul.f32 %v2318, %v2536
        %v2560 = vmul.f32 %v2323, %v2536
        %v2561 = vmul.f32 %v2328, %v2536
        %v2562 = vmul.f32 %v2333, %v2536
        %v2563 = vmul.f32 %v2338, %v2536
        %v2564 = vmul.f32 %v2343, %v2536
        %v2565 = vmul.f32 %v2348, %v2536
        %v2566 = vmul.f32 %v2353, %v2536
        %v2567 = vmul.f32 %v2358, %v2536
        %v2568 = vmul.f32 %v2363, %v2536
        %v2569 = vmul.f32 %v2368, %v2536
        %v2570 = vmul.f32 %v2373, %v2536
        %v2571 = vmul.f32 %v2378, %v2536
        %v2572 = vmul.f32 %v2383, %v2536
        %v2573 = vmul.f32 %v2388, %v2536
        %v2574 = vmul.f32 %v2393, %v2536
        %v2575 = vmul.f32 %v2398, %v2536
        %v2576 = vmul.f32 %v2403, %v2536
        %v2577 = vmul.f32 %v2408, %v2536
        %v2578 = vmul.f32 %v2413, %v2536
        %v2579 = vmul.f32 %v2418, %v2536
        %v2580 = vmul.f32 %v2423, %v2536
        %v2581 = vmul.f32 %v2428, %v2536
        %v2582 = vmul.f32 %v2433, %v2536
        %v2583 = vmul.f32 %v2438, %v2536
        %v2584 = vmul.f32 %v2443, %v2536
        %v2585 = vmul.f32 %v2448, %v2536
        %v2586 = vmul.f32 %v2453, %v2536
        %v2587 = vmul.f32 %v2458, %v2536
        %v2588 = vmul.f32 %v2463, %v2536
        %v2589 = vmul.f32 %v2468, %v2536
        %v2590 = vmul.f32 %v2473, %v2536
        %v2591 = vmul.f32 %v2478, %v2536
        %v2592 = vmul.f32 %v2483, %v2536
        %v2593 = vmul.f32 %v2488, %v2536
        %v2594 = vmul.f32 %v2493, %v2536
        %v2595 = vmul.f32 %v2498, %v2536
        %v2596 = vmul.f32 %v2503, %v2536
        %v2597 = vmul.f32 %v2508, %v2536
        %v2598 = vmul.f32 %v2513, %v2536
        %v2599 = vmul.f32 %v2518, %v2536
        %v2600 = vmul.f32 %v2523, %v2536
        %v2601 = vmul.f32 %v2528, %v2536
        %v2602 = vld [vmem:[%s3] sm:$0x1]
        %v2604 = vlaneseq
        %v2605 = vshrl.u32 %v2604, 7
        %v2606 = vsub.s32 0, %v2605
        %v2607 = vrot.slane %v2602, %v2606
        %v2609 = vadd.f32 %v2538, %v2607
        %v2610 = vadd.f32 %v2539, %v2607
        %v2611 = vadd.f32 %v2540, %v2607
        %v2612 = vadd.f32 %v2541, %v2607
        %v2613 = vadd.f32 %v2542, %v2607
        %v2614 = vadd.f32 %v2543, %v2607
        %v2615 = vadd.f32 %v2544, %v2607
        %v2616 = vadd.f32 %v2545, %v2607
        %v2617 = vadd.f32 %v2546, %v2607
        %v2618 = vadd.f32 %v2547, %v2607
        %v2619 = vadd.f32 %v2548, %v2607
        %v2620 = vadd.f32 %v2549, %v2607
        %v2621 = vadd.f32 %v2550, %v2607
        %v2622 = vadd.f32 %v2551, %v2607
        %v2623 = vadd.f32 %v2552, %v2607
        %v2624 = vadd.f32 %v2553, %v2607
        %v2625 = vadd.f32 %v2554, %v2607
        %v2626 = vadd.f32 %v2555, %v2607
        %v2627 = vadd.f32 %v2556, %v2607
        %v2628 = vadd.f32 %v2557, %v2607
        %v2629 = vadd.f32 %v2558, %v2607
        %v2630 = vadd.f32 %v2559, %v2607
        %v2631 = vadd.f32 %v2560, %v2607
        %v2632 = vadd.f32 %v2561, %v2607
        %v2633 = vadd.f32 %v2562, %v2607
        %v2634 = vadd.f32 %v2563, %v2607
        %v2635 = vadd.f32 %v2564, %v2607
        %v2636 = vadd.f32 %v2565, %v2607
        %v2637 = vadd.f32 %v2566, %v2607
        %v2638 = vadd.f32 %v2567, %v2607
        %v2639 = vadd.f32 %v2568, %v2607
        %v2640 = vadd.f32 %v2569, %v2607
        %v2641 = vadd.f32 %v2570, %v2607
        %v2642 = vadd.f32 %v2571, %v2607
        %v2643 = vadd.f32 %v2572, %v2607
        %v2644 = vadd.f32 %v2573, %v2607
        %v2645 = vadd.f32 %v2574, %v2607
        %v2646 = vadd.f32 %v2575, %v2607
        %v2647 = vadd.f32 %v2576, %v2607
        %v2648 = vadd.f32 %v2577, %v2607
        %v2649 = vadd.f32 %v2578, %v2607
        %v2650 = vadd.f32 %v2579, %v2607
        %v2651 = vadd.f32 %v2580, %v2607
        %v2652 = vadd.f32 %v2581, %v2607
        %v2653 = vadd.f32 %v2582, %v2607
        %v2654 = vadd.f32 %v2583, %v2607
        %v2655 = vadd.f32 %v2584, %v2607
        %v2656 = vadd.f32 %v2585, %v2607
        %v2657 = vadd.f32 %v2586, %v2607
        %v2658 = vadd.f32 %v2587, %v2607
        %v2659 = vadd.f32 %v2588, %v2607
        %v2660 = vadd.f32 %v2589, %v2607
        %v2661 = vadd.f32 %v2590, %v2607
        %v2662 = vadd.f32 %v2591, %v2607
        %v2663 = vadd.f32 %v2592, %v2607
        %v2664 = vadd.f32 %v2593, %v2607
        %v2665 = vadd.f32 %v2594, %v2607
        %v2666 = vadd.f32 %v2595, %v2607
        %v2667 = vadd.f32 %v2596, %v2607
        %v2668 = vadd.f32 %v2597, %v2607
        %v2669 = vadd.f32 %v2598, %v2607
        %v2670 = vadd.f32 %v2599, %v2607
        %v2671 = vadd.f32 %v2600, %v2607
        %v2672 = vadd.f32 %v2601, %v2607
        %v2673 = vmax.f32 %v2609, 0.0
        %v2674 = vmax.f32 %v2610, 0.0
        %v2675 = vmax.f32 %v2611, 0.0
        %v2676 = vmax.f32 %v2612, 0.0
        %v2677 = vmax.f32 %v2613, 0.0
        %v2678 = vmax.f32 %v2614, 0.0
        %v2679 = vmax.f32 %v2615, 0.0
        %v2680 = vmax.f32 %v2616, 0.0
        %v2681 = vmax.f32 %v2617, 0.0
        %v2682 = vmax.f32 %v2618, 0.0
        %v2683 = vmax.f32 %v2619, 0.0
        %v2684 = vmax.f32 %v2620, 0.0
        %v2685 = vmax.f32 %v2621, 0.0
        %v2686 = vmax.f32 %v2622, 0.0
        %v2687 = vmax.f32 %v2623, 0.0
        %v2688 = vmax.f32 %v2624, 0.0
        %v2689 = vmax.f32 %v2625, 0.0
        %v2690 = vmax.f32 %v2626, 0.0
        %v2691 = vmax.f32 %v2627, 0.0
        %v2692 = vmax.f32 %v2628, 0.0
        %v2693 = vmax.f32 %v2629, 0.0
        %v2694 = vmax.f32 %v2630, 0.0
        %v2695 = vmax.f32 %v2631, 0.0
        %v2696 = vmax.f32 %v2632, 0.0
        %v2697 = vmax.f32 %v2633, 0.0
        %v2698 = vmax.f32 %v2634, 0.0
        %v2699 = vmax.f32 %v2635, 0.0
        %v2700 = vmax.f32 %v2636, 0.0
        %v2701 = vmax.f32 %v2637, 0.0
        %v2702 = vmax.f32 %v2638, 0.0
        %v2703 = vmax.f32 %v2639, 0.0
        %v2704 = vmax.f32 %v2640, 0.0
        %v2705 = vmax.f32 %v2641, 0.0
        %v2706 = vmax.f32 %v2642, 0.0
        %v2707 = vmax.f32 %v2643, 0.0
        %v2708 = vmax.f32 %v2644, 0.0
        %v2709 = vmax.f32 %v2645, 0.0
        %v2710 = vmax.f32 %v2646, 0.0
        %v2711 = vmax.f32 %v2647, 0.0
        %v2712 = vmax.f32 %v2648, 0.0
        %v2713 = vmax.f32 %v2649, 0.0
        %v2714 = vmax.f32 %v2650, 0.0
        %v2715 = vmax.f32 %v2651, 0.0
        %v2716 = vmax.f32 %v2652, 0.0
        %v2717 = vmax.f32 %v2653, 0.0
        %v2718 = vmax.f32 %v2654, 0.0
        %v2719 = vmax.f32 %v2655, 0.0
        %v2720 = vmax.f32 %v2656, 0.0
        %v2721 = vmax.f32 %v2657, 0.0
        %v2722 = vmax.f32 %v2658, 0.0
        %v2723 = vmax.f32 %v2659, 0.0
        %v2724 = vmax.f32 %v2660, 0.0
        %v2725 = vmax.f32 %v2661, 0.0
        %v2726 = vmax.f32 %v2662, 0.0
        %v2727 = vmax.f32 %v2663, 0.0
        %v2728 = vmax.f32 %v2664, 0.0
        %v2729 = vmax.f32 %v2665, 0.0
        %v2730 = vmax.f32 %v2666, 0.0
        %v2731 = vmax.f32 %v2667, 0.0
        %v2732 = vmax.f32 %v2668, 0.0
        %v2733 = vmax.f32 %v2669, 0.0
        %v2734 = vmax.f32 %v2670, 0.0
        %v2735 = vmax.f32 %v2671, 0.0
        %v2736 = vmax.f32 %v2672, 0.0
        %v2737 = vmin.f32 %v2673, 1.0
        %v2738 = vmin.f32 %v2674, 1.0
        %v2739 = vmin.f32 %v2675, 1.0
        %v2740 = vmin.f32 %v2676, 1.0
        %v2741 = vmin.f32 %v2677, 1.0
        %v2742 = vmin.f32 %v2678, 1.0
        %v2743 = vmin.f32 %v2679, 1.0
        %v2744 = vmin.f32 %v2680, 1.0
        %v2745 = vmin.f32 %v2681, 1.0
        %v2746 = vmin.f32 %v2682, 1.0
        %v2747 = vmin.f32 %v2683, 1.0
        %v2748 = vmin.f32 %v2684, 1.0
        %v2749 = vmin.f32 %v2685, 1.0
        %v2750 = vmin.f32 %v2686, 1.0
        %v2751 = vmin.f32 %v2687, 1.0
        %v2752 = vmin.f32 %v2688, 1.0
        %v2753 = vmin.f32 %v2689, 1.0
        %v2754 = vmin.f32 %v2690, 1.0
        %v2755 = vmin.f32 %v2691, 1.0
        %v2756 = vmin.f32 %v2692, 1.0
        %v2757 = vmin.f32 %v2693, 1.0
        %v2758 = vmin.f32 %v2694, 1.0
        %v2759 = vmin.f32 %v2695, 1.0
        %v2760 = vmin.f32 %v2696, 1.0
        %v2761 = vmin.f32 %v2697, 1.0
        %v2762 = vmin.f32 %v2698, 1.0
        %v2763 = vmin.f32 %v2699, 1.0
        %v2764 = vmin.f32 %v2700, 1.0
        %v2765 = vmin.f32 %v2701, 1.0
        %v2766 = vmin.f32 %v2702, 1.0
        %v2767 = vmin.f32 %v2703, 1.0
        %v2768 = vmin.f32 %v2704, 1.0
        %v2769 = vmin.f32 %v2705, 1.0
        %v2770 = vmin.f32 %v2706, 1.0
        %v2771 = vmin.f32 %v2707, 1.0
        %v2772 = vmin.f32 %v2708, 1.0
        %v2773 = vmin.f32 %v2709, 1.0
        %v2774 = vmin.f32 %v2710, 1.0
        %v2775 = vmin.f32 %v2711, 1.0
        %v2776 = vmin.f32 %v2712, 1.0
        %v2777 = vmin.f32 %v2713, 1.0
        %v2778 = vmin.f32 %v2714, 1.0
        %v2779 = vmin.f32 %v2715, 1.0
        %v2780 = vmin.f32 %v2716, 1.0
        %v2781 = vmin.f32 %v2717, 1.0
        %v2782 = vmin.f32 %v2718, 1.0
        %v2783 = vmin.f32 %v2719, 1.0
        %v2784 = vmin.f32 %v2720, 1.0
        %v2785 = vmin.f32 %v2721, 1.0
        %v2786 = vmin.f32 %v2722, 1.0
        %v2787 = vmin.f32 %v2723, 1.0
        %v2788 = vmin.f32 %v2724, 1.0
        %v2789 = vmin.f32 %v2725, 1.0
        %v2790 = vmin.f32 %v2726, 1.0
        %v2791 = vmin.f32 %v2727, 1.0
        %v2792 = vmin.f32 %v2728, 1.0
        %v2793 = vmin.f32 %v2729, 1.0
        %v2794 = vmin.f32 %v2730, 1.0
        %v2795 = vmin.f32 %v2731, 1.0
        %v2796 = vmin.f32 %v2732, 1.0
        %v2797 = vmin.f32 %v2733, 1.0
        %v2798 = vmin.f32 %v2734, 1.0
        %v2799 = vmin.f32 %v2735, 1.0
        %v2800 = vmin.f32 %v2736, 1.0
        %v2801 = vmul.f32 %v2737, 15.0
        %v2802 = vmul.f32 %v2738, 15.0
        %v2803 = vmul.f32 %v2739, 15.0
        %v2804 = vmul.f32 %v2740, 15.0
        %v2805 = vmul.f32 %v2741, 15.0
        %v2806 = vmul.f32 %v2742, 15.0
        %v2807 = vmul.f32 %v2743, 15.0
        %v2808 = vmul.f32 %v2744, 15.0
        %v2809 = vmul.f32 %v2745, 15.0
        %v2810 = vmul.f32 %v2746, 15.0
        %v2811 = vmul.f32 %v2747, 15.0
        %v2812 = vmul.f32 %v2748, 15.0
        %v2813 = vmul.f32 %v2749, 15.0
        %v2814 = vmul.f32 %v2750, 15.0
        %v2815 = vmul.f32 %v2751, 15.0
        %v2816 = vmul.f32 %v2752, 15.0
        %v2817 = vmul.f32 %v2753, 15.0
        %v2818 = vmul.f32 %v2754, 15.0
        %v2819 = vmul.f32 %v2755, 15.0
        %v2820 = vmul.f32 %v2756, 15.0
        %v2821 = vmul.f32 %v2757, 15.0
        %v2822 = vmul.f32 %v2758, 15.0
        %v2823 = vmul.f32 %v2759, 15.0
        %v2824 = vmul.f32 %v2760, 15.0
        %v2825 = vmul.f32 %v2761, 15.0
        %v2826 = vmul.f32 %v2762, 15.0
        %v2827 = vmul.f32 %v2763, 15.0
        %v2828 = vmul.f32 %v2764, 15.0
        %v2829 = vmul.f32 %v2765, 15.0
        %v2830 = vmul.f32 %v2766, 15.0
        %v2831 = vmul.f32 %v2767, 15.0
        %v2832 = vmul.f32 %v2768, 15.0
        %v2833 = vmul.f32 %v2769, 15.0
        %v2834 = vmul.f32 %v2770, 15.0
        %v2835 = vmul.f32 %v2771, 15.0
        %v2836 = vmul.f32 %v2772, 15.0
        %v2837 = vmul.f32 %v2773, 15.0
        %v2838 = vmul.f32 %v2774, 15.0
        %v2839 = vmul.f32 %v2775, 15.0
        %v2840 = vmul.f32 %v2776, 15.0
        %v2841 = vmul.f32 %v2777, 15.0
        %v2842 = vmul.f32 %v2778, 15.0
        %v2843 = vmul.f32 %v2779, 15.0
        %v2844 = vmul.f32 %v2780, 15.0
        %v2845 = vmul.f32 %v2781, 15.0
        %v2846 = vmul.f32 %v2782, 15.0
        %v2847 = vmul.f32 %v2783, 15.0
        %v2848 = vmul.f32 %v2784, 15.0
        %v2849 = vmul.f32 %v2785, 15.0
        %v2850 = vmul.f32 %v2786, 15.0
        %v2851 = vmul.f32 %v2787, 15.0
        %v2852 = vmul.f32 %v2788, 15.0
        %v2853 = vmul.f32 %v2789, 15.0
        %v2854 = vmul.f32 %v2790, 15.0
        %v2855 = vmul.f32 %v2791, 15.0
        %v2856 = vmul.f32 %v2792, 15.0
        %v2857 = vmul.f32 %v2793, 15.0
        %v2858 = vmul.f32 %v2794, 15.0
        %v2859 = vmul.f32 %v2795, 15.0
        %v2860 = vmul.f32 %v2796, 15.0
        %v2861 = vmul.f32 %v2797, 15.0
        %v2862 = vmul.f32 %v2798, 15.0
        %v2863 = vmul.f32 %v2799, 15.0
        %v2864 = vmul.f32 %v2800, 15.0
        %v2865 = vadd.f32 %v2801, 0.5
        %v2866 = vadd.f32 %v2802, 0.5
        %v2867 = vadd.f32 %v2803, 0.5
        %v2868 = vadd.f32 %v2804, 0.5
        %v2869 = vadd.f32 %v2805, 0.5
        %v2870 = vadd.f32 %v2806, 0.5
        %v2871 = vadd.f32 %v2807, 0.5
        %v2872 = vadd.f32 %v2808, 0.5
        %v2873 = vadd.f32 %v2809, 0.5
        %v2874 = vadd.f32 %v2810, 0.5
        %v2875 = vadd.f32 %v2811, 0.5
        %v2876 = vadd.f32 %v2812, 0.5
        %v2877 = vadd.f32 %v2813, 0.5
        %v2878 = vadd.f32 %v2814, 0.5
        %v2879 = vadd.f32 %v2815, 0.5
        %v2880 = vadd.f32 %v2816, 0.5
        %v2881 = vadd.f32 %v2817, 0.5
        %v2882 = vadd.f32 %v2818, 0.5
        %v2883 = vadd.f32 %v2819, 0.5
        %v2884 = vadd.f32 %v2820, 0.5
        %v2885 = vadd.f32 %v2821, 0.5
        %v2886 = vadd.f32 %v2822, 0.5
        %v2887 = vadd.f32 %v2823, 0.5
        %v2888 = vadd.f32 %v2824, 0.5
        %v2889 = vadd.f32 %v2825, 0.5
        %v2890 = vadd.f32 %v2826, 0.5
        %v2891 = vadd.f32 %v2827, 0.5
        %v2892 = vadd.f32 %v2828, 0.5
        %v2893 = vadd.f32 %v2829, 0.5
        %v2894 = vadd.f32 %v2830, 0.5
        %v2895 = vadd.f32 %v2831, 0.5
        %v2896 = vadd.f32 %v2832, 0.5
        %v2897 = vadd.f32 %v2833, 0.5
        %v2898 = vadd.f32 %v2834, 0.5
        %v2899 = vadd.f32 %v2835, 0.5
        %v2900 = vadd.f32 %v2836, 0.5
        %v2901 = vadd.f32 %v2837, 0.5
        %v2902 = vadd.f32 %v2838, 0.5
        %v2903 = vadd.f32 %v2839, 0.5
        %v2904 = vadd.f32 %v2840, 0.5
        %v2905 = vadd.f32 %v2841, 0.5
        %v2906 = vadd.f32 %v2842, 0.5
        %v2907 = vadd.f32 %v2843, 0.5
        %v2908 = vadd.f32 %v2844, 0.5
        %v2909 = vadd.f32 %v2845, 0.5
        %v2910 = vadd.f32 %v2846, 0.5
        %v2911 = vadd.f32 %v2847, 0.5
        %v2912 = vadd.f32 %v2848, 0.5
        %v2913 = vadd.f32 %v2849, 0.5
        %v2914 = vadd.f32 %v2850, 0.5
        %v2915 = vadd.f32 %v2851, 0.5
        %v2916 = vadd.f32 %v2852, 0.5
        %v2917 = vadd.f32 %v2853, 0.5
        %v2918 = vadd.f32 %v2854, 0.5
        %v2919 = vadd.f32 %v2855, 0.5
        %v2920 = vadd.f32 %v2856, 0.5
        %v2921 = vadd.f32 %v2857, 0.5
        %v2922 = vadd.f32 %v2858, 0.5
        %v2923 = vadd.f32 %v2859, 0.5
        %v2924 = vadd.f32 %v2860, 0.5
        %v2925 = vadd.f32 %v2861, 0.5
        %v2926 = vadd.f32 %v2862, 0.5
        %v2927 = vadd.f32 %v2863, 0.5
        %v2928 = vadd.f32 %v2864, 0.5
        %v2929 = vfloor.f32 %v2865
        %v2930 = vfloor.f32 %v2866
        %v2931 = vfloor.f32 %v2867
        %v2932 = vfloor.f32 %v2868
        %v2933 = vfloor.f32 %v2869
        %v2934 = vfloor.f32 %v2870
        %v2935 = vfloor.f32 %v2871
        %v2936 = vfloor.f32 %v2872
        %v2937 = vfloor.f32 %v2873
        %v2938 = vfloor.f32 %v2874
        %v2939 = vfloor.f32 %v2875
        %v2940 = vfloor.f32 %v2876
        %v2941 = vfloor.f32 %v2877
        %v2942 = vfloor.f32 %v2878
        %v2943 = vfloor.f32 %v2879
        %v2944 = vfloor.f32 %v2880
        %v2945 = vfloor.f32 %v2881
        %v2946 = vfloor.f32 %v2882
        %v2947 = vfloor.f32 %v2883
        %v2948 = vfloor.f32 %v2884
        %v2949 = vfloor.f32 %v2885
        %v2950 = vfloor.f32 %v2886
        %v2951 = vfloor.f32 %v2887
        %v2952 = vfloor.f32 %v2888
        %v2953 = vfloor.f32 %v2889
        %v2954 = vfloor.f32 %v2890
        %v2955 = vfloor.f32 %v2891
        %v2956 = vfloor.f32 %v2892
        %v2957 = vfloor.f32 %v2893
        %v2958 = vfloor.f32 %v2894
        %v2959 = vfloor.f32 %v2895
        %v2960 = vfloor.f32 %v2896
        %v2961 = vfloor.f32 %v2897
        %v2962 = vfloor.f32 %v2898
        %v2963 = vfloor.f32 %v2899
        %v2964 = vfloor.f32 %v2900
        %v2965 = vfloor.f32 %v2901
        %v2966 = vfloor.f32 %v2902
        %v2967 = vfloor.f32 %v2903
        %v2968 = vfloor.f32 %v2904
        %v2969 = vfloor.f32 %v2905
        %v2970 = vfloor.f32 %v2906
        %v2971 = vfloor.f32 %v2907
        %v2972 = vfloor.f32 %v2908
        %v2973 = vfloor.f32 %v2909
        %v2974 = vfloor.f32 %v2910
        %v2975 = vfloor.f32 %v2911
        %v2976 = vfloor.f32 %v2912
        %v2977 = vfloor.f32 %v2913
        %v2978 = vfloor.f32 %v2914
        %v2979 = vfloor.f32 %v2915
        %v2980 = vfloor.f32 %v2916
        %v2981 = vfloor.f32 %v2917
        %v2982 = vfloor.f32 %v2918
        %v2983 = vfloor.f32 %v2919
        %v2984 = vfloor.f32 %v2920
        %v2985 = vfloor.f32 %v2921
        %v2986 = vfloor.f32 %v2922
        %v2987 = vfloor.f32 %v2923
        %v2988 = vfloor.f32 %v2924
        %v2989 = vfloor.f32 %v2925
        %v2990 = vfloor.f32 %v2926
        %v2991 = vfloor.f32 %v2927
        %v2992 = vfloor.f32 %v2928
        %v2993 = vmul.f32 %v2929, 0.06666667
        %v2994 = vmul.f32 %v2930, 0.06666667
        %v2995 = vmul.f32 %v2931, 0.06666667
        %v2996 = vmul.f32 %v2932, 0.06666667
        %v2997 = vmul.f32 %v2933, 0.06666667
        %v2998 = vmul.f32 %v2934, 0.06666667
        %v2999 = vmul.f32 %v2935, 0.06666667
        %v3000 = vmul.f32 %v2936, 0.06666667
        %v3001 = vmul.f32 %v2937, 0.06666667
        %v3002 = vmul.f32 %v2938, 0.06666667
        %v3003 = vmul.f32 %v2939, 0.06666667
        %v3004 = vmul.f32 %v2940, 0.06666667
        %v3005 = vmul.f32 %v2941, 0.06666667
        %v3006 = vmul.f32 %v2942, 0.06666667
        %v3007 = vmul.f32 %v2943, 0.06666667
        %v3008 = vmul.f32 %v2944, 0.06666667
        %v3009 = vmul.f32 %v2945, 0.06666667
        %v3010 = vmul.f32 %v2946, 0.06666667
        %v3011 = vmul.f32 %v2947, 0.06666667
        %v3012 = vmul.f32 %v2948, 0.06666667
        %v3013 = vmul.f32 %v2949, 0.06666667
        %v3014 = vmul.f32 %v2950, 0.06666667
        %v3015 = vmul.f32 %v2951, 0.06666667
        %v3016 = vmul.f32 %v2952, 0.06666667
        %v3017 = vmul.f32 %v2953, 0.06666667
        %v3018 = vmul.f32 %v2954, 0.06666667
        %v3019 = vmul.f32 %v2955, 0.06666667
        %v3020 = vmul.f32 %v2956, 0.06666667
        %v3021 = vmul.f32 %v2957, 0.06666667
        %v3022 = vmul.f32 %v2958, 0.06666667
        %v3023 = vmul.f32 %v2959, 0.06666667
        %v3024 = vmul.f32 %v2960, 0.06666667
        %v3025 = vmul.f32 %v2961, 0.06666667
        %v3026 = vmul.f32 %v2962, 0.06666667
        %v3027 = vmul.f32 %v2963, 0.06666667
        %v3028 = vmul.f32 %v2964, 0.06666667
        %v3029 = vmul.f32 %v2965, 0.06666667
        %v3030 = vmul.f32 %v2966, 0.06666667
        %v3031 = vmul.f32 %v2967, 0.06666667
        %v3032 = vmul.f32 %v2968, 0.06666667
        %v3033 = vmul.f32 %v2969, 0.06666667
        %v3034 = vmul.f32 %v2970, 0.06666667
        %v3035 = vmul.f32 %v2971, 0.06666667
        %v3036 = vmul.f32 %v2972, 0.06666667
        %v3037 = vmul.f32 %v2973, 0.06666667
        %v3038 = vmul.f32 %v2974, 0.06666667
        %v3039 = vmul.f32 %v2975, 0.06666667
        %v3040 = vmul.f32 %v2976, 0.06666667
        %v3041 = vmul.f32 %v2977, 0.06666667
        %v3042 = vmul.f32 %v2978, 0.06666667
        %v3043 = vmul.f32 %v2979, 0.06666667
        %v3044 = vmul.f32 %v2980, 0.06666667
        %v3045 = vmul.f32 %v2981, 0.06666667
        %v3046 = vmul.f32 %v2982, 0.06666667
        %v3047 = vmul.f32 %v2983, 0.06666667
        %v3048 = vmul.f32 %v2984, 0.06666667
        %v3049 = vmul.f32 %v2985, 0.06666667
        %v3050 = vmul.f32 %v2986, 0.06666667
        %v3051 = vmul.f32 %v2987, 0.06666667
        %v3052 = vmul.f32 %v2988, 0.06666667
        %v3053 = vmul.f32 %v2989, 0.06666667
        %v3054 = vmul.f32 %v2990, 0.06666667
        %v3055 = vmul.f32 %v2991, 0.06666667
        %v3056 = vmul.f32 %v2992, 0.06666667
        %v3057 = vrot.slane %v2993, 7
        %v3058 = vrot.slane %v2994, 7
        %v3059 = vrot.slane %v2995, 7
        %v3060 = vrot.slane %v2996, 7
        %v3061 = vrot.slane %v2997, 7
        %v3062 = vrot.slane %v2998, 7
        %v3063 = vrot.slane %v2999, 7
        %v3064 = vrot.slane %v3000, 7
        %v3065 = vrot.slane %v3001, 7
        %v3066 = vrot.slane %v3002, 7
        %v3067 = vrot.slane %v3003, 7
        %v3068 = vrot.slane %v3004, 7
        %v3069 = vrot.slane %v3005, 7
        %v3070 = vrot.slane %v3006, 7
        %v3071 = vrot.slane %v3007, 7
        %v3072 = vrot.slane %v3008, 7
        %v3073 = vrot.slane %v3009, 7
        %v3074 = vrot.slane %v3010, 7
        %v3075 = vrot.slane %v3011, 7
        %v3076 = vrot.slane %v3012, 7
        %v3077 = vrot.slane %v3013, 7
        %v3078 = vrot.slane %v3014, 7
        %v3079 = vrot.slane %v3015, 7
        %v3080 = vrot.slane %v3016, 7
        %v3081 = vrot.slane %v3017, 7
        %v3082 = vrot.slane %v3018, 7
        %v3083 = vrot.slane %v3019, 7
        %v3084 = vrot.slane %v3020, 7
        %v3085 = vrot.slane %v3021, 7
        %v3086 = vrot.slane %v3022, 7
        %v3087 = vrot.slane %v3023, 7
        %v3088 = vrot.slane %v3024, 7
        %v3089 = vrot.slane %v3025, 7
        %v3090 = vrot.slane %v3026, 7
        %v3091 = vrot.slane %v3027, 7
        %v3092 = vrot.slane %v3028, 7
        %v3093 = vrot.slane %v3029, 7
        %v3094 = vrot.slane %v3030, 7
        %v3095 = vrot.slane %v3031, 7
        %v3096 = vrot.slane %v3032, 7
        %v3097 = vrot.slane %v3033, 7
        %v3098 = vrot.slane %v3034, 7
        %v3099 = vrot.slane %v3035, 7
        %v3100 = vrot.slane %v3036, 7
        %v3101 = vrot.slane %v3037, 7
        %v3102 = vrot.slane %v3038, 7
        %v3103 = vrot.slane %v3039, 7
        %v3104 = vrot.slane %v3040, 7
        %v3105 = vrot.slane %v3041, 7
        %v3106 = vrot.slane %v3042, 7
        %v3107 = vrot.slane %v3043, 7
        %v3108 = vrot.slane %v3044, 7
        %v3109 = vrot.slane %v3045, 7
        %v3110 = vrot.slane %v3046, 7
        %v3111 = vrot.slane %v3047, 7
        %v3112 = vrot.slane %v3048, 7
        %v3113 = vrot.slane %v3049, 7
        %v3114 = vrot.slane %v3050, 7
        %v3115 = vrot.slane %v3051, 7
        %v3116 = vrot.slane %v3052, 7
        %v3117 = vrot.slane %v3053, 7
        %v3118 = vrot.slane %v3054, 7
        %v3119 = vrot.slane %v3055, 7
        %v3120 = vrot.slane %v3056, 7
        %v3121 = vsel %vm1391, %v3119, %v3120
        %v3122 = vsel %vm1391, %v3118, %v3119
        %v3123 = vsel %vm1391, %v3117, %v3118
        %v3124 = vsel %vm1391, %v3116, %v3117
        %v3125 = vsel %vm1391, %v3115, %v3116
        %v3126 = vsel %vm1391, %v3114, %v3115
        %v3127 = vsel %vm1391, %v3113, %v3114
        %v3128 = vsel %vm1391, %v3112, %v3113
        %v3129 = vsel %vm1391, %v3111, %v3112
        %v3130 = vsel %vm1391, %v3110, %v3111
        %v3131 = vsel %vm1391, %v3109, %v3110
        %v3132 = vsel %vm1391, %v3108, %v3109
        %v3133 = vsel %vm1391, %v3107, %v3108
        %v3134 = vsel %vm1391, %v3106, %v3107
        %v3135 = vsel %vm1391, %v3105, %v3106
        %v3136 = vsel %vm1391, %v3104, %v3105
        %v3137 = vsel %vm1391, %v3103, %v3104
        %v3138 = vsel %vm1391, %v3102, %v3103
        %v3139 = vsel %vm1391, %v3101, %v3102
        %v3140 = vsel %vm1391, %v3100, %v3101
        %v3141 = vsel %vm1391, %v3099, %v3100
        %v3142 = vsel %vm1391, %v3098, %v3099
        %v3143 = vsel %vm1391, %v3097, %v3098
        %v3144 = vsel %vm1391, %v3096, %v3097
        %v3145 = vsel %vm1391, %v3095, %v3096
        %v3146 = vsel %vm1391, %v3094, %v3095
        %v3147 = vsel %vm1391, %v3093, %v3094
        %v3148 = vsel %vm1391, %v3092, %v3093
        %v3149 = vsel %vm1391, %v3091, %v3092
        %v3150 = vsel %vm1391, %v3090, %v3091
        %v3151 = vsel %vm1391, %v3089, %v3090
        %v3152 = vsel %vm1391, %v3088, %v3089
        %v3153 = vsel %vm1391, %v3087, %v3088
        %v3154 = vsel %vm1391, %v3086, %v3087
        %v3155 = vsel %vm1391, %v3085, %v3086
        %v3156 = vsel %vm1391, %v3084, %v3085
        %v3157 = vsel %vm1391, %v3083, %v3084
        %v3158 = vsel %vm1391, %v3082, %v3083
        %v3159 = vsel %vm1391, %v3081, %v3082
        %v3160 = vsel %vm1391, %v3080, %v3081
        %v3161 = vsel %vm1391, %v3079, %v3080
        %v3162 = vsel %vm1391, %v3078, %v3079
        %v3163 = vsel %vm1391, %v3077, %v3078
        %v3164 = vsel %vm1391, %v3076, %v3077
        %v3165 = vsel %vm1391, %v3075, %v3076
        %v3166 = vsel %vm1391, %v3074, %v3075
        %v3167 = vsel %vm1391, %v3073, %v3074
        %v3168 = vsel %vm1391, %v3072, %v3073
        %v3169 = vsel %vm1391, %v3071, %v3072
        %v3170 = vsel %vm1391, %v3070, %v3071
        %v3171 = vsel %vm1391, %v3069, %v3070
        %v3172 = vsel %vm1391, %v3068, %v3069
        %v3173 = vsel %vm1391, %v3067, %v3068
        %v3174 = vsel %vm1391, %v3066, %v3067
        %v3175 = vsel %vm1391, %v3065, %v3066
        %v3176 = vsel %vm1391, %v3064, %v3065
        %v3177 = vsel %vm1391, %v3063, %v3064
        %v3178 = vsel %vm1391, %v3062, %v3063
        %v3179 = vsel %vm1391, %v3061, %v3062
        %v3180 = vsel %vm1391, %v3060, %v3061
        %v3181 = vsel %vm1391, %v3059, %v3060
        %v3182 = vsel %vm1391, %v3058, %v3059
        %v3183 = vsel %vm1391, %v3057, %v3058
        %v3184 = vsel %vm1391, %v3120, %v3057
        %v3185 = vsel %vm1199, %v3184, 0.0
        %v3186 = vsel %vm1200, %v3183, 0.0
        %v3187 = vsel %vm1201, %v3182, 0.0
        %v3188 = vsel %vm1202, %v3181, 0.0
        %v3189 = vsel %vm1203, %v3180, 0.0
        %v3190 = vsel %vm1204, %v3179, 0.0
        %v3191 = vsel %vm1205, %v3178, 0.0
        %v3192 = vsel %vm1206, %v3177, 0.0
        %v3193 = vsel %vm1207, %v3176, 0.0
        %v3194 = vsel %vm1208, %v3175, 0.0
        %v3195 = vsel %vm1209, %v3174, 0.0
        %v3196 = vsel %vm1210, %v3173, 0.0
        %v3197 = vsel %vm1211, %v3172, 0.0
        %v3198 = vsel %vm1212, %v3171, 0.0
        %v3199 = vsel %vm1213, %v3170, 0.0
        %v3200 = vsel %vm1214, %v3169, 0.0
        %v3201 = vsel %vm1215, %v3168, 0.0
        %v3202 = vsel %vm1216, %v3167, 0.0
        %v3203 = vsel %vm1217, %v3166, 0.0
        %v3204 = vsel %vm1218, %v3165, 0.0
        %v3205 = vsel %vm1219, %v3164, 0.0
        %v3206 = vsel %vm1220, %v3163, 0.0
        %v3207 = vsel %vm1221, %v3162, 0.0
        %v3208 = vsel %vm1222, %v3161, 0.0
        %v3209 = vsel %vm1223, %v3160, 0.0
        %v3210 = vsel %vm1224, %v3159, 0.0
        %v3211 = vsel %vm1225, %v3158, 0.0
        %v3212 = vsel %vm1226, %v3157, 0.0
        %v3213 = vsel %vm1227, %v3156, 0.0
        %v3214 = vsel %vm1228, %v3155, 0.0
        %v3215 = vsel %vm1229, %v3154, 0.0
        %v3216 = vsel %vm1230, %v3153, 0.0
        %v3217 = vsel %vm1231, %v3152, 0.0
        %v3218 = vsel %vm1232, %v3151, 0.0
        %v3219 = vsel %vm1233, %v3150, 0.0
        %v3220 = vsel %vm1234, %v3149, 0.0
        %v3221 = vsel %vm1235, %v3148, 0.0
        %v3222 = vsel %vm1236, %v3147, 0.0
        %v3223 = vsel %vm1237, %v3146, 0.0
        %v3224 = vsel %vm1238, %v3145, 0.0
        %v3225 = vsel %vm1239, %v3144, 0.0
        %v3226 = vsel %vm1240, %v3143, 0.0
        %v3227 = vsel %vm1241, %v3142, 0.0
        %v3228 = vsel %vm1242, %v3141, 0.0
        %v3229 = vsel %vm1243, %v3140, 0.0
        %v3230 = vsel %vm1244, %v3139, 0.0
        %v3231 = vsel %vm1245, %v3138, 0.0
        %v3232 = vsel %vm1246, %v3137, 0.0
        %v3233 = vsel %vm1247, %v3136, 0.0
        %v3234 = vsel %vm1248, %v3135, 0.0
        %v3235 = vsel %vm1249, %v3134, 0.0
        %v3236 = vsel %vm1250, %v3133, 0.0
        %v3237 = vsel %vm1251, %v3132, 0.0
        %v3238 = vsel %vm1252, %v3131, 0.0
        %v3239 = vsel %vm1253, %v3130, 0.0
        %v3240 = vsel %vm1254, %v3129, 0.0
        %v3241 = vsel %vm1255, %v3128, 0.0
        %v3242 = vsel %vm1256, %v3127, 0.0
        %v3243 = vsel %vm1257, %v3126, 0.0
        %v3244 = vsel %vm1258, %v3125, 0.0
        %v3245 = vsel %vm1259, %v3124, 0.0
        %v3246 = vsel %vm1260, %v3123, 0.0
        %v3247 = vsel %vm1261, %v3122, 0.0
        %v3248 = vsel %vm1262, %v3121, 0.0
        %v3249 = vrot.slane %v2993, 1
        %v3250 = vrot.slane %v2994, 1
        %v3251 = vrot.slane %v2995, 1
        %v3252 = vrot.slane %v2996, 1
        %v3253 = vrot.slane %v2997, 1
        %v3254 = vrot.slane %v2998, 1
        %v3255 = vrot.slane %v2999, 1
        %v3256 = vrot.slane %v3000, 1
        %v3257 = vrot.slane %v3001, 1
        %v3258 = vrot.slane %v3002, 1
        %v3259 = vrot.slane %v3003, 1
        %v3260 = vrot.slane %v3004, 1
        %v3261 = vrot.slane %v3005, 1
        %v3262 = vrot.slane %v3006, 1
        %v3263 = vrot.slane %v3007, 1
        %v3264 = vrot.slane %v3008, 1
        %v3265 = vrot.slane %v3009, 1
        %v3266 = vrot.slane %v3010, 1
        %v3267 = vrot.slane %v3011, 1
        %v3268 = vrot.slane %v3012, 1
        %v3269 = vrot.slane %v3013, 1
        %v3270 = vrot.slane %v3014, 1
        %v3271 = vrot.slane %v3015, 1
        %v3272 = vrot.slane %v3016, 1
        %v3273 = vrot.slane %v3017, 1
        %v3274 = vrot.slane %v3018, 1
        %v3275 = vrot.slane %v3019, 1
        %v3276 = vrot.slane %v3020, 1
        %v3277 = vrot.slane %v3021, 1
        %v3278 = vrot.slane %v3022, 1
        %v3279 = vrot.slane %v3023, 1
        %v3280 = vrot.slane %v3024, 1
        %v3281 = vrot.slane %v3025, 1
        %v3282 = vrot.slane %v3026, 1
        %v3283 = vrot.slane %v3027, 1
        %v3284 = vrot.slane %v3028, 1
        %v3285 = vrot.slane %v3029, 1
        %v3286 = vrot.slane %v3030, 1
        %v3287 = vrot.slane %v3031, 1
        %v3288 = vrot.slane %v3032, 1
        %v3289 = vrot.slane %v3033, 1
        %v3290 = vrot.slane %v3034, 1
        %v3291 = vrot.slane %v3035, 1
        %v3292 = vrot.slane %v3036, 1
        %v3293 = vrot.slane %v3037, 1
        %v3294 = vrot.slane %v3038, 1
        %v3295 = vrot.slane %v3039, 1
        %v3296 = vrot.slane %v3040, 1
        %v3297 = vrot.slane %v3041, 1
        %v3298 = vrot.slane %v3042, 1
        %v3299 = vrot.slane %v3043, 1
        %v3300 = vrot.slane %v3044, 1
        %v3301 = vrot.slane %v3045, 1
        %v3302 = vrot.slane %v3046, 1
        %v3303 = vrot.slane %v3047, 1
        %v3304 = vrot.slane %v3048, 1
        %v3305 = vrot.slane %v3049, 1
        %v3306 = vrot.slane %v3050, 1
        %v3307 = vrot.slane %v3051, 1
        %v3308 = vrot.slane %v3052, 1
        %v3309 = vrot.slane %v3053, 1
        %v3310 = vrot.slane %v3054, 1
        %v3311 = vrot.slane %v3055, 1
        %v3312 = vrot.slane %v3056, 1
        %v3313 = vsel %vm1584, %v3311, %v3312
        %v3314 = vsel %vm1584, %v3310, %v3311
        %v3315 = vsel %vm1584, %v3309, %v3310
        %v3316 = vsel %vm1584, %v3308, %v3309
        %v3317 = vsel %vm1584, %v3307, %v3308
        %v3318 = vsel %vm1584, %v3306, %v3307
        %v3319 = vsel %vm1584, %v3305, %v3306
        %v3320 = vsel %vm1584, %v3304, %v3305
        %v3321 = vsel %vm1584, %v3303, %v3304
        %v3322 = vsel %vm1584, %v3302, %v3303
        %v3323 = vsel %vm1584, %v3301, %v3302
        %v3324 = vsel %vm1584, %v3300, %v3301
        %v3325 = vsel %vm1584, %v3299, %v3300
        %v3326 = vsel %vm1584, %v3298, %v3299
        %v3327 = vsel %vm1584, %v3297, %v3298
        %v3328 = vsel %vm1584, %v3296, %v3297
        %v3329 = vsel %vm1584, %v3295, %v3296
        %v3330 = vsel %vm1584, %v3294, %v3295
        %v3331 = vsel %vm1584, %v3293, %v3294
        %v3332 = vsel %vm1584, %v3292, %v3293
        %v3333 = vsel %vm1584, %v3291, %v3292
        %v3334 = vsel %vm1584, %v3290, %v3291
        %v3335 = vsel %vm1584, %v3289, %v3290
        %v3336 = vsel %vm1584, %v3288, %v3289
        %v3337 = vsel %vm1584, %v3287, %v3288
        %v3338 = vsel %vm1584, %v3286, %v3287
        %v3339 = vsel %vm1584, %v3285, %v3286
        %v3340 = vsel %vm1584, %v3284, %v3285
        %v3341 = vsel %vm1584, %v3283, %v3284
        %v3342 = vsel %vm1584, %v3282, %v3283
        %v3343 = vsel %vm1584, %v3281, %v3282
        %v3344 = vsel %vm1584, %v3280, %v3281
        %v3345 = vsel %vm1584, %v3279, %v3280
        %v3346 = vsel %vm1584, %v3278, %v3279
        %v3347 = vsel %vm1584, %v3277, %v3278
        %v3348 = vsel %vm1584, %v3276, %v3277
        %v3349 = vsel %vm1584, %v3275, %v3276
        %v3350 = vsel %vm1584, %v3274, %v3275
        %v3351 = vsel %vm1584, %v3273, %v3274
        %v3352 = vsel %vm1584, %v3272, %v3273
        %v3353 = vsel %vm1584, %v3271, %v3272
        %v3354 = vsel %vm1584, %v3270, %v3271
        %v3355 = vsel %vm1584, %v3269, %v3270
        %v3356 = vsel %vm1584, %v3268, %v3269
        %v3357 = vsel %vm1584, %v3267, %v3268
        %v3358 = vsel %vm1584, %v3266, %v3267
        %v3359 = vsel %vm1584, %v3265, %v3266
        %v3360 = vsel %vm1584, %v3264, %v3265
        %v3361 = vsel %vm1584, %v3263, %v3264
        %v3362 = vsel %vm1584, %v3262, %v3263
        %v3363 = vsel %vm1584, %v3261, %v3262
        %v3364 = vsel %vm1584, %v3260, %v3261
        %v3365 = vsel %vm1584, %v3259, %v3260
        %v3366 = vsel %vm1584, %v3258, %v3259
        %v3367 = vsel %vm1584, %v3257, %v3258
        %v3368 = vsel %vm1584, %v3256, %v3257
        %v3369 = vsel %vm1584, %v3255, %v3256
        %v3370 = vsel %vm1584, %v3254, %v3255
        %v3371 = vsel %vm1584, %v3253, %v3254
        %v3372 = vsel %vm1584, %v3252, %v3253
        %v3373 = vsel %vm1584, %v3251, %v3252
        %v3374 = vsel %vm1584, %v3250, %v3251
        %v3375 = vsel %vm1584, %v3249, %v3250
        %v3376 = vsel %vm1584, %v3312, %v3249
        %v3377 = vsel %vm1263, %v3375, 0.0
        %v3378 = vsel %vm1264, %v3374, 0.0
        %v3379 = vsel %vm1265, %v3373, 0.0
        %v3380 = vsel %vm1266, %v3372, 0.0
        %v3381 = vsel %vm1267, %v3371, 0.0
        %v3382 = vsel %vm1268, %v3370, 0.0
        %v3383 = vsel %vm1269, %v3369, 0.0
        %v3384 = vsel %vm1270, %v3368, 0.0
        %v3385 = vsel %vm1271, %v3367, 0.0
        %v3386 = vsel %vm1272, %v3366, 0.0
        %v3387 = vsel %vm1273, %v3365, 0.0
        %v3388 = vsel %vm1274, %v3364, 0.0
        %v3389 = vsel %vm1275, %v3363, 0.0
        %v3390 = vsel %vm1276, %v3362, 0.0
        %v3391 = vsel %vm1277, %v3361, 0.0
        %v3392 = vsel %vm1278, %v3360, 0.0
        %v3393 = vsel %vm1279, %v3359, 0.0
        %v3394 = vsel %vm1280, %v3358, 0.0
        %v3395 = vsel %vm1281, %v3357, 0.0
        %v3396 = vsel %vm1282, %v3356, 0.0
        %v3397 = vsel %vm1283, %v3355, 0.0
        %v3398 = vsel %vm1284, %v3354, 0.0
        %v3399 = vsel %vm1285, %v3353, 0.0
        %v3400 = vsel %vm1286, %v3352, 0.0
        %v3401 = vsel %vm1287, %v3351, 0.0
        %v3402 = vsel %vm1288, %v3350, 0.0
        %v3403 = vsel %vm1289, %v3349, 0.0
        %v3404 = vsel %vm1290, %v3348, 0.0
        %v3405 = vsel %vm1291, %v3347, 0.0
        %v3406 = vsel %vm1292, %v3346, 0.0
        %v3407 = vsel %vm1293, %v3345, 0.0
        %v3408 = vsel %vm1294, %v3344, 0.0
        %v3409 = vsel %vm1295, %v3343, 0.0
        %v3410 = vsel %vm1296, %v3342, 0.0
        %v3411 = vsel %vm1297, %v3341, 0.0
        %v3412 = vsel %vm1298, %v3340, 0.0
        %v3413 = vsel %vm1299, %v3339, 0.0
        %v3414 = vsel %vm1300, %v3338, 0.0
        %v3415 = vsel %vm1301, %v3337, 0.0
        %v3416 = vsel %vm1302, %v3336, 0.0
        %v3417 = vsel %vm1303, %v3335, 0.0
        %v3418 = vsel %vm1304, %v3334, 0.0
        %v3419 = vsel %vm1305, %v3333, 0.0
        %v3420 = vsel %vm1306, %v3332, 0.0
        %v3421 = vsel %vm1307, %v3331, 0.0
        %v3422 = vsel %vm1308, %v3330, 0.0
        %v3423 = vsel %vm1309, %v3329, 0.0
        %v3424 = vsel %vm1310, %v3328, 0.0
        %v3425 = vsel %vm1311, %v3327, 0.0
        %v3426 = vsel %vm1312, %v3326, 0.0
        %v3427 = vsel %vm1313, %v3325, 0.0
        %v3428 = vsel %vm1314, %v3324, 0.0
        %v3429 = vsel %vm1315, %v3323, 0.0
        %v3430 = vsel %vm1316, %v3322, 0.0
        %v3431 = vsel %vm1317, %v3321, 0.0
        %v3432 = vsel %vm1318, %v3320, 0.0
        %v3433 = vsel %vm1319, %v3319, 0.0
        %v3434 = vsel %vm1320, %v3318, 0.0
        %v3435 = vsel %vm1321, %v3317, 0.0
        %v3436 = vsel %vm1322, %v3316, 0.0
        %v3437 = vsel %vm1323, %v3315, 0.0
        %v3438 = vsel %vm1324, %v3314, 0.0
        %v3439 = vsel %vm1325, %v3313, 0.0
        %v3440 = vsel %vm1326, %v3376, 0.0
        %v3441 = vld [vmem:[#allocation7] sm:$0xff]
        %v3442 = vld [vmem:[#allocation7 + $0x8] sm:$0xff]
        %v3443 = vld [vmem:[#allocation7 + $0x10] sm:$0xff]
        %v3444 = vld [vmem:[#allocation7 + $0x18] sm:$0xff]
        %v3445 = vld [vmem:[#allocation7 + $0x20] sm:$0xff]
        %v3446 = vld [vmem:[#allocation7 + $0x28] sm:$0xff]
        %v3447 = vld [vmem:[#allocation7 + $0x30] sm:$0xff]
        %v3448 = vld [vmem:[#allocation7 + $0x38] sm:$0xff]
        %v3449 = vld [vmem:[#allocation7 + $0x40] sm:$0xff]
        %v3450 = vld [vmem:[#allocation7 + $0x48] sm:$0xff]
        %v3451 = vld [vmem:[#allocation7 + $0x50] sm:$0xff]
        %v3452 = vld [vmem:[#allocation7 + $0x58] sm:$0xff]
        %v3453 = vld [vmem:[#allocation7 + $0x60] sm:$0xff]
        %v3454 = vld [vmem:[#allocation7 + $0x68] sm:$0xff]
        %v3455 = vld [vmem:[#allocation7 + $0x70] sm:$0xff]
        %v3456 = vld [vmem:[#allocation7 + $0x78] sm:$0xff]
        %v3457 = vld [vmem:[#allocation7 + $0x80] sm:$0xff]
        %v3458 = vld [vmem:[#allocation7 + $0x88] sm:$0xff]
        %v3459 = vld [vmem:[#allocation7 + $0x90] sm:$0xff]
        %v3460 = vld [vmem:[#allocation7 + $0x98] sm:$0xff]
        %v3461 = vld [vmem:[#allocation7 + $0xa0] sm:$0xff]
        %v3462 = vld [vmem:[#allocation7 + $0xa8] sm:$0xff]
        %v3463 = vld [vmem:[#allocation7 + $0xb0] sm:$0xff]
        %v3464 = vld [vmem:[#allocation7 + $0xb8] sm:$0xff]
        %v3465 = vld [vmem:[#allocation7 + $0xc0] sm:$0xff]
        %v3466 = vld [vmem:[#allocation7 + $0xc8] sm:$0xff]
        %v3467 = vld [vmem:[#allocation7 + $0xd0] sm:$0xff]
        %v3468 = vld [vmem:[#allocation7 + $0xd8] sm:$0xff]
        %v3469 = vld [vmem:[#allocation7 + $0xe0] sm:$0xff]
        %v3470 = vld [vmem:[#allocation7 + $0xe8] sm:$0xff]
        %v3471 = vld [vmem:[#allocation7 + $0xf0] sm:$0xff]
        %v3472 = vld [vmem:[#allocation7 + $0xf8] sm:$0xff]
        %v3473 = vld [vmem:[#allocation7 + $0x100] sm:$0xff]
        %v3474 = vld [vmem:[#allocation7 + $0x108] sm:$0xff]
        %v3475 = vld [vmem:[#allocation7 + $0x110] sm:$0xff]
        %v3476 = vld [vmem:[#allocation7 + $0x118] sm:$0xff]
        %v3477 = vld [vmem:[#allocation7 + $0x120] sm:$0xff]
        %v3478 = vld [vmem:[#allocation7 + $0x128] sm:$0xff]
        %v3479 = vld [vmem:[#allocation7 + $0x130] sm:$0xff]
        %v3480 = vld [vmem:[#allocation7 + $0x138] sm:$0xff]
        %v3481 = vld [vmem:[#allocation7 + $0x140] sm:$0xff]
        %v3482 = vld [vmem:[#allocation7 + $0x148] sm:$0xff]
        %v3483 = vld [vmem:[#allocation7 + $0x150] sm:$0xff]
        %v3484 = vld [vmem:[#allocation7 + $0x158] sm:$0xff]
        %v3485 = vld [vmem:[#allocation7 + $0x160] sm:$0xff]
        %v3486 = vld [vmem:[#allocation7 + $0x168] sm:$0xff]
        %v3487 = vld [vmem:[#allocation7 + $0x170] sm:$0xff]
        %v3488 = vld [vmem:[#allocation7 + $0x178] sm:$0xff]
        %v3489 = vld [vmem:[%s5] sm:$0x1]
        %v3491 = vlaneseq
        %v3492 = vshrl.u32 %v3491, 7
        %v3493 = vsub.s32 0, %v3492
        %v3494 = vrot.slane %v3489, %v3493
        %3496 = vmatprep.subr.mxu0 0.0
        %3497 = vmatpush1.msra.mxu0 %v3441
        %3498 = vmatprep.subr.mxu0 0.0
        %3499 = vmatpush1.msra.mxu0 %v3442
        %3500 = vmatprep.subr.mxu0 0.0
        %3501 = vmatpush1.msra.mxu0 %v3443
        %3502 = vmatprep.subr.mxu0 0.0
        %3503 = vmatpush1.msra.mxu0 %v3444
        %3504 = vmatprep.subr.mxu0 0.0
        %3505 = vmatpush1.msra.mxu0 %v3445
        %3506 = vmatprep.subr.mxu0 0.0
        %3507 = vmatpush1.msra.mxu0 %v3446
        %3508 = vmatprep.subr.mxu0 0.0
        %3509 = vmatpush1.msra.mxu0 %v3447
        %3510 = vmatprep.subr.mxu0 0.0
        %3511 = vmatpush1.msra.mxu0 %v3448
        %3512 = vmatprep.subr.mxu0 0.0
        %3513 = vmatpush1.msra.mxu0 %v3449
        %3514 = vmatprep.subr.mxu0 0.0
        %3515 = vmatpush1.msra.mxu0 %v3450
        %3516 = vmatprep.subr.mxu0 0.0
        %3517 = vmatpush1.msra.mxu0 %v3451
        %3518 = vmatprep.subr.mxu0 0.0
        %3519 = vmatpush1.msra.mxu0 %v3452
        %3520 = vmatprep.subr.mxu0 0.0
        %3521 = vmatpush1.msra.mxu0 %v3453
        %3522 = vmatprep.subr.mxu0 0.0
        %3523 = vmatpush1.msra.mxu0 %v3454
        %3524 = vmatprep.subr.mxu0 0.0
        %3525 = vmatpush1.msra.mxu0 %v3455
        %3526 = vmatprep.subr.mxu0 0.0
        %3527 = vmatpush1.msra.mxu0 %v3456
        %3528 = vmatprep.subr.mxu0 0.0
        %3529 = vmatpush1.msra.mxu0 %v3457
        %3530 = vmatprep.subr.mxu0 0.0
        %3531 = vmatpush1.msra.mxu0 %v3458
        %3532 = vmatprep.subr.mxu0 0.0
        %3533 = vmatpush1.msra.mxu0 %v3459
        %3534 = vmatprep.subr.mxu0 0.0
        %3535 = vmatpush1.msra.mxu0 %v3460
        %3536 = vmatprep.subr.mxu0 0.0
        %3537 = vmatpush1.msra.mxu0 %v3461
        %3538 = vmatprep.subr.mxu0 0.0
        %3539 = vmatpush1.msra.mxu0 %v3462
        %3540 = vmatprep.subr.mxu0 0.0
        %3541 = vmatpush1.msra.mxu0 %v3463
        %3542 = vmatprep.subr.mxu0 0.0
        %3543 = vmatpush1.msra.mxu0 %v3464
        %3544 = vmatprep.subr.mxu0 0.0
        %3545 = vmatpush1.msra.mxu0 %v3465
        %3546 = vmatprep.subr.mxu0 0.0
        %3547 = vmatpush1.msra.mxu0 %v3466
        %3548 = vmatprep.subr.mxu0 0.0
        %3549 = vmatpush1.msra.mxu0 %v3467
        %3550 = vmatprep.subr.mxu0 0.0
        %3551 = vmatpush1.msra.mxu0 %v3468
        %3552 = vmatprep.subr.mxu0 0.0
        %3553 = vmatpush1.msra.mxu0 %v3469
        %3554 = vmatprep.subr.mxu0 0.0
        %3555 = vmatpush1.msra.mxu0 %v3470
        %3556 = vmatprep.subr.mxu0 0.0
        %3557 = vmatpush1.msra.mxu0 %v3471
        %3558 = vmatprep.subr.mxu0 0.0
        %3559 = vmatpush1.msra.mxu0 %v3472
        %3560 = vmatprep.mubr.f32.mxu0 %v2993
        %3561 = vmatmul.mubr.f32.gmra.mrb[0].mxu0 %v3185
        %v3562 = vpop.f32.mrb[0].mxu0
        %v3563 = vadd.f32 %v3494, %v3562
        %v3564 = vpop.f32.mrb[0].mxu0
        %3565 = vmatprep.mubr.f32.mxu0 %v2994
        %3566 = vmatmul.mubr.f32.gmra.mrb[0].mxu0 %v3186
        %v3567 = vpop.f32.mrb[0].mxu0
        %v3568 = vadd.f32 %v3494, %v3567
        %v3569 = vpop.f32.mrb[0].mxu0
        %3570 = vmatprep.mubr.f32.mxu0 %v2995
        %3571 = vmatmul.mubr.f32.gmra.mrb[0].mxu0 %v3187
        %v3572 = vpop.f32.mrb[0].mxu0
        %v3573 = vadd.f32 %v3494, %v3572
        %v3574 = vpop.f32.mrb[0].mxu0
        %3575 = vmatprep.mubr.f32.mxu0 %v2996
        %3576 = vmatmul.mubr.f32.gmra.mrb[0].mxu0 %v3188
        %v3577 = vpop.f32.mrb[0].mxu0
        %v3578 = vadd.f32 %v3494, %v3577
        %v3579 = vpop.f32.mrb[0].mxu0
        %3580 = vmatprep.mubr.f32.mxu0 %v2997
        %3581 = vmatmul.mubr.f32.gmra.mrb[0].mxu0 %v3189
        %v3582 = vpop.f32.mrb[0].mxu0
        %v3583 = vadd.f32 %v3494, %v3582
        %v3584 = vpop.f32.mrb[0].mxu0
        %3585 = vmatprep.mubr.f32.mxu0 %v2998
        %3586 = vmatmul.mubr.f32.gmra.mrb[0].mxu0 %v3190
        %v3587 = vpop.f32.mrb[0].mxu0
        %v3588 = vadd.f32 %v3494, %v3587
        %v3589 = vpop.f32.mrb[0].mxu0
        %3590 = vmatprep.mubr.f32.mxu0 %v2999
        %3591 = vmatmul.mubr.f32.gmra.mrb[0].mxu0 %v3191
        %v3592 = vpop.f32.mrb[0].mxu0
        %v3593 = vadd.f32 %v3494, %v3592
        %v3594 = vpop.f32.mrb[0].mxu0
        %3595 = vmatprep.mubr.f32.mxu0 %v3000
        %3596 = vmatmul.mubr.f32.gmra.mrb[0].mxu0 %v3192
        %v3597 = vpop.f32.mrb[0].mxu0
        %v3598 = vadd.f32 %v3494, %v3597
        %v3599 = vpop.f32.mrb[0].mxu0
        %3600 = vmatprep.mubr.f32.mxu0 %v3001
        %3601 = vmatmul.mubr.f32.gmra.mrb[0].mxu0 %v3193
        %v3602 = vpop.f32.mrb[0].mxu0
        %v3603 = vadd.f32 %v3494, %v3602
        %v3604 = vpop.f32.mrb[0].mxu0
        %3605 = vmatprep.mubr.f32.mxu0 %v3002
        %3606 = vmatmul.mubr.f32.gmra.mrb[0].mxu0 %v3194
        %v3607 = vpop.f32.mrb[0].mxu0
        %v3608 = vadd.f32 %v3494, %v3607
        %v3609 = vpop.f32.mrb[0].mxu0
        %3610 = vmatprep.mubr.f32.mxu0 %v3003
        %3611 = vmatmul.mubr.f32.gmra.mrb[0].mxu0 %v3195
        %v3612 = vpop.f32.mrb[0].mxu0
        %v3613 = vadd.f32 %v3494, %v3612
        %v3614 = vpop.f32.mrb[0].mxu0
        %3615 = vmatprep.mubr.f32.mxu0 %v3004
        %3616 = vmatmul.mubr.f32.gmra.mrb[0].mxu0 %v3196
        %v3617 = vpop.f32.mrb[0].mxu0
        %v3618 = vadd.f32 %v3494, %v3617
        %v3619 = vpop.f32.mrb[0].mxu0
        %3620 = vmatprep.mubr.f32.mxu0 %v3005
        %3621 = vmatmul.mubr.f32.gmra.mrb[0].mxu0 %v3197
        %v3622 = vpop.f32.mrb[0].mxu0
        %v3623 = vadd.f32 %v3494, %v3622
        %v3624 = vpop.f32.mrb[0].mxu0
        %3625 = vmatprep.mubr.f32.mxu0 %v3006
        %3626 = vmatmul.mubr.f32.gmra.mrb[0].mxu0 %v3198
        %v3627 = vpop.f32.mrb[0].mxu0
        %v3628 = vadd.f32 %v3494, %v3627
        %v3629 = vpop.f32.mrb[0].mxu0
        %3630 = vmatprep.mubr.f32.mxu0 %v3007
        %3631 = vmatmul.mubr.f32.gmra.mrb[0].mxu0 %v3199
        %v3632 = vpop.f32.mrb[0].mxu0
        %v3633 = vadd.f32 %v3494, %v3632
        %v3634 = vpop.f32.mrb[0].mxu0
        %3635 = vmatprep.mubr.f32.mxu0 %v3008
        %3636 = vmatmul.mubr.f32.gmra.mrb[0].mxu0 %v3200
        %v3637 = vpop.f32.mrb[0].mxu0
        %v3638 = vadd.f32 %v3494, %v3637
        %v3639 = vpop.f32.mrb[0].mxu0
        %3640 = vmatprep.mubr.f32.mxu0 %v3009
        %3641 = vmatmul.mubr.f32.gmra.mrb[0].mxu0 %v3201
        %v3642 = vpop.f32.mrb[0].mxu0
        %v3643 = vadd.f32 %v3494, %v3642
        %v3644 = vpop.f32.mrb[0].mxu0
        %3645 = vmatprep.mubr.f32.mxu0 %v3010
        %3646 = vmatmul.mubr.f32.gmra.mrb[0].mxu0 %v3202
        %v3647 = vpop.f32.mrb[0].mxu0
        %v3648 = vadd.f32 %v3494, %v3647
        %v3649 = vpop.f32.mrb[0].mxu0
        %3650 = vmatprep.mubr.f32.mxu0 %v3011
        %3651 = vmatmul.mubr.f32.gmra.mrb[0].mxu0 %v3203
        %v3652 = vpop.f32.mrb[0].mxu0
        %v3653 = vadd.f32 %v3494, %v3652
        %v3654 = vpop.f32.mrb[0].mxu0
        %3655 = vmatprep.mubr.f32.mxu0 %v3012
        %3656 = vmatmul.mubr.f32.gmra.mrb[0].mxu0 %v3204
        %v3657 = vpop.f32.mrb[0].mxu0
        %v3658 = vadd.f32 %v3494, %v3657
        %v3659 = vpop.f32.mrb[0].mxu0
        %3660 = vmatprep.mubr.f32.mxu0 %v3013
        %3661 = vmatmul.mubr.f32.gmra.mrb[0].mxu0 %v3205
        %v3662 = vpop.f32.mrb[0].mxu0
        %v3663 = vadd.f32 %v3494, %v3662
        %v3664 = vpop.f32.mrb[0].mxu0
        %3665 = vmatprep.mubr.f32.mxu0 %v3014
        %3666 = vmatmul.mubr.f32.gmra.mrb[0].mxu0 %v3206
        %v3667 = vpop.f32.mrb[0].mxu0
        %v3668 = vadd.f32 %v3494, %v3667
        %v3669 = vpop.f32.mrb[0].mxu0
        %3670 = vmatprep.mubr.f32.mxu0 %v3015
        %3671 = vmatmul.mubr.f32.gmra.mrb[0].mxu0 %v3207
        %v3672 = vpop.f32.mrb[0].mxu0
        %v3673 = vadd.f32 %v3494, %v3672
        %v3674 = vpop.f32.mrb[0].mxu0
        %3675 = vmatprep.mubr.f32.mxu0 %v3016
        %3676 = vmatmul.mubr.f32.gmra.mrb[0].mxu0 %v3208
        %v3677 = vpop.f32.mrb[0].mxu0
        %v3678 = vadd.f32 %v3494, %v3677
        %v3679 = vpop.f32.mrb[0].mxu0
        %3680 = vmatprep.mubr.f32.mxu0 %v3017
        %3681 = vmatmul.mubr.f32.gmra.mrb[0].mxu0 %v3209
        %v3682 = vpop.f32.mrb[0].mxu0
        %v3683 = vadd.f32 %v3494, %v3682
        %v3684 = vpop.f32.mrb[0].mxu0
        %3685 = vmatprep.mubr.f32.mxu0 %v3018
        %3686 = vmatmul.mubr.f32.gmra.mrb[0].mxu0 %v3210
        %v3687 = vpop.f32.mrb[0].mxu0
        %v3688 = vadd.f32 %v3494, %v3687
        %v3689 = vpop.f32.mrb[0].mxu0
        %3690 = vmatprep.mubr.f32.mxu0 %v3019
        %3691 = vmatmul.mubr.f32.gmra.mrb[0].mxu0 %v3211
        %v3692 = vpop.f32.mrb[0].mxu0
        %v3693 = vadd.f32 %v3494, %v3692
        %v3694 = vpop.f32.mrb[0].mxu0
        %3695 = vmatprep.mubr.f32.mxu0 %v3020
        %3696 = vmatmul.mubr.f32.gmra.mrb[0].mxu0 %v3212
        %v3697 = vpop.f32.mrb[0].mxu0
        %v3698 = vadd.f32 %v3494, %v3697
        %v3699 = vpop.f32.mrb[0].mxu0
        %3700 = vmatprep.mubr.f32.mxu0 %v3021
        %3701 = vmatmul.mubr.f32.gmra.mrb[0].mxu0 %v3213
        %v3702 = vpop.f32.mrb[0].mxu0
        %v3703 = vadd.f32 %v3494, %v3702
        %v3704 = vpop.f32.mrb[0].mxu0
        %3705 = vmatprep.mubr.f32.mxu0 %v3022
        %3706 = vmatmul.mubr.f32.gmra.mrb[0].mxu0 %v3214
        %v3707 = vpop.f32.mrb[0].mxu0
        %v3708 = vadd.f32 %v3494, %v3707
        %v3709 = vpop.f32.mrb[0].mxu0
        %3710 = vmatprep.mubr.f32.mxu0 %v3023
        %3711 = vmatmul.mubr.f32.gmra.mrb[0].mxu0 %v3215
        %v3712 = vpop.f32.mrb[0].mxu0
        %v3713 = vadd.f32 %v3494, %v3712
        %v3714 = vpop.f32.mrb[0].mxu0
        %3715 = vmatprep.mubr.f32.mxu0 %v3024
        %3716 = vmatmul.mubr.f32.gmra.mrb[0].mxu0 %v3216
        %v3717 = vpop.f32.mrb[0].mxu0
        %v3718 = vadd.f32 %v3494, %v3717
        %v3719 = vpop.f32.mrb[0].mxu0
        %3720 = vmatprep.mubr.f32.mxu0 %v3025
        %3721 = vmatmul.mubr.f32.gmra.mrb[0].mxu0 %v3217
        %v3722 = vpop.f32.mrb[0].mxu0
        %v3723 = vadd.f32 %v3494, %v3722
        %v3724 = vpop.f32.mrb[0].mxu0
        %3725 = vmatprep.mubr.f32.mxu0 %v3026
        %3726 = vmatmul.mubr.f32.gmra.mrb[0].mxu0 %v3218
        %v3727 = vpop.f32.mrb[0].mxu0
        %v3728 = vadd.f32 %v3494, %v3727
        %v3729 = vpop.f32.mrb[0].mxu0
        %3730 = vmatprep.mubr.f32.mxu0 %v3027
        %3731 = vmatmul.mubr.f32.gmra.mrb[0].mxu0 %v3219
        %v3732 = vpop.f32.mrb[0].mxu0
        %v3733 = vadd.f32 %v3494, %v3732
        %v3734 = vpop.f32.mrb[0].mxu0
        %3735 = vmatprep.mubr.f32.mxu0 %v3028
        %3736 = vmatmul.mubr.f32.gmra.mrb[0].mxu0 %v3220
        %v3737 = vpop.f32.mrb[0].mxu0
        %v3738 = vadd.f32 %v3494, %v3737
        %v3739 = vpop.f32.mrb[0].mxu0
        %3740 = vmatprep.mubr.f32.mxu0 %v3029
        %3741 = vmatmul.mubr.f32.gmra.mrb[0].mxu0 %v3221
        %v3742 = vpop.f32.mrb[0].mxu0
        %v3743 = vadd.f32 %v3494, %v3742
        %v3744 = vpop.f32.mrb[0].mxu0
        %3745 = vmatprep.mubr.f32.mxu0 %v3030
        %3746 = vmatmul.mubr.f32.gmra.mrb[0].mxu0 %v3222
        %v3747 = vpop.f32.mrb[0].mxu0
        %v3748 = vadd.f32 %v3494, %v3747
        %v3749 = vpop.f32.mrb[0].mxu0
        %3750 = vmatprep.mubr.f32.mxu0 %v3031
        %3751 = vmatmul.mubr.f32.gmra.mrb[0].mxu0 %v3223
        %v3752 = vpop.f32.mrb[0].mxu0
        %v3753 = vadd.f32 %v3494, %v3752
        %v3754 = vpop.f32.mrb[0].mxu0
        %3755 = vmatprep.mubr.f32.mxu0 %v3032
        %3756 = vmatmul.mubr.f32.gmra.mrb[0].mxu0 %v3224
        %v3757 = vpop.f32.mrb[0].mxu0
        %v3758 = vadd.f32 %v3494, %v3757
        %v3759 = vpop.f32.mrb[0].mxu0
        %3760 = vmatprep.mubr.f32.mxu0 %v3033
        %3761 = vmatmul.mubr.f32.gmra.mrb[0].mxu0 %v3225
        %v3762 = vpop.f32.mrb[0].mxu0
        %v3763 = vadd.f32 %v3494, %v3762
        %v3764 = vpop.f32.mrb[0].mxu0
        %3765 = vmatprep.mubr.f32.mxu0 %v3034
        %3766 = vmatmul.mubr.f32.gmra.mrb[0].mxu0 %v3226
        %v3767 = vpop.f32.mrb[0].mxu0
        %v3768 = vadd.f32 %v3494, %v3767
        %v3769 = vpop.f32.mrb[0].mxu0
        %3770 = vmatprep.mubr.f32.mxu0 %v3035
        %3771 = vmatmul.mubr.f32.gmra.mrb[0].mxu0 %v3227
        %v3772 = vpop.f32.mrb[0].mxu0
        %v3773 = vadd.f32 %v3494, %v3772
        %v3774 = vpop.f32.mrb[0].mxu0
        %3775 = vmatprep.mubr.f32.mxu0 %v3036
        %3776 = vmatmul.mubr.f32.gmra.mrb[0].mxu0 %v3228
        %v3777 = vpop.f32.mrb[0].mxu0
        %v3778 = vadd.f32 %v3494, %v3777
        %v3779 = vpop.f32.mrb[0].mxu0
        %3780 = vmatprep.mubr.f32.mxu0 %v3037
        %3781 = vmatmul.mubr.f32.gmra.mrb[0].mxu0 %v3229
        %v3782 = vpop.f32.mrb[0].mxu0
        %v3783 = vadd.f32 %v3494, %v3782
        %v3784 = vpop.f32.mrb[0].mxu0
        %3785 = vmatprep.mubr.f32.mxu0 %v3038
        %3786 = vmatmul.mubr.f32.gmra.mrb[0].mxu0 %v3230
        %v3787 = vpop.f32.mrb[0].mxu0
        %v3788 = vadd.f32 %v3494, %v3787
        %v3789 = vpop.f32.mrb[0].mxu0
        %3790 = vmatprep.mubr.f32.mxu0 %v3039
        %3791 = vmatmul.mubr.f32.gmra.mrb[0].mxu0 %v3231
        %v3792 = vpop.f32.mrb[0].mxu0
        %v3793 = vadd.f32 %v3494, %v3792
        %v3794 = vpop.f32.mrb[0].mxu0
        %3795 = vmatprep.mubr.f32.mxu0 %v3040
        %3796 = vmatmul.mubr.f32.gmra.mrb[0].mxu0 %v3232
        %v3797 = vpop.f32.mrb[0].mxu0
        %v3798 = vadd.f32 %v3494, %v3797
        %v3799 = vpop.f32.mrb[0].mxu0
        %3800 = vmatprep.mubr.f32.mxu0 %v3041
        %3801 = vmatmul.mubr.f32.gmra.mrb[0].mxu0 %v3233
        %v3802 = vpop.f32.mrb[0].mxu0
        %v3803 = vadd.f32 %v3494, %v3802
        %v3804 = vpop.f32.mrb[0].mxu0
        %3805 = vmatprep.mubr.f32.mxu0 %v3042
        %3806 = vmatmul.mubr.f32.gmra.mrb[0].mxu0 %v3234
        %v3807 = vpop.f32.mrb[0].mxu0
        %v3808 = vadd.f32 %v3494, %v3807
        %v3809 = vpop.f32.mrb[0].mxu0
        %3810 = vmatprep.mubr.f32.mxu0 %v3043
        %3811 = vmatmul.mubr.f32.gmra.mrb[0].mxu0 %v3235
        %v3812 = vpop.f32.mrb[0].mxu0
        %v3813 = vadd.f32 %v3494, %v3812
        %v3814 = vpop.f32.mrb[0].mxu0
        %3815 = vmatprep.mubr.f32.mxu0 %v3044
        %3816 = vmatmul.mubr.f32.gmra.mrb[0].mxu0 %v3236
        %v3817 = vpop.f32.mrb[0].mxu0
        %v3818 = vadd.f32 %v3494, %v3817
        %v3819 = vpop.f32.mrb[0].mxu0
        %3820 = vmatprep.mubr.f32.mxu0 %v3045
        %3821 = vmatmul.mubr.f32.gmra.mrb[0].mxu0 %v3237
        %v3822 = vpop.f32.mrb[0].mxu0
        %v3823 = vadd.f32 %v3494, %v3822
        %v3824 = vpop.f32.mrb[0].mxu0
        %3825 = vmatprep.mubr.f32.mxu0 %v3046
        %3826 = vmatmul.mubr.f32.gmra.mrb[0].mxu0 %v3238
        %v3827 = vpop.f32.mrb[0].mxu0
        %v3828 = vadd.f32 %v3494, %v3827
        %v3829 = vpop.f32.mrb[0].mxu0
        %3830 = vmatprep.mubr.f32.mxu0 %v3047
        %3831 = vmatmul.mubr.f32.gmra.mrb[0].mxu0 %v3239
        %v3832 = vpop.f32.mrb[0].mxu0
        %v3833 = vadd.f32 %v3494, %v3832
        %v3834 = vpop.f32.mrb[0].mxu0
        %3835 = vmatprep.mubr.f32.mxu0 %v3048
        %3836 = vmatmul.mubr.f32.gmra.mrb[0].mxu0 %v3240
        %v3837 = vpop.f32.mrb[0].mxu0
        %v3838 = vadd.f32 %v3494, %v3837
        %v3839 = vpop.f32.mrb[0].mxu0
        %3840 = vmatprep.mubr.f32.mxu0 %v3049
        %3841 = vmatmul.mubr.f32.gmra.mrb[0].mxu0 %v3241
        %v3842 = vpop.f32.mrb[0].mxu0
        %v3843 = vadd.f32 %v3494, %v3842
        %v3844 = vpop.f32.mrb[0].mxu0
        %3845 = vmatprep.mubr.f32.mxu0 %v3050
        %3846 = vmatmul.mubr.f32.gmra.mrb[0].mxu0 %v3242
        %v3847 = vpop.f32.mrb[0].mxu0
        %v3848 = vadd.f32 %v3494, %v3847
        %v3849 = vpop.f32.mrb[0].mxu0
        %3850 = vmatprep.mubr.f32.mxu0 %v3051
        %3851 = vmatmul.mubr.f32.gmra.mrb[0].mxu0 %v3243
        %v3852 = vpop.f32.mrb[0].mxu0
        %v3853 = vadd.f32 %v3494, %v3852
        %v3854 = vpop.f32.mrb[0].mxu0
        %3855 = vmatprep.mubr.f32.mxu0 %v3052
        %3856 = vmatmul.mubr.f32.gmra.mrb[0].mxu0 %v3244
        %v3857 = vpop.f32.mrb[0].mxu0
        %v3858 = vadd.f32 %v3494, %v3857
        %v3859 = vpop.f32.mrb[0].mxu0
        %3860 = vmatprep.mubr.f32.mxu0 %v3053
        %3861 = vmatmul.mubr.f32.gmra.mrb[0].mxu0 %v3245
        %v3862 = vpop.f32.mrb[0].mxu0
        %v3863 = vadd.f32 %v3494, %v3862
        %v3864 = vpop.f32.mrb[0].mxu0
        %3865 = vmatprep.mubr.f32.mxu0 %v3054
        %3866 = vmatmul.mubr.f32.gmra.mrb[0].mxu0 %v3246
        %v3867 = vpop.f32.mrb[0].mxu0
        %v3868 = vadd.f32 %v3494, %v3867
        %v3869 = vpop.f32.mrb[0].mxu0
        %3870 = vmatprep.mubr.f32.mxu0 %v3055
        %3871 = vmatmul.mubr.f32.gmra.mrb[0].mxu0 %v3247
        %v3872 = vpop.f32.mrb[0].mxu0
        %v3873 = vadd.f32 %v3494, %v3872
        %v3874 = vpop.f32.mrb[0].mxu0
        %3875 = vmatprep.mubr.f32.mxu0 %v3056
        %3876 = vmatmul.mubr.f32.gmra.mrb[0].mxu0 %v3248
        %v3877 = vpop.f32.mrb[0].mxu0
        %v3878 = vadd.f32 %v3494, %v3877
        %v3879 = vpop.f32.mrb[0].mxu0
        %3880 = vdwg.mxu0
        %3881 = vmatprep.subr.mxu0 0.0
        %3882 = vmatpush1.msra.mxu0 %v3473
        %3883 = vmatprep.subr.mxu0 0.0
        %3884 = vmatpush1.msra.mxu0 %v3474
        %3885 = vmatprep.subr.mxu0 0.0
        %3886 = vmatpush1.msra.mxu0 %v3475
        %3887 = vmatprep.subr.mxu0 0.0
        %3888 = vmatpush1.msra.mxu0 %v3476
        %3889 = vmatprep.subr.mxu0 0.0
        %3890 = vmatpush1.msra.mxu0 %v3477
        %3891 = vmatprep.subr.mxu0 0.0
        %3892 = vmatpush1.msra.mxu0 %v3478
        %3893 = vmatprep.subr.mxu0 0.0
        %3894 = vmatpush1.msra.mxu0 %v3479
        %3895 = vmatprep.subr.mxu0 0.0
        %3896 = vmatpush1.msra.mxu0 %v3480
        %3897 = vmatprep.subr.mxu0 0.0
        %3898 = vmatpush1.msra.mxu0 %v3481
        %3899 = vmatprep.subr.mxu0 0.0
        %3900 = vmatpush1.msra.mxu0 %v3482
        %3901 = vmatprep.subr.mxu0 0.0
        %3902 = vmatpush1.msra.mxu0 %v3483
        %3903 = vmatprep.subr.mxu0 0.0
        %3904 = vmatpush1.msra.mxu0 %v3484
        %3905 = vmatprep.subr.mxu0 0.0
        %3906 = vmatpush1.msra.mxu0 %v3485
        %3907 = vmatprep.subr.mxu0 0.0
        %3908 = vmatpush1.msra.mxu0 %v3486
        %3909 = vmatprep.subr.mxu0 0.0
        %3910 = vmatpush1.msra.mxu0 %v3487
        %3911 = vmatprep.subr.mxu0 0.0
        %3912 = vmatpush1.msra.mxu0 %v3488
        %3913 = vmatprep.subr.mxu0 0.0
        %3914 = vmatpush1.msra.mxu0 0.0
        %3915 = vmatprep.subr.mxu0 0.0
        %3916 = vmatpush1.msra.mxu0 0.0
        %3917 = vmatprep.subr.mxu0 0.0
        %3918 = vmatpush1.msra.mxu0 0.0
        %3919 = vmatprep.subr.mxu0 0.0
        %3920 = vmatpush1.msra.mxu0 0.0
        %3921 = vmatprep.subr.mxu0 0.0
        %3922 = vmatpush1.msra.mxu0 0.0
        %3923 = vmatprep.subr.mxu0 0.0
        %3924 = vmatpush1.msra.mxu0 0.0
        %3925 = vmatprep.subr.mxu0 0.0
        %3926 = vmatpush1.msra.mxu0 0.0
        %3927 = vmatprep.subr.mxu0 0.0
        %3928 = vmatpush1.msra.mxu0 0.0
        %3929 = vmatprep.subr.mxu0 0.0
        %3930 = vmatpush1.msra.mxu0 0.0
        %3931 = vmatprep.subr.mxu0 0.0
        %3932 = vmatpush1.msra.mxu0 0.0
        %3933 = vmatprep.subr.mxu0 0.0
        %3934 = vmatpush1.msra.mxu0 0.0
        %3935 = vmatprep.subr.mxu0 0.0
        %3936 = vmatpush1.msra.mxu0 0.0
        %3937 = vmatprep.subr.mxu0 0.0
        %3938 = vmatpush1.msra.mxu0 0.0
        %3939 = vmatprep.subr.mxu0 0.0
        %3940 = vmatpush1.msra.mxu0 0.0
        %3941 = vmatprep.subr.mxu0 0.0
        %3942 = vmatpush1.msra.mxu0 0.0
        %3943 = vmatprep.subr.mxu0 0.0
        %3944 = vmatpush1.msra.mxu0 0.0
        %3945 = vmatprep.mubr.f32.mxu0 0.0
        %3946 = vmatmul.mubr.f32.gmra.mrb[0].mxu0 %v3377
        %v3947 = vpop.f32.mrb[0].mxu0
        %v3948 = vadd.f32 %v3563, %v3947
        %v3949 = vpop.f32.mrb[0].mxu0
        %3950 = vmatprep.mubr.f32.mxu0 0.0
        %3951 = vmatmul.mubr.f32.gmra.mrb[0].mxu0 %v3378
        %v3952 = vpop.f32.mrb[0].mxu0
        %v3953 = vadd.f32 %v3568, %v3952
        %v3954 = vpop.f32.mrb[0].mxu0
        %3955 = vmatprep.mubr.f32.mxu0 0.0
        %3956 = vmatmul.mubr.f32.gmra.mrb[0].mxu0 %v3379
        %v3957 = vpop.f32.mrb[0].mxu0
        %v3958 = vadd.f32 %v3573, %v3957
        %v3959 = vpop.f32.mrb[0].mxu0
        %3960 = vmatprep.mubr.f32.mxu0 0.0
        %3961 = vmatmul.mubr.f32.gmra.mrb[0].mxu0 %v3380
        %v3962 = vpop.f32.mrb[0].mxu0
        %v3963 = vadd.f32 %v3578, %v3962
        %v3964 = vpop.f32.mrb[0].mxu0
        %3965 = vmatprep.mubr.f32.mxu0 0.0
        %3966 = vmatmul.mubr.f32.gmra.mrb[0].mxu0 %v3381
        %v3967 = vpop.f32.mrb[0].mxu0
        %v3968 = vadd.f32 %v3583, %v3967
        %v3969 = vpop.f32.mrb[0].mxu0
        %3970 = vmatprep.mubr.f32.mxu0 0.0
        %3971 = vmatmul.mubr.f32.gmra.mrb[0].mxu0 %v3382
        %v3972 = vpop.f32.mrb[0].mxu0
        %v3973 = vadd.f32 %v3588, %v3972
        %v3974 = vpop.f32.mrb[0].mxu0
        %3975 = vmatprep.mubr.f32.mxu0 0.0
        %3976 = vmatmul.mubr.f32.gmra.mrb[0].mxu0 %v3383
        %v3977 = vpop.f32.mrb[0].mxu0
        %v3978 = vadd.f32 %v3593, %v3977
        %v3979 = vpop.f32.mrb[0].mxu0
        %3980 = vmatprep.mubr.f32.mxu0 0.0
        %3981 = vmatmul.mubr.f32.gmra.mrb[0].mxu0 %v3384
        %v3982 = vpop.f32.mrb[0].mxu0
        %v3983 = vadd.f32 %v3598, %v3982
        %v3984 = vpop.f32.mrb[0].mxu0
        %3985 = vmatprep.mubr.f32.mxu0 0.0
        %3986 = vmatmul.mubr.f32.gmra.mrb[0].mxu0 %v3385
        %v3987 = vpop.f32.mrb[0].mxu0
        %v3988 = vadd.f32 %v3603, %v3987
        %v3989 = vpop.f32.mrb[0].mxu0
        %3990 = vmatprep.mubr.f32.mxu0 0.0
        %3991 = vmatmul.mubr.f32.gmra.mrb[0].mxu0 %v3386
        %v3992 = vpop.f32.mrb[0].mxu0
        %v3993 = vadd.f32 %v3608, %v3992
        %v3994 = vpop.f32.mrb[0].mxu0
        %3995 = vmatprep.mubr.f32.mxu0 0.0
        %3996 = vmatmul.mubr.f32.gmra.mrb[0].mxu0 %v3387
        %v3997 = vpop.f32.mrb[0].mxu0
        %v3998 = vadd.f32 %v3613, %v3997
        %v3999 = vpop.f32.mrb[0].mxu0
        %4000 = vmatprep.mubr.f32.mxu0 0.0
        %4001 = vmatmul.mubr.f32.gmra.mrb[0].mxu0 %v3388
        %v4002 = vpop.f32.mrb[0].mxu0
        %v4003 = vadd.f32 %v3618, %v4002
        %v4004 = vpop.f32.mrb[0].mxu0
        %4005 = vmatprep.mubr.f32.mxu0 0.0
        %4006 = vmatmul.mubr.f32.gmra.mrb[0].mxu0 %v3389
        %v4007 = vpop.f32.mrb[0].mxu0
        %v4008 = vadd.f32 %v3623, %v4007
        %v4009 = vpop.f32.mrb[0].mxu0
        %4010 = vmatprep.mubr.f32.mxu0 0.0
        %4011 = vmatmul.mubr.f32.gmra.mrb[0].mxu0 %v3390
        %v4012 = vpop.f32.mrb[0].mxu0
        %v4013 = vadd.f32 %v3628, %v4012
        %v4014 = vpop.f32.mrb[0].mxu0
        %4015 = vmatprep.mubr.f32.mxu0 0.0
        %4016 = vmatmul.mubr.f32.gmra.mrb[0].mxu0 %v3391
        %v4017 = vpop.f32.mrb[0].mxu0
        %v4018 = vadd.f32 %v3633, %v4017
        %v4019 = vpop.f32.mrb[0].mxu0
        %4020 = vmatprep.mubr.f32.mxu0 0.0
        %4021 = vmatmul.mubr.f32.gmra.mrb[0].mxu0 %v3392
        %v4022 = vpop.f32.mrb[0].mxu0
        %v4023 = vadd.f32 %v3638, %v4022
        %v4024 = vpop.f32.mrb[0].mxu0
        %4025 = vmatprep.mubr.f32.mxu0 0.0
        %4026 = vmatmul.mubr.f32.gmra.mrb[0].mxu0 %v3393
        %v4027 = vpop.f32.mrb[0].mxu0
        %v4028 = vadd.f32 %v3643, %v4027
        %v4029 = vpop.f32.mrb[0].mxu0
        %4030 = vmatprep.mubr.f32.mxu0 0.0
        %4031 = vmatmul.mubr.f32.gmra.mrb[0].mxu0 %v3394
        %v4032 = vpop.f32.mrb[0].mxu0
        %v4033 = vadd.f32 %v3648, %v4032
        %v4034 = vpop.f32.mrb[0].mxu0
        %4035 = vmatprep.mubr.f32.mxu0 0.0
        %4036 = vmatmul.mubr.f32.gmra.mrb[0].mxu0 %v3395
        %v4037 = vpop.f32.mrb[0].mxu0
        %v4038 = vadd.f32 %v3653, %v4037
        %v4039 = vpop.f32.mrb[0].mxu0
        %4040 = vmatprep.mubr.f32.mxu0 0.0
        %4041 = vmatmul.mubr.f32.gmra.mrb[0].mxu0 %v3396
        %v4042 = vpop.f32.mrb[0].mxu0
        %v4043 = vadd.f32 %v3658, %v4042
        %v4044 = vpop.f32.mrb[0].mxu0
        %4045 = vmatprep.mubr.f32.mxu0 0.0
        %4046 = vmatmul.mubr.f32.gmra.mrb[0].mxu0 %v3397
        %v4047 = vpop.f32.mrb[0].mxu0
        %v4048 = vadd.f32 %v3663, %v4047
        %v4049 = vpop.f32.mrb[0].mxu0
        %4050 = vmatprep.mubr.f32.mxu0 0.0
        %4051 = vmatmul.mubr.f32.gmra.mrb[0].mxu0 %v3398
        %v4052 = vpop.f32.mrb[0].mxu0
        %v4053 = vadd.f32 %v3668, %v4052
        %v4054 = vpop.f32.mrb[0].mxu0
        %4055 = vmatprep.mubr.f32.mxu0 0.0
        %4056 = vmatmul.mubr.f32.gmra.mrb[0].mxu0 %v3399
        %v4057 = vpop.f32.mrb[0].mxu0
        %v4058 = vadd.f32 %v3673, %v4057
        %v4059 = vpop.f32.mrb[0].mxu0
        %4060 = vmatprep.mubr.f32.mxu0 0.0
        %4061 = vmatmul.mubr.f32.gmra.mrb[0].mxu0 %v3400
        %v4062 = vpop.f32.mrb[0].mxu0
        %v4063 = vadd.f32 %v3678, %v4062
        %v4064 = vpop.f32.mrb[0].mxu0
        %4065 = vmatprep.mubr.f32.mxu0 0.0
        %4066 = vmatmul.mubr.f32.gmra.mrb[0].mxu0 %v3401
        %v4067 = vpop.f32.mrb[0].mxu0
        %v4068 = vadd.f32 %v3683, %v4067
        %v4069 = vpop.f32.mrb[0].mxu0
        %4070 = vmatprep.mubr.f32.mxu0 0.0
        %4071 = vmatmul.mubr.f32.gmra.mrb[0].mxu0 %v3402
        %v4072 = vpop.f32.mrb[0].mxu0
        %v4073 = vadd.f32 %v3688, %v4072
        %v4074 = vpop.f32.mrb[0].mxu0
        %4075 = vmatprep.mubr.f32.mxu0 0.0
        %4076 = vmatmul.mubr.f32.gmra.mrb[0].mxu0 %v3403
        %v4077 = vpop.f32.mrb[0].mxu0
        %v4078 = vadd.f32 %v3693, %v4077
        %v4079 = vpop.f32.mrb[0].mxu0
        %4080 = vmatprep.mubr.f32.mxu0 0.0
        %4081 = vmatmul.mubr.f32.gmra.mrb[0].mxu0 %v3404
        %v4082 = vpop.f32.mrb[0].mxu0
        %v4083 = vadd.f32 %v3698, %v4082
        %v4084 = vpop.f32.mrb[0].mxu0
        %4085 = vmatprep.mubr.f32.mxu0 0.0
        %4086 = vmatmul.mubr.f32.gmra.mrb[0].mxu0 %v3405
        %v4087 = vpop.f32.mrb[0].mxu0
        %v4088 = vadd.f32 %v3703, %v4087
        %v4089 = vpop.f32.mrb[0].mxu0
        %4090 = vmatprep.mubr.f32.mxu0 0.0
        %4091 = vmatmul.mubr.f32.gmra.mrb[0].mxu0 %v3406
        %v4092 = vpop.f32.mrb[0].mxu0
        %v4093 = vadd.f32 %v3708, %v4092
        %v4094 = vpop.f32.mrb[0].mxu0
        %4095 = vmatprep.mubr.f32.mxu0 0.0
        %4096 = vmatmul.mubr.f32.gmra.mrb[0].mxu0 %v3407
        %v4097 = vpop.f32.mrb[0].mxu0
        %v4098 = vadd.f32 %v3713, %v4097
        %v4099 = vpop.f32.mrb[0].mxu0
        %4100 = vmatprep.mubr.f32.mxu0 0.0
        %4101 = vmatmul.mubr.f32.gmra.mrb[0].mxu0 %v3408
        %v4102 = vpop.f32.mrb[0].mxu0
        %v4103 = vadd.f32 %v3718, %v4102
        %v4104 = vpop.f32.mrb[0].mxu0
        %4105 = vmatprep.mubr.f32.mxu0 0.0
        %4106 = vmatmul.mubr.f32.gmra.mrb[0].mxu0 %v3409
        %v4107 = vpop.f32.mrb[0].mxu0
        %v4108 = vadd.f32 %v3723, %v4107
        %v4109 = vpop.f32.mrb[0].mxu0
        %4110 = vmatprep.mubr.f32.mxu0 0.0
        %4111 = vmatmul.mubr.f32.gmra.mrb[0].mxu0 %v3410
        %v4112 = vpop.f32.mrb[0].mxu0
        %v4113 = vadd.f32 %v3728, %v4112
        %v4114 = vpop.f32.mrb[0].mxu0
        %4115 = vmatprep.mubr.f32.mxu0 0.0
        %4116 = vmatmul.mubr.f32.gmra.mrb[0].mxu0 %v3411
        %v4117 = vpop.f32.mrb[0].mxu0
        %v4118 = vadd.f32 %v3733, %v4117
        %v4119 = vpop.f32.mrb[0].mxu0
        %4120 = vmatprep.mubr.f32.mxu0 0.0
        %4121 = vmatmul.mubr.f32.gmra.mrb[0].mxu0 %v3412
        %v4122 = vpop.f32.mrb[0].mxu0
        %v4123 = vadd.f32 %v3738, %v4122
        %v4124 = vpop.f32.mrb[0].mxu0
        %4125 = vmatprep.mubr.f32.mxu0 0.0
        %4126 = vmatmul.mubr.f32.gmra.mrb[0].mxu0 %v3413
        %v4127 = vpop.f32.mrb[0].mxu0
        %v4128 = vadd.f32 %v3743, %v4127
        %v4129 = vpop.f32.mrb[0].mxu0
        %4130 = vmatprep.mubr.f32.mxu0 0.0
        %4131 = vmatmul.mubr.f32.gmra.mrb[0].mxu0 %v3414
        %v4132 = vpop.f32.mrb[0].mxu0
        %v4133 = vadd.f32 %v3748, %v4132
        %v4134 = vpop.f32.mrb[0].mxu0
        %4135 = vmatprep.mubr.f32.mxu0 0.0
        %4136 = vmatmul.mubr.f32.gmra.mrb[0].mxu0 %v3415
        %v4137 = vpop.f32.mrb[0].mxu0
        %v4138 = vadd.f32 %v3753, %v4137
        %v4139 = vpop.f32.mrb[0].mxu0
        %4140 = vmatprep.mubr.f32.mxu0 0.0
        %4141 = vmatmul.mubr.f32.gmra.mrb[0].mxu0 %v3416
        %v4142 = vpop.f32.mrb[0].mxu0
        %v4143 = vadd.f32 %v3758, %v4142
        %v4144 = vpop.f32.mrb[0].mxu0
        %4145 = vmatprep.mubr.f32.mxu0 0.0
        %4146 = vmatmul.mubr.f32.gmra.mrb[0].mxu0 %v3417
        %v4147 = vpop.f32.mrb[0].mxu0
        %v4148 = vadd.f32 %v3763, %v4147
        %v4149 = vpop.f32.mrb[0].mxu0
        %4150 = vmatprep.mubr.f32.mxu0 0.0
        %4151 = vmatmul.mubr.f32.gmra.mrb[0].mxu0 %v3418
        %v4152 = vpop.f32.mrb[0].mxu0
        %v4153 = vadd.f32 %v3768, %v4152
        %v4154 = vpop.f32.mrb[0].mxu0
        %4155 = vmatprep.mubr.f32.mxu0 0.0
        %4156 = vmatmul.mubr.f32.gmra.mrb[0].mxu0 %v3419
        %v4157 = vpop.f32.mrb[0].mxu0
        %v4158 = vadd.f32 %v3773, %v4157
        %v4159 = vpop.f32.mrb[0].mxu0
        %4160 = vmatprep.mubr.f32.mxu0 0.0
        %4161 = vmatmul.mubr.f32.gmra.mrb[0].mxu0 %v3420
        %v4162 = vpop.f32.mrb[0].mxu0
        %v4163 = vadd.f32 %v3778, %v4162
        %v4164 = vpop.f32.mrb[0].mxu0
        %4165 = vmatprep.mubr.f32.mxu0 0.0
        %4166 = vmatmul.mubr.f32.gmra.mrb[0].mxu0 %v3421
        %v4167 = vpop.f32.mrb[0].mxu0
        %v4168 = vadd.f32 %v3783, %v4167
        %v4169 = vpop.f32.mrb[0].mxu0
        %4170 = vmatprep.mubr.f32.mxu0 0.0
        %4171 = vmatmul.mubr.f32.gmra.mrb[0].mxu0 %v3422
        %v4172 = vpop.f32.mrb[0].mxu0
        %v4173 = vadd.f32 %v3788, %v4172
        %v4174 = vpop.f32.mrb[0].mxu0
        %4175 = vmatprep.mubr.f32.mxu0 0.0
        %4176 = vmatmul.mubr.f32.gmra.mrb[0].mxu0 %v3423
        %v4177 = vpop.f32.mrb[0].mxu0
        %v4178 = vadd.f32 %v3793, %v4177
        %v4179 = vpop.f32.mrb[0].mxu0
        %4180 = vmatprep.mubr.f32.mxu0 0.0
        %4181 = vmatmul.mubr.f32.gmra.mrb[0].mxu0 %v3424
        %v4182 = vpop.f32.mrb[0].mxu0
        %v4183 = vadd.f32 %v3798, %v4182
        %v4184 = vpop.f32.mrb[0].mxu0
        %4185 = vmatprep.mubr.f32.mxu0 0.0
        %4186 = vmatmul.mubr.f32.gmra.mrb[0].mxu0 %v3425
        %v4187 = vpop.f32.mrb[0].mxu0
        %v4188 = vadd.f32 %v3803, %v4187
        %v4189 = vpop.f32.mrb[0].mxu0
        %4190 = vmatprep.mubr.f32.mxu0 0.0
        %4191 = vmatmul.mubr.f32.gmra.mrb[0].mxu0 %v3426
        %v4192 = vpop.f32.mrb[0].mxu0
        %v4193 = vadd.f32 %v3808, %v4192
        %v4194 = vpop.f32.mrb[0].mxu0
        %4195 = vmatprep.mubr.f32.mxu0 0.0
        %4196 = vmatmul.mubr.f32.gmra.mrb[0].mxu0 %v3427
        %v4197 = vpop.f32.mrb[0].mxu0
        %v4198 = vadd.f32 %v3813, %v4197
        %v4199 = vpop.f32.mrb[0].mxu0
        %4200 = vmatprep.mubr.f32.mxu0 0.0
        %4201 = vmatmul.mubr.f32.gmra.mrb[0].mxu0 %v3428
        %v4202 = vpop.f32.mrb[0].mxu0
        %v4203 = vadd.f32 %v3818, %v4202
        %v4204 = vpop.f32.mrb[0].mxu0
        %4205 = vmatprep.mubr.f32.mxu0 0.0
        %4206 = vmatmul.mubr.f32.gmra.mrb[0].mxu0 %v3429
        %v4207 = vpop.f32.mrb[0].mxu0
        %v4208 = vadd.f32 %v3823, %v4207
        %v4209 = vpop.f32.mrb[0].mxu0
        %4210 = vmatprep.mubr.f32.mxu0 0.0
        %4211 = vmatmul.mubr.f32.gmra.mrb[0].mxu0 %v3430
        %v4212 = vpop.f32.mrb[0].mxu0
        %v4213 = vadd.f32 %v3828, %v4212
        %v4214 = vpop.f32.mrb[0].mxu0
        %4215 = vmatprep.mubr.f32.mxu0 0.0
        %4216 = vmatmul.mubr.f32.gmra.mrb[0].mxu0 %v3431
        %v4217 = vpop.f32.mrb[0].mxu0
        %v4218 = vadd.f32 %v3833, %v4217
        %v4219 = vpop.f32.mrb[0].mxu0
        %4220 = vmatprep.mubr.f32.mxu0 0.0
        %4221 = vmatmul.mubr.f32.gmra.mrb[0].mxu0 %v3432
        %v4222 = vpop.f32.mrb[0].mxu0
        %v4223 = vadd.f32 %v3838, %v4222
        %v4224 = vpop.f32.mrb[0].mxu0
        %4225 = vmatprep.mubr.f32.mxu0 0.0
        %4226 = vmatmul.mubr.f32.gmra.mrb[0].mxu0 %v3433
        %v4227 = vpop.f32.mrb[0].mxu0
        %v4228 = vadd.f32 %v3843, %v4227
        %v4229 = vpop.f32.mrb[0].mxu0
        %4230 = vmatprep.mubr.f32.mxu0 0.0
        %4231 = vmatmul.mubr.f32.gmra.mrb[0].mxu0 %v3434
        %v4232 = vpop.f32.mrb[0].mxu0
        %v4233 = vadd.f32 %v3848, %v4232
        %v4234 = vpop.f32.mrb[0].mxu0
        %4235 = vmatprep.mubr.f32.mxu0 0.0
        %4236 = vmatmul.mubr.f32.gmra.mrb[0].mxu0 %v3435
        %v4237 = vpop.f32.mrb[0].mxu0
        %v4238 = vadd.f32 %v3853, %v4237
        %v4239 = vpop.f32.mrb[0].mxu0
        %4240 = vmatprep.mubr.f32.mxu0 0.0
        %4241 = vmatmul.mubr.f32.gmra.mrb[0].mxu0 %v3436
        %v4242 = vpop.f32.mrb[0].mxu0
        %v4243 = vadd.f32 %v3858, %v4242
        %v4244 = vpop.f32.mrb[0].mxu0
        %4245 = vmatprep.mubr.f32.mxu0 0.0
        %4246 = vmatmul.mubr.f32.gmra.mrb[0].mxu0 %v3437
        %v4247 = vpop.f32.mrb[0].mxu0
        %v4248 = vadd.f32 %v3863, %v4247
        %v4249 = vpop.f32.mrb[0].mxu0
        %4250 = vmatprep.mubr.f32.mxu0 0.0
        %4251 = vmatmul.mubr.f32.gmra.mrb[0].mxu0 %v3438
        %v4252 = vpop.f32.mrb[0].mxu0
        %v4253 = vadd.f32 %v3868, %v4252
        %v4254 = vpop.f32.mrb[0].mxu0
        %4255 = vmatprep.mubr.f32.mxu0 0.0
        %4256 = vmatmul.mubr.f32.gmra.mrb[0].mxu0 %v3439
        %v4257 = vpop.f32.mrb[0].mxu0
        %v4258 = vadd.f32 %v3873, %v4257
        %v4259 = vpop.f32.mrb[0].mxu0
        %4260 = vmatprep.mubr.f32.mxu0 0.0
        %4261 = vmatmul.mubr.f32.gmra.mrb[0].mxu0 %v3440
        %v4262 = vpop.f32.mrb[0].mxu0
        %v4263 = vadd.f32 %v3878, %v4262
        %v4264 = vpop.f32.mrb[0].mxu0
        %4265 = vdwg.mxu0
        %v4266 = vadd.f32 %v3948, %v302
        %v4267 = vadd.f32 %v3953, %v303
        %v4268 = vadd.f32 %v3958, %v304
        %v4269 = vadd.f32 %v3963, %v305
        %v4270 = vadd.f32 %v3968, %v306
        %v4271 = vadd.f32 %v3973, %v307
        %v4272 = vadd.f32 %v3978, %v308
        %v4273 = vadd.f32 %v3983, %v309
        %v4274 = vadd.f32 %v3988, %v310
        %v4275 = vadd.f32 %v3993, %v311
        %v4276 = vadd.f32 %v3998, %v312
        %v4277 = vadd.f32 %v4003, %v313
        %v4278 = vadd.f32 %v4008, %v314
        %v4279 = vadd.f32 %v4013, %v315
        %v4280 = vadd.f32 %v4018, %v316
        %v4281 = vadd.f32 %v4023, %v317
        %v4282 = vadd.f32 %v4028, %v318
        %v4283 = vadd.f32 %v4033, %v319
        %v4284 = vadd.f32 %v4038, %v320
        %v4285 = vadd.f32 %v4043, %v321
        %v4286 = vadd.f32 %v4048, %v322
        %v4287 = vadd.f32 %v4053, %v323
        %v4288 = vadd.f32 %v4058, %v324
        %v4289 = vadd.f32 %v4063, %v325
        %v4290 = vadd.f32 %v4068, %v326
        %v4291 = vadd.f32 %v4073, %v327
        %v4292 = vadd.f32 %v4078, %v328
        %v4293 = vadd.f32 %v4083, %v329
        %v4294 = vadd.f32 %v4088, %v330
        %v4295 = vadd.f32 %v4093, %v331
        %v4296 = vadd.f32 %v4098, %v332
        %v4297 = vadd.f32 %v4103, %v333
        %v4298 = vadd.f32 %v4108, %v334
        %v4299 = vadd.f32 %v4113, %v335
        %v4300 = vadd.f32 %v4118, %v336
        %v4301 = vadd.f32 %v4123, %v337
        %v4302 = vadd.f32 %v4128, %v338
        %v4303 = vadd.f32 %v4133, %v339
        %v4304 = vadd.f32 %v4138, %v340
        %v4305 = vadd.f32 %v4143, %v341
        %v4306 = vadd.f32 %v4148, %v342
        %v4307 = vadd.f32 %v4153, %v343
        %v4308 = vadd.f32 %v4158, %v344
        %v4309 = vadd.f32 %v4163, %v345
        %v4310 = vadd.f32 %v4168, %v346
        %v4311 = vadd.f32 %v4173, %v347
        %v4312 = vadd.f32 %v4178, %v348
        %v4313 = vadd.f32 %v4183, %v349
        %v4314 = vadd.f32 %v4188, %v350
        %v4315 = vadd.f32 %v4193, %v351
        %v4316 = vadd.f32 %v4198, %v352
        %v4317 = vadd.f32 %v4203, %v353
        %v4318 = vadd.f32 %v4208, %v354
        %v4319 = vadd.f32 %v4213, %v355
        %v4320 = vadd.f32 %v4218, %v356
        %v4321 = vadd.f32 %v4223, %v357
        %v4322 = vadd.f32 %v4228, %v358
        %v4323 = vadd.f32 %v4233, %v359
        %v4324 = vadd.f32 %v4238, %v360
        %v4325 = vadd.f32 %v4243, %v361
        %v4326 = vadd.f32 %v4248, %v362
        %v4327 = vadd.f32 %v4253, %v363
        %v4328 = vadd.f32 %v4258, %v364
        %v4329 = vadd.f32 %v4263, %v365
        %v4330 = vmax.f32 %v4266, 0.0
        %v4331 = vmax.f32 %v4267, 0.0
        %v4332 = vmax.f32 %v4268, 0.0
        %v4333 = vmax.f32 %v4269, 0.0
        %v4334 = vmax.f32 %v4270, 0.0
        %v4335 = vmax.f32 %v4271, 0.0
        %v4336 = vmax.f32 %v4272, 0.0
        %v4337 = vmax.f32 %v4273, 0.0
        %v4338 = vmax.f32 %v4274, 0.0
        %v4339 = vmax.f32 %v4275, 0.0
        %v4340 = vmax.f32 %v4276, 0.0
        %v4341 = vmax.f32 %v4277, 0.0
        %v4342 = vmax.f32 %v4278, 0.0
        %v4343 = vmax.f32 %v4279, 0.0
        %v4344 = vmax.f32 %v4280, 0.0
        %v4345 = vmax.f32 %v4281, 0.0
        %v4346 = vmax.f32 %v4282, 0.0
        %v4347 = vmax.f32 %v4283, 0.0
        %v4348 = vmax.f32 %v4284, 0.0
        %v4349 = vmax.f32 %v4285, 0.0
        %v4350 = vmax.f32 %v4286, 0.0
        %v4351 = vmax.f32 %v4287, 0.0
        %v4352 = vmax.f32 %v4288, 0.0
        %v4353 = vmax.f32 %v4289, 0.0
        %v4354 = vmax.f32 %v4290, 0.0
        %v4355 = vmax.f32 %v4291, 0.0
        %v4356 = vmax.f32 %v4292, 0.0
        %v4357 = vmax.f32 %v4293, 0.0
        %v4358 = vmax.f32 %v4294, 0.0
        %v4359 = vmax.f32 %v4295, 0.0
        %v4360 = vmax.f32 %v4296, 0.0
        %v4361 = vmax.f32 %v4297, 0.0
        %v4362 = vmax.f32 %v4298, 0.0
        %v4363 = vmax.f32 %v4299, 0.0
        %v4364 = vmax.f32 %v4300, 0.0
        %v4365 = vmax.f32 %v4301, 0.0
        %v4366 = vmax.f32 %v4302, 0.0
        %v4367 = vmax.f32 %v4303, 0.0
        %v4368 = vmax.f32 %v4304, 0.0
        %v4369 = vmax.f32 %v4305, 0.0
        %v4370 = vmax.f32 %v4306, 0.0
        %v4371 = vmax.f32 %v4307, 0.0
        %v4372 = vmax.f32 %v4308, 0.0
        %v4373 = vmax.f32 %v4309, 0.0
        %v4374 = vmax.f32 %v4310, 0.0
        %v4375 = vmax.f32 %v4311, 0.0
        %v4376 = vmax.f32 %v4312, 0.0
        %v4377 = vmax.f32 %v4313, 0.0
        %v4378 = vmax.f32 %v4314, 0.0
        %v4379 = vmax.f32 %v4315, 0.0
        %v4380 = vmax.f32 %v4316, 0.0
        %v4381 = vmax.f32 %v4317, 0.0
        %v4382 = vmax.f32 %v4318, 0.0
        %v4383 = vmax.f32 %v4319, 0.0
        %v4384 = vmax.f32 %v4320, 0.0
        %v4385 = vmax.f32 %v4321, 0.0
        %v4386 = vmax.f32 %v4322, 0.0
        %v4387 = vmax.f32 %v4323, 0.0
        %v4388 = vmax.f32 %v4324, 0.0
        %v4389 = vmax.f32 %v4325, 0.0
        %v4390 = vmax.f32 %v4326, 0.0
        %v4391 = vmax.f32 %v4327, 0.0
        %v4392 = vmax.f32 %v4328, 0.0
        %v4393 = vmax.f32 %v4329, 0.0
        %v4394 = vmin.f32 %v4330, 1.0
        %v4395 = vmin.f32 %v4331, 1.0
        %v4396 = vmin.f32 %v4332, 1.0
        %v4397 = vmin.f32 %v4333, 1.0
        %v4398 = vmin.f32 %v4334, 1.0
        %v4399 = vmin.f32 %v4335, 1.0
        %v4400 = vmin.f32 %v4336, 1.0
        %v4401 = vmin.f32 %v4337, 1.0
        %v4402 = vmin.f32 %v4338, 1.0
        %v4403 = vmin.f32 %v4339, 1.0
        %v4404 = vmin.f32 %v4340, 1.0
        %v4405 = vmin.f32 %v4341, 1.0
        %v4406 = vmin.f32 %v4342, 1.0
        %v4407 = vmin.f32 %v4343, 1.0
        %v4408 = vmin.f32 %v4344, 1.0
        %v4409 = vmin.f32 %v4345, 1.0
        %v4410 = vmin.f32 %v4346, 1.0
        %v4411 = vmin.f32 %v4347, 1.0
        %v4412 = vmin.f32 %v4348, 1.0
        %v4413 = vmin.f32 %v4349, 1.0
        %v4414 = vmin.f32 %v4350, 1.0
        %v4415 = vmin.f32 %v4351, 1.0
        %v4416 = vmin.f32 %v4352, 1.0
        %v4417 = vmin.f32 %v4353, 1.0
        %v4418 = vmin.f32 %v4354, 1.0
        %v4419 = vmin.f32 %v4355, 1.0
        %v4420 = vmin.f32 %v4356, 1.0
        %v4421 = vmin.f32 %v4357, 1.0
        %v4422 = vmin.f32 %v4358, 1.0
        %v4423 = vmin.f32 %v4359, 1.0
        %v4424 = vmin.f32 %v4360, 1.0
        %v4425 = vmin.f32 %v4361, 1.0
        %v4426 = vmin.f32 %v4362, 1.0
        %v4427 = vmin.f32 %v4363, 1.0
        %v4428 = vmin.f32 %v4364, 1.0
        %v4429 = vmin.f32 %v4365, 1.0
        %v4430 = vmin.f32 %v4366, 1.0
        %v4431 = vmin.f32 %v4367, 1.0
        %v4432 = vmin.f32 %v4368, 1.0
        %v4433 = vmin.f32 %v4369, 1.0
        %v4434 = vmin.f32 %v4370, 1.0
        %v4435 = vmin.f32 %v4371, 1.0
        %v4436 = vmin.f32 %v4372, 1.0
        %v4437 = vmin.f32 %v4373, 1.0
        %v4438 = vmin.f32 %v4374, 1.0
        %v4439 = vmin.f32 %v4375, 1.0
        %v4440 = vmin.f32 %v4376, 1.0
        %v4441 = vmin.f32 %v4377, 1.0
        %v4442 = vmin.f32 %v4378, 1.0
        %v4443 = vmin.f32 %v4379, 1.0
        %v4444 = vmin.f32 %v4380, 1.0
        %v4445 = vmin.f32 %v4381, 1.0
        %v4446 = vmin.f32 %v4382, 1.0
        %v4447 = vmin.f32 %v4383, 1.0
        %v4448 = vmin.f32 %v4384, 1.0
        %v4449 = vmin.f32 %v4385, 1.0
        %v4450 = vmin.f32 %v4386, 1.0
        %v4451 = vmin.f32 %v4387, 1.0
        %v4452 = vmin.f32 %v4388, 1.0
        %v4453 = vmin.f32 %v4389, 1.0
        %v4454 = vmin.f32 %v4390, 1.0
        %v4455 = vmin.f32 %v4391, 1.0
        %v4456 = vmin.f32 %v4392, 1.0
        %v4457 = vmin.f32 %v4393, 1.0
        %v4458 = vmul.f32 %v4394, 15.0
        %v4459 = vmul.f32 %v4395, 15.0
        %v4460 = vmul.f32 %v4396, 15.0
        %v4461 = vmul.f32 %v4397, 15.0
        %v4462 = vmul.f32 %v4398, 15.0
        %v4463 = vmul.f32 %v4399, 15.0
        %v4464 = vmul.f32 %v4400, 15.0
        %v4465 = vmul.f32 %v4401, 15.0
        %v4466 = vmul.f32 %v4402, 15.0
        %v4467 = vmul.f32 %v4403, 15.0
        %v4468 = vmul.f32 %v4404, 15.0
        %v4469 = vmul.f32 %v4405, 15.0
        %v4470 = vmul.f32 %v4406, 15.0
        %v4471 = vmul.f32 %v4407, 15.0
        %v4472 = vmul.f32 %v4408, 15.0
        %v4473 = vmul.f32 %v4409, 15.0
        %v4474 = vmul.f32 %v4410, 15.0
        %v4475 = vmul.f32 %v4411, 15.0
        %v4476 = vmul.f32 %v4412, 15.0
        %v4477 = vmul.f32 %v4413, 15.0
        %v4478 = vmul.f32 %v4414, 15.0
        %v4479 = vmul.f32 %v4415, 15.0
        %v4480 = vmul.f32 %v4416, 15.0
        %v4481 = vmul.f32 %v4417, 15.0
        %v4482 = vmul.f32 %v4418, 15.0
        %v4483 = vmul.f32 %v4419, 15.0
        %v4484 = vmul.f32 %v4420, 15.0
        %v4485 = vmul.f32 %v4421, 15.0
        %v4486 = vmul.f32 %v4422, 15.0
        %v4487 = vmul.f32 %v4423, 15.0
        %v4488 = vmul.f32 %v4424, 15.0
        %v4489 = vmul.f32 %v4425, 15.0
        %v4490 = vmul.f32 %v4426, 15.0
        %v4491 = vmul.f32 %v4427, 15.0
        %v4492 = vmul.f32 %v4428, 15.0
        %v4493 = vmul.f32 %v4429, 15.0
        %v4494 = vmul.f32 %v4430, 15.0
        %v4495 = vmul.f32 %v4431, 15.0
        %v4496 = vmul.f32 %v4432, 15.0
        %v4497 = vmul.f32 %v4433, 15.0
        %v4498 = vmul.f32 %v4434, 15.0
        %v4499 = vmul.f32 %v4435, 15.0
        %v4500 = vmul.f32 %v4436, 15.0
        %v4501 = vmul.f32 %v4437, 15.0
        %v4502 = vmul.f32 %v4438, 15.0
        %v4503 = vmul.f32 %v4439, 15.0
        %v4504 = vmul.f32 %v4440, 15.0
        %v4505 = vmul.f32 %v4441, 15.0
        %v4506 = vmul.f32 %v4442, 15.0
        %v4507 = vmul.f32 %v4443, 15.0
        %v4508 = vmul.f32 %v4444, 15.0
        %v4509 = vmul.f32 %v4445, 15.0
        %v4510 = vmul.f32 %v4446, 15.0
        %v4511 = vmul.f32 %v4447, 15.0
        %v4512 = vmul.f32 %v4448, 15.0
        %v4513 = vmul.f32 %v4449, 15.0
        %v4514 = vmul.f32 %v4450, 15.0
        %v4515 = vmul.f32 %v4451, 15.0
        %v4516 = vmul.f32 %v4452, 15.0
        %v4517 = vmul.f32 %v4453, 15.0
        %v4518 = vmul.f32 %v4454, 15.0
        %v4519 = vmul.f32 %v4455, 15.0
        %v4520 = vmul.f32 %v4456, 15.0
        %v4521 = vmul.f32 %v4457, 15.0
        %v4522 = vadd.f32 %v4458, 0.5
        %v4523 = vadd.f32 %v4459, 0.5
        %v4524 = vadd.f32 %v4460, 0.5
        %v4525 = vadd.f32 %v4461, 0.5
        %v4526 = vadd.f32 %v4462, 0.5
        %v4527 = vadd.f32 %v4463, 0.5
        %v4528 = vadd.f32 %v4464, 0.5
        %v4529 = vadd.f32 %v4465, 0.5
        %v4530 = vadd.f32 %v4466, 0.5
        %v4531 = vadd.f32 %v4467, 0.5
        %v4532 = vadd.f32 %v4468, 0.5
        %v4533 = vadd.f32 %v4469, 0.5
        %v4534 = vadd.f32 %v4470, 0.5
        %v4535 = vadd.f32 %v4471, 0.5
        %v4536 = vadd.f32 %v4472, 0.5
        %v4537 = vadd.f32 %v4473, 0.5
        %v4538 = vadd.f32 %v4474, 0.5
        %v4539 = vadd.f32 %v4475, 0.5
        %v4540 = vadd.f32 %v4476, 0.5
        %v4541 = vadd.f32 %v4477, 0.5
        %v4542 = vadd.f32 %v4478, 0.5
        %v4543 = vadd.f32 %v4479, 0.5
        %v4544 = vadd.f32 %v4480, 0.5
        %v4545 = vadd.f32 %v4481, 0.5
        %v4546 = vadd.f32 %v4482, 0.5
        %v4547 = vadd.f32 %v4483, 0.5
        %v4548 = vadd.f32 %v4484, 0.5
        %v4549 = vadd.f32 %v4485, 0.5
        %v4550 = vadd.f32 %v4486, 0.5
        %v4551 = vadd.f32 %v4487, 0.5
        %v4552 = vadd.f32 %v4488, 0.5
        %v4553 = vadd.f32 %v4489, 0.5
        %v4554 = vadd.f32 %v4490, 0.5
        %v4555 = vadd.f32 %v4491, 0.5
        %v4556 = vadd.f32 %v4492, 0.5
        %v4557 = vadd.f32 %v4493, 0.5
        %v4558 = vadd.f32 %v4494, 0.5
        %v4559 = vadd.f32 %v4495, 0.5
        %v4560 = vadd.f32 %v4496, 0.5
        %v4561 = vadd.f32 %v4497, 0.5
        %v4562 = vadd.f32 %v4498, 0.5
        %v4563 = vadd.f32 %v4499, 0.5
        %v4564 = vadd.f32 %v4500, 0.5
        %v4565 = vadd.f32 %v4501, 0.5
        %v4566 = vadd.f32 %v4502, 0.5
        %v4567 = vadd.f32 %v4503, 0.5
        %v4568 = vadd.f32 %v4504, 0.5
        %v4569 = vadd.f32 %v4505, 0.5
        %v4570 = vadd.f32 %v4506, 0.5
        %v4571 = vadd.f32 %v4507, 0.5
        %v4572 = vadd.f32 %v4508, 0.5
        %v4573 = vadd.f32 %v4509, 0.5
        %v4574 = vadd.f32 %v4510, 0.5
        %v4575 = vadd.f32 %v4511, 0.5
        %v4576 = vadd.f32 %v4512, 0.5
        %v4577 = vadd.f32 %v4513, 0.5
        %v4578 = vadd.f32 %v4514, 0.5
        %v4579 = vadd.f32 %v4515, 0.5
        %v4580 = vadd.f32 %v4516, 0.5
        %v4581 = vadd.f32 %v4517, 0.5
        %v4582 = vadd.f32 %v4518, 0.5
        %v4583 = vadd.f32 %v4519, 0.5
        %v4584 = vadd.f32 %v4520, 0.5
        %v4585 = vadd.f32 %v4521, 0.5
        %v4586 = vfloor.f32 %v4522
        %v4587 = vfloor.f32 %v4523
        %v4588 = vfloor.f32 %v4524
        %v4589 = vfloor.f32 %v4525
        %v4590 = vfloor.f32 %v4526
        %v4591 = vfloor.f32 %v4527
        %v4592 = vfloor.f32 %v4528
        %v4593 = vfloor.f32 %v4529
        %v4594 = vfloor.f32 %v4530
        %v4595 = vfloor.f32 %v4531
        %v4596 = vfloor.f32 %v4532
        %v4597 = vfloor.f32 %v4533
        %v4598 = vfloor.f32 %v4534
        %v4599 = vfloor.f32 %v4535
        %v4600 = vfloor.f32 %v4536
        %v4601 = vfloor.f32 %v4537
        %v4602 = vfloor.f32 %v4538
        %v4603 = vfloor.f32 %v4539
        %v4604 = vfloor.f32 %v4540
        %v4605 = vfloor.f32 %v4541
        %v4606 = vfloor.f32 %v4542
        %v4607 = vfloor.f32 %v4543
        %v4608 = vfloor.f32 %v4544
        %v4609 = vfloor.f32 %v4545
        %v4610 = vfloor.f32 %v4546
        %v4611 = vfloor.f32 %v4547
        %v4612 = vfloor.f32 %v4548
        %v4613 = vfloor.f32 %v4549
        %v4614 = vfloor.f32 %v4550
        %v4615 = vfloor.f32 %v4551
        %v4616 = vfloor.f32 %v4552
        %v4617 = vfloor.f32 %v4553
        %v4618 = vfloor.f32 %v4554
        %v4619 = vfloor.f32 %v4555
        %v4620 = vfloor.f32 %v4556
        %v4621 = vfloor.f32 %v4557
        %v4622 = vfloor.f32 %v4558
        %v4623 = vfloor.f32 %v4559
        %v4624 = vfloor.f32 %v4560
        %v4625 = vfloor.f32 %v4561
        %v4626 = vfloor.f32 %v4562
        %v4627 = vfloor.f32 %v4563
        %v4628 = vfloor.f32 %v4564
        %v4629 = vfloor.f32 %v4565
        %v4630 = vfloor.f32 %v4566
        %v4631 = vfloor.f32 %v4567
        %v4632 = vfloor.f32 %v4568
        %v4633 = vfloor.f32 %v4569
        %v4634 = vfloor.f32 %v4570
        %v4635 = vfloor.f32 %v4571
        %v4636 = vfloor.f32 %v4572
        %v4637 = vfloor.f32 %v4573
        %v4638 = vfloor.f32 %v4574
        %v4639 = vfloor.f32 %v4575
        %v4640 = vfloor.f32 %v4576
        %v4641 = vfloor.f32 %v4577
        %v4642 = vfloor.f32 %v4578
        %v4643 = vfloor.f32 %v4579
        %v4644 = vfloor.f32 %v4580
        %v4645 = vfloor.f32 %v4581
        %v4646 = vfloor.f32 %v4582
        %v4647 = vfloor.f32 %v4583
        %v4648 = vfloor.f32 %v4584
        %v4649 = vfloor.f32 %v4585
        %v4650 = vmul.f32 %v4586, 0.06666667
        %v4651 = vmul.f32 %v4587, 0.06666667
        %v4652 = vmul.f32 %v4588, 0.06666667
        %v4653 = vmul.f32 %v4589, 0.06666667
        %v4654 = vmul.f32 %v4590, 0.06666667
        %v4655 = vmul.f32 %v4591, 0.06666667
        %v4656 = vmul.f32 %v4592, 0.06666667
        %v4657 = vmul.f32 %v4593, 0.06666667
        %v4658 = vmul.f32 %v4594, 0.06666667
        %v4659 = vmul.f32 %v4595, 0.06666667
        %v4660 = vmul.f32 %v4596, 0.06666667
        %v4661 = vmul.f32 %v4597, 0.06666667
        %v4662 = vmul.f32 %v4598, 0.06666667
        %v4663 = vmul.f32 %v4599, 0.06666667
        %v4664 = vmul.f32 %v4600, 0.06666667
        %v4665 = vmul.f32 %v4601, 0.06666667
        %v4666 = vmul.f32 %v4602, 0.06666667
        %v4667 = vmul.f32 %v4603, 0.06666667
        %v4668 = vmul.f32 %v4604, 0.06666667
        %v4669 = vmul.f32 %v4605, 0.06666667
        %v4670 = vmul.f32 %v4606, 0.06666667
        %v4671 = vmul.f32 %v4607, 0.06666667
        %v4672 = vmul.f32 %v4608, 0.06666667
        %v4673 = vmul.f32 %v4609, 0.06666667
        %v4674 = vmul.f32 %v4610, 0.06666667
        %v4675 = vmul.f32 %v4611, 0.06666667
        %v4676 = vmul.f32 %v4612, 0.06666667
        %v4677 = vmul.f32 %v4613, 0.06666667
        %v4678 = vmul.f32 %v4614, 0.06666667
        %v4679 = vmul.f32 %v4615, 0.06666667
        %v4680 = vmul.f32 %v4616, 0.06666667
        %v4681 = vmul.f32 %v4617, 0.06666667
        %v4682 = vmul.f32 %v4618, 0.06666667
        %v4683 = vmul.f32 %v4619, 0.06666667
        %v4684 = vmul.f32 %v4620, 0.06666667
        %v4685 = vmul.f32 %v4621, 0.06666667
        %v4686 = vmul.f32 %v4622, 0.06666667
        %v4687 = vmul.f32 %v4623, 0.06666667
        %v4688 = vmul.f32 %v4624, 0.06666667
        %v4689 = vmul.f32 %v4625, 0.06666667
        %v4690 = vmul.f32 %v4626, 0.06666667
        %v4691 = vmul.f32 %v4627, 0.06666667
        %v4692 = vmul.f32 %v4628, 0.06666667
        %v4693 = vmul.f32 %v4629, 0.06666667
        %v4694 = vmul.f32 %v4630, 0.06666667
        %v4695 = vmul.f32 %v4631, 0.06666667
        %v4696 = vmul.f32 %v4632, 0.06666667
        %v4697 = vmul.f32 %v4633, 0.06666667
        %v4698 = vmul.f32 %v4634, 0.06666667
        %v4699 = vmul.f32 %v4635, 0.06666667
        %v4700 = vmul.f32 %v4636, 0.06666667
        %v4701 = vmul.f32 %v4637, 0.06666667
        %v4702 = vmul.f32 %v4638, 0.06666667
        %v4703 = vmul.f32 %v4639, 0.06666667
        %v4704 = vmul.f32 %v4640, 0.06666667
        %v4705 = vmul.f32 %v4641, 0.06666667
        %v4706 = vmul.f32 %v4642, 0.06666667
        %v4707 = vmul.f32 %v4643, 0.06666667
        %v4708 = vmul.f32 %v4644, 0.06666667
        %v4709 = vmul.f32 %v4645, 0.06666667
        %v4710 = vmul.f32 %v4646, 0.06666667
        %v4711 = vmul.f32 %v4647, 0.06666667
        %v4712 = vmul.f32 %v4648, 0.06666667
        %v4713 = vmul.f32 %v4649, 0.06666667
        %4714 = vst [vmem:[%s299] sm:$0xff] %v4650
        %4715 = vst [vmem:[%s299 + $0x8] sm:$0xff] %v4651
        %4716 = vst [vmem:[%s299 + $0x10] sm:$0xff] %v4652
        %4717 = vst [vmem:[%s299 + $0x18] sm:$0xff] %v4653
        %4718 = vst [vmem:[%s299 + $0x20] sm:$0xff] %v4654
        %4719 = vst [vmem:[%s299 + $0x28] sm:$0xff] %v4655
        %4720 = vst [vmem:[%s299 + $0x30] sm:$0xff] %v4656
        %4721 = vst [vmem:[%s299 + $0x38] sm:$0xff] %v4657
        %4722 = vst [vmem:[%s299 + $0x40] sm:$0xff] %v4658
        %4723 = vst [vmem:[%s299 + $0x48] sm:$0xff] %v4659
        %4724 = vst [vmem:[%s299 + $0x50] sm:$0xff] %v4660
        %4725 = vst [vmem:[%s299 + $0x58] sm:$0xff] %v4661
        %4726 = vst [vmem:[%s299 + $0x60] sm:$0xff] %v4662
        %4727 = vst [vmem:[%s299 + $0x68] sm:$0xff] %v4663
        %4728 = vst [vmem:[%s299 + $0x70] sm:$0xff] %v4664
        %4729 = vst [vmem:[%s299 + $0x78] sm:$0xff] %v4665
        %4730 = vst [vmem:[%s299 + $0x80] sm:$0xff] %v4666
        %4731 = vst [vmem:[%s299 + $0x88] sm:$0xff] %v4667
        %4732 = vst [vmem:[%s299 + $0x90] sm:$0xff] %v4668
        %4733 = vst [vmem:[%s299 + $0x98] sm:$0xff] %v4669
        %4734 = vst [vmem:[%s299 + $0xa0] sm:$0xff] %v4670
        %4735 = vst [vmem:[%s299 + $0xa8] sm:$0xff] %v4671
        %4736 = vst [vmem:[%s299 + $0xb0] sm:$0xff] %v4672
        %4737 = vst [vmem:[%s299 + $0xb8] sm:$0xff] %v4673
        %4738 = vst [vmem:[%s299 + $0xc0] sm:$0xff] %v4674
        %4739 = vst [vmem:[%s299 + $0xc8] sm:$0xff] %v4675
        %4740 = vst [vmem:[%s299 + $0xd0] sm:$0xff] %v4676
        %4741 = vst [vmem:[%s299 + $0xd8] sm:$0xff] %v4677
        %4742 = vst [vmem:[%s299 + $0xe0] sm:$0xff] %v4678
        %4743 = vst [vmem:[%s299 + $0xe8] sm:$0xff] %v4679
        %4744 = vst [vmem:[%s299 + $0xf0] sm:$0xff] %v4680
        %4745 = vst [vmem:[%s299 + $0xf8] sm:$0xff] %v4681
        %4746 = vst [vmem:[%s299 + $0x100] sm:$0xff] %v4682
        %4747 = vst [vmem:[%s299 + $0x108] sm:$0xff] %v4683
        %4748 = vst [vmem:[%s299 + $0x110] sm:$0xff] %v4684
        %4749 = vst [vmem:[%s299 + $0x118] sm:$0xff] %v4685
        %4750 = vst [vmem:[%s299 + $0x120] sm:$0xff] %v4686
        %4751 = vst [vmem:[%s299 + $0x128] sm:$0xff] %v4687
        %4752 = vst [vmem:[%s299 + $0x130] sm:$0xff] %v4688
        %4753 = vst [vmem:[%s299 + $0x138] sm:$0xff] %v4689
        %4754 = vst [vmem:[%s299 + $0x140] sm:$0xff] %v4690
        %4755 = vst [vmem:[%s299 + $0x148] sm:$0xff] %v4691
        %4756 = vst [vmem:[%s299 + $0x150] sm:$0xff] %v4692
        %4757 = vst [vmem:[%s299 + $0x158] sm:$0xff] %v4693
        %4758 = vst [vmem:[%s299 + $0x160] sm:$0xff] %v4694
        %4759 = vst [vmem:[%s299 + $0x168] sm:$0xff] %v4695
        %4760 = vst [vmem:[%s299 + $0x170] sm:$0xff] %v4696
        %4761 = vst [vmem:[%s299 + $0x178] sm:$0xff] %v4697
        %4762 = vst [vmem:[%s299 + $0x180] sm:$0xff] %v4698
        %4763 = vst [vmem:[%s299 + $0x188] sm:$0xff] %v4699
        %4764 = vst [vmem:[%s299 + $0x190] sm:$0xff] %v4700
        %4765 = vst [vmem:[%s299 + $0x198] sm:$0xff] %v4701
        %4766 = vst [vmem:[%s299 + $0x1a0] sm:$0xff] %v4702
        %4767 = vst [vmem:[%s299 + $0x1a8] sm:$0xff] %v4703
        %4768 = vst [vmem:[%s299 + $0x1b0] sm:$0xff] %v4704
        %4769 = vst [vmem:[%s299 + $0x1b8] sm:$0xff] %v4705
        %4770 = vst [vmem:[%s299 + $0x1c0] sm:$0xff] %v4706
        %4771 = vst [vmem:[%s299 + $0x1c8] sm:$0xff] %v4707
        %4772 = vst [vmem:[%s299 + $0x1d0] sm:$0xff] %v4708
        %4773 = vst [vmem:[%s299 + $0x1d8] sm:$0xff] %v4709
        %4774 = vst [vmem:[%s299 + $0x1e0] sm:$0xff] %v4710
        %4775 = vst [vmem:[%s299 + $0x1e8] sm:$0xff] %v4711
        %4776 = vst [vmem:[%s299 + $0x1f0] sm:$0xff] %v4712
        %4777 = vst [vmem:[%s299 + $0x1f8] sm:$0xff] %v4713
        %s4778 = sand.u32 %s163, 1
        %s4779 = scalar_lea.sflag [#allocation4], %s4778
        %s4780 = sand.u32 %s163, 1
        %s4781 = smul.addr %s4780, 512
        %s4782 = scalar_lea.vmem [#allocation8], %s4781
        // Predicated region
        $region57: #{tpu_custom_call.1} parent=43 // pred_check
          %p4783 = pneg %p173
        $region58: #{tpu_custom_call.1} parent=43 // pred_check_branch
          %4785 = sbr.rel (%p4783) target = $region60
        $region59: #{tpu_custom_call.1} parent=43 // pred_region
          %s4786 = smul.u32 32, %s24
          %s4788 = ssub.s32 8192, 8192
          %4789 = vsyncadd %s4779, %s4788
          %s4790 = smul.addr %s4786, 2
          %s4791 = smul.addr %s4790, 128
          %s4792 = scalar_lea.hbm %s6, %s4791
          %s4793 = sshll.u32 %s4782, 4
          %s4794 = int_to_ptr.vmem [resolvable:$true] %s4793
          %4799 = dma.vmem_to_hbm [thread:$0]  %s4794, 8192, %s4792, %s4779, 128, 128, 8
        $region60: #{tpu_custom_call.1} parent=43 // pred_fallthru
          _
      $region44: #{tpu_custom_call.1} parent=5 // pred_fallthru
        _
      %p4800 = scmp.le.s32.totalorder 2, %s19
      // Predicated region
      $region61: #{tpu_custom_call.1} parent=5 // pred_check
        %p4801 = pneg %p4800
      $region62: #{tpu_custom_call.1} parent=5 // pred_check_branch
        %4803 = sbr.rel (%p4801) target = $region64
      $region63: #{tpu_custom_call.1} parent=5 // pred_region
        %s4804 = ssub.s32 %s19, 2
        // Predicated region
        $region65: #{tpu_custom_call.1} parent=63 // pred_check
          %p4805 = pneg %p179
        $region66: #{tpu_custom_call.1} parent=63 // pred_check_branch
          %4807 = sbr.rel (%p4805) target = $region68
        $region67: #{tpu_custom_call.1} parent=63 // pred_region
          %s4808 = sand.u32 %s164, 1
          %s4809 = scalar_lea.sflag [#allocation4], %s4808
          %s4810 = sand.u32 %s164, 1
          %s4811 = smul.addr %s4810, 512
          %s4812 = scalar_lea.vmem [#allocation8], %s4811
          %4813 = dma.done %s4809, 8192
        $region68: #{tpu_custom_call.1} parent=63 // pred_fallthru
          _
      $region64: #{tpu_custom_call.1} parent=5 // pred_fallthru
        _
    $region6: #{tpu_custom_call.1} parent=1 // loop_footer
      %s23 = sadd.s32 1, %s19
    $region7: #{tpu_custom_call.1} parent=1 // loop_footer_branch
      %18 = sbr.rel target = $region3
    $region8: #{tpu_custom_call.1} parent=1 // loop_exit
      _
    %4814 = vsyncpa [#allocation3], 1
    %s4815 = scalar_lea.sflag [#allocation3], 1
    %4816 = vsyncpa %s4815, 1
    %4817 = vsyncpa [#allocation6], 1
    %4818 = vsyncpa [#allocation4], 1
    %s4819 = scalar_lea.sflag [#allocation4], 1
    %4820 = vsyncpa %s4819, 1

</llo_original>
